<compile_context>
chip_gen: v5e
topology: v5e:2x2
jax: 0.10.0
libtpu: 0.0.40
codegen_flags: <defaults>
</compile_context>

<pallas_src>
import functools

import jax
import jax.numpy as jnp
import numpy as np
from jax import lax
from jax.experimental import pallas as pl
from jax.experimental.pallas import tpu as pltpu

EPS = 1e-5


def _vmem_limit_bytes():
    """Generation-aware VMEM request (review: 64 MiB on v7x vs 128 MiB on v5e/v6e)."""
    try:
        cap = int(pltpu.get_tpu_info().vmem_capacity_bytes)
    except Exception:
        cap = 64 * 1024 * 1024          # conservative fallback (v7x per-core size)
    return min((cap * 3) // 4, 100 * 1024 * 1024)


# --------------------------------- Pallas kernels ----------------------------------


def _conv_kernel(*refs, k, p, tH, wo, c_in, c_out, bn_in):
    """'Same' conv (stride 1) on an NCHW-flat row tile via one in-VMEM im2col MXU matmul.

    refs (in order):
      x_main: (1, c_in, tH*wo)   output rows [t*tH, (t+1)*tH) of the input, lane-dense
      x_up  : (1, c_in, hb)      128-lane block ending exactly at row t*tH        (halo above)
      x_dn  : (1, c_in, hb)      128-lane block starting exactly at row (t+1)*tH  (halo below)
      [sc, sh: (c_in, 1) f32]    fused input BatchNorm scale/shift (only when bn_in)
      w     : (k*k*c_in, c_out)  bf16 im2col weights, (kh, kw, cin)-major
      b     : (1, c_out) f32     conv bias
      y     : (1, c_out, tH*wo)  bf16 pre-BN conv output, NCHW-flat (lane-dense store)
      st    : (1, 1, 2, c_out)   f32 per-tile [sum, sum_sq] of the stored (bf16-rounded) output
    """
    if bn_in:
        x_main, x_up, x_dn, sc_ref, sh_ref, w_ref, b_ref, y_ref, st_ref = refs
    else:
        x_main, x_up, x_dn, w_ref, b_ref, y_ref, st_ref = refs
        sc_ref = sh_ref = None

    t = pl.program_id(1)
    last = pl.num_programs(1) - 1

    def prep(chunk):
        # (c_in, L) channel-major lanes -> (L//wo, wo, c_in) spatial rows, bf16 (single cast).
        v = chunk.astype(jnp.float32)
        if bn_in:
            v = jnp.maximum(v * sc_ref[...] + sh_ref[...], 0.0)     # BN1 + ReLU fused on input
        v = v.T                                                      # (L, c_in) 2-D transpose
        return v.reshape(v.shape[0] // wo, wo, c_in).astype(jnp.bfloat16)

    mid = prep(x_main[0])                                            # (tH, wo, c_in)
    top = prep(x_up[0])[-p:]                                         # (p,  wo, c_in)
    bot = prep(x_dn[0])[:p]
    # Rows outside the image are the conv's zero padding; the halo block indices were clamped,
    # so zero them out at the image top / bottom (scalar 0/1 multiply: always lowers).
    keep_top = (t > 0).astype(jnp.float32)
    keep_bot = (t < last).astype(jnp.float32)
    top = (top.astype(jnp.float32) * keep_top).astype(jnp.bfloat16)
    bot = (bot.astype(jnp.float32) * keep_bot).astype(jnp.bfloat16)

    col = jnp.concatenate([top, mid, bot], axis=0)                   # (tH+2p, wo, c_in)
    zw = jnp.zeros((tH + 2 * p, p, c_in), jnp.bfloat16)              # zero W padding (in VMEM)
    xw = jnp.concatenate([zw, col, zw], axis=1)                      # (tH+2p, wo+2p, c_in)

    # Single im2col matmul: K = k*k*c_in (instead of k*k tiny, <1%-utilization MXU pushes).
    cols = []
    for kh in range(k):
        for kw in range(k):
            cols.append(xw[kh:kh + tH, kw:kw + wo, :].reshape(tH * wo, c_in))
    patches = jnp.concatenate(cols, axis=1)                          # (tH*wo, k*k*c_in) bf16
    y = jnp.dot(patches, w_ref[...], preferred_element_type=jnp.float32) + b_ref[...]

    # Lane-dense NCHW-flat store: (c_out, tH*wo) with the full spatial tile on lanes.
    y_ref[0] = y.T.astype(y_ref.dtype)

    # BN statistics from the values that are actually stored (bf16-rounded) => the scale/shift
    # applied downstream is self-consistent with what is read back.
    ys = y.astype(jnp.bfloat16).astype(jnp.float32)
    st_ref[0, 0] = jnp.concatenate(
        [jnp.sum(ys, axis=0, keepdims=True), jnp.sum(ys * ys, axis=0, keepdims=True)], axis=0)


def _bn_relu_kernel(y_ref, sc_ref, sh_ref, o_ref):
    # y_ref/o_ref: (1, C, tH*wo) NCHW-flat tiles; sc/sh: (C, 1) per-channel scale / shift.
    o_ref[...] = jnp.maximum(
        y_ref[...].astype(jnp.float32) * sc_ref[...] + sh_ref[...], 0.0).astype(o_ref.dtype)


# ----------------------------------- wrappers ---------------------------------------


def _pick_row_tile(ho, wo, p, requested, bytes_fn, budget):
    hb = 128 * pl.cdiv(p * wo, 128)

    def ok(t):
        if ho % t:
            return False
        if t == ho:                       # full-extent blocks are always legal
            return True
        return (t % 8 == 0 and (t * wo) % 128 == 0
                and (t * wo) % hb == 0 and hb % wo == 0)

    if requested is not None:
        t = int(requested)
        if not ok(t):
            raise ValueError(f"row_tile={requested} invalid for ho={ho}, wo={wo}")
        return t
    cands = [t for t in range(1, ho + 1) if ok(t)]
    fitting = [t for t in cands if bytes_fn(t) <= budget]
    return max(fitting) if fitting else min(cands)


def _conv_pallas(x_flat, w_oihw, bias, *, k, p, ho, wo,
                 bn_scale=None, bn_shift=None, row_tile=None, vmem_limit):
    """One 'same' conv on an NCHW-flat activation (N, C, ho*wo), optionally fusing a per-channel
    affine + ReLU (BatchNorm apply) on the input side.  Returns the pre-BN conv output (bf16,
    NCHW-flat) and per-tile [sum, sum_sq] statistics for the two-pass BatchNorm."""
    N, c_in, L = x_flat.shape
    c_out = int(w_oihw.shape[0])
    assert int(w_oihw.shape[1]) == c_in and L == ho * wo
    assert p >= 1 and wo % 8 == 0, "kernel assumes k>=3 'same' conv and W/2 a multiple of 8"
    bn_in = bn_scale is not None
    in_bytes = x_flat.dtype.itemsize

    def tile_bytes(t):                                      # rough per-step VMEM footprint
        main = c_in * t * wo * in_bytes
        halo = 2 * c_in * min(L, 128 * pl.cdiv(p * wo, 128)) * in_bytes
        outs = c_out * t * wo * 2 + 2 * c_out * 4
        wgt = k * k * c_in * c_out * 2 + c_out * 4
        tmp = (t * wo * c_in * 8                              # prep f32 + transposed copy
               + (t + 2 * p) * (wo + 2 * p) * c_in * 2        # padded working tile
               + t * wo * k * k * c_in * 2                    # im2col patches
               + t * wo * c_out * 4)                          # f32 matmul result
        return 2 * (main + halo + outs + wgt) + tmp           # x2: double-buffered DMA tiles

    tH = _pick_row_tile(ho, wo, p, row_tile, tile_bytes, vmem_limit // 2)
    nT = ho // tH
    ml = tH * wo
    hb = L if nT == 1 else 128 * pl.cdiv(p * wo, 128)

    # (Cout, Cin, kh, kw) -> (kh*k*Cin + kw*Cin + cin, Cout); bf16 MXU inputs, f32 accumulation.
    wk = jnp.transpose(w_oihw, (2, 3, 1, 0)).reshape(k * k * c_in, c_out).astype(jnp.bfloat16)
    b2 = bias.reshape(1, c_out).astype(jnp.float32)

    in_specs = [
        pl.BlockSpec((1, c_in, ml), lambda n, t: (n, 0, t)),
        pl.BlockSpec((1, c_in, hb),
                     lambda n, t: (n, 0, jnp.maximum(t * (ml // hb) - 1, 0))),
        pl.BlockSpec((1, c_in, hb),
                     lambda n, t: (n, 0, jnp.minimum((t + 1) * (ml // hb), L // hb - 1))),
    ]
    inputs = [x_flat, x_flat, x_flat]
    if bn_in:
        in_specs += [pl.BlockSpec((c_in, 1), lambda n, t: (0, 0)),
                     pl.BlockSpec((c_in, 1), lambda n, t: (0, 0))]
        inputs += [bn_scale, bn_shift]
    in_specs += [pl.BlockSpec((k * k * c_in, c_out), lambda n, t: (0, 0)),
                 pl.BlockSpec((1, c_out), lambda n, t: (0, 0))]
    inputs += [wk, b2]

    kernel = functools.partial(_conv_kernel, k=k, p=p, tH=tH, wo=wo,
                               c_in=c_in, c_out=c_out, bn_in=bn_in)
    y, st = pl.pallas_call(
        kernel,
        out_shape=(jax.ShapeDtypeStruct((N, c_out, L), jnp.bfloat16),
                   jax.ShapeDtypeStruct((N, nT, 2, c_out), jnp.float32)),
        grid_spec=pltpu.PrefetchScalarGridSpec(
            num_scalar_prefetch=0,
            grid=(N, nT),
            in_specs=in_specs,
            out_specs=(pl.BlockSpec((1, c_out, ml), lambda n, t: (n, 0, t)),
                       pl.BlockSpec((1, 1, 2, c_out), lambda n, t: (n, t, 0, 0)))),
        compiler_params=pltpu.CompilerParams(
            dimension_semantics=("parallel", "parallel"),
            vmem_limit_bytes=vmem_limit),
    )(*inputs)
    return y, st


def _bn_scale_shift(stats, gamma, beta, count):
    """Two-pass BatchNorm finalize (training mode, biased variance) from per-tile [sum, sum_sq]."""
    s = jnp.sum(stats, axis=(0, 1))                          # (2, C)
    mean = s[0] / float(count)
    var = jnp.maximum(s[1] / float(count) - mean * mean, 0.0)
    scale = gamma * lax.rsqrt(var + EPS)
    shift = beta - mean * scale
    return (scale.reshape(-1, 1).astype(jnp.float32),
            shift.reshape(-1, 1).astype(jnp.float32))


def _bn_relu_pallas(y_flat, scale, shift, *, wo, row_tile, vmem_limit, out_dtype=jnp.float32):
    N, C, L = y_flat.shape
    ho = L // wo
    tH = int(row_tile) if row_tile is not None else ho
    if ho % tH or (tH != ho and (tH * wo) % 128 != 0):
        tH = ho
    nT = ho // tH
    return pl.pallas_call(
        _bn_relu_kernel,
        out_shape=jax.ShapeDtypeStruct((N, C, L), out_dtype),
        grid_spec=pltpu.PrefetchScalarGridSpec(
            num_scalar_prefetch=0,
            grid=(N, nT),
            in_specs=[pl.BlockSpec((1, C, tH * wo), lambda n, t: (n, 0, t)),
                      pl.BlockSpec((C, 1), lambda n, t: (0, 0)),
                      pl.BlockSpec((C, 1), lambda n, t: (0, 0))],
            out_specs=pl.BlockSpec((1, C, tH * wo), lambda n, t: (n, 0, t))),
        compiler_params=pltpu.CompilerParams(
            dimension_semantics=("parallel", "parallel"),
            vmem_limit_bytes=vmem_limit),
    )(y_flat, scale, shift)


def unet_down_conv(x_nchw, params, *, k, stride, padding, row_tile=None):
    """UNetDownConv forward.  Input/output layout: NCHW (PyTorch convention)."""
    assert stride == 1 and k % 2 == 1 and padding == (k - 1) // 2, (
        "fused conv kernel covers the 'same' conv used by UNetBaseConv (stride=1, pad=(k-1)//2)")
    N, cin, H, W = x_nchw.shape
    assert H % 2 == 0 and W % 2 == 0
    ho, wo = H // 2, W // 2
    c2 = int(params["w2"].shape[0])
    vmem = _vmem_limit_bytes()

    # 2x2/stride-2 max-pool via XLA (memory-bound; touches only the 4x-smaller pooled tensor).
    xp = lax.reduce_window(x_nchw, -jnp.inf, lax.max, (1, 1, 2, 2), (1, 1, 2, 2), "VALID")
    xp = xp.reshape(N, cin, ho * wo)                          # free reshape: NCHW -> NCHW-flat

    # conv1 + per-tile batch statistics (two-pass BN, training mode).
    y1, st1 = _conv_pallas(xp, params["w1"], params["b1"], k=k, p=padding, ho=ho, wo=wo,
                           row_tile=row_tile, vmem_limit=vmem)
    sc1, sh1 = _bn_scale_shift(st1, params["gamma"], params["beta"], N * ho * wo)

    # conv2 with BN1 + ReLU fused on its input path (shared BatchNorm gamma/beta).
    y2, st2 = _conv_pallas(y1, params["w2"], params["b2"], k=k, p=padding, ho=ho, wo=wo,
                           bn_scale=sc1, bn_shift=sh1, row_tile=row_tile, vmem_limit=vmem)
    sc2, sh2 = _bn_scale_shift(st2, params["gamma"], params["beta"], N * ho * wo)

    out = _bn_relu_pallas(y2, sc2, sh2, wo=wo, row_tile=row_tile, vmem_limit=vmem)
    return out.reshape(N, c2, ho, wo)                         # free: already NCHW-flat


# ----------------------------- reference (plain JAX) --------------------------------


def _ref_forward(x_nchw, params, k, s, p):
    # Conv inputs cast to bf16 (f32 accumulation) to match the kernel's MXU precision choice;
    # BatchNorm uses training-mode biased batch statistics with the shared gamma/beta.
    x = lax.reduce_window(x_nchw, -jnp.inf, lax.max, (1, 1, 2, 2), (1, 1, 2, 2), "VALID")

    def block(x, w, b):
        y = lax.conv_general_dilated(
            x.astype(jnp.bfloat16), w.astype(jnp.bfloat16), (s, s), [(p, p), (p, p)],
            dimension_numbers=("NCHW", "OIHW", "NCHW"),
            preferred_element_type=jnp.float32) + b[None, :, None, None]
        mean = jnp.mean(y, axis=(0, 2, 3), keepdims=True)
        var = jnp.mean((y - mean) ** 2, axis=(0, 2, 3), keepdims=True)
        yh = (y - mean) * lax.rsqrt(var + EPS)
        yh = yh * params["gamma"][None, :, None, None] + params["beta"][None, :, None, None]
        return jnp.maximum(yh, 0.0)

    x = block(x, params["w1"], params["b1"])
    x = block(x, params["w2"], params["b2"])
    return x


# -------------------------------------- main ----------------------------------------


if __name__ == "__main__":
    in_channels, out_channels = 4, 8
    kernel_size, stride, padding = 3, 1, 1

    key = jax.random.PRNGKey(0)
    kx, kw1, kb1, kw2, kb2 = jax.random.split(key, 5)

    # NCHW input; 32x32 spatial so the row-tiled grid (row_tile=8 -> 2 tiles) exercises the
    # clamped-halo / in-VMEM zero-padding path.
    x = jax.random.normal(kx, (2, in_channels, 32, 32), dtype=jnp.float32)

    # Deterministic parameter init mirroring the module's __init__ (note: the module uses
    # in_channels in *both* weight stds; Conv2d default uniform bias bounds).
    std = float(np.sqrt(2.0 / (kernel_size * kernel_size * in_channels)))
    w1 = std * jax.random.normal(kw1, (out_channels, in_channels, kernel_size, kernel_size),
                                 dtype=jnp.float32)
    w2 = std * jax.random.normal(kw2, (out_channels, out_channels, kernel_size, kernel_size),
                                 dtype=jnp.float32)
    bound1 = 1.0 / np.sqrt(in_channels * kernel_size * kernel_size)
    bound2 = 1.0 / np.sqrt(out_channels * kernel_size * kernel_size)
    b1 = jax.random.uniform(kb1, (out_channels,), jnp.float32, -bound1, bound1)
    b2 = jax.random.uniform(kb2, (out_channels,), jnp.float32, -bound2, bound2)
    params = {
        "w1": w1, "b1": b1,
        "w2": w2, "b2": b2,
        "gamma": jnp.ones((out_channels,), jnp.float32),   # BatchNorm2d default weight
        "beta": jnp.zeros((out_channels,), jnp.float32),   # BatchNorm2d default bias
    }

    fwd = jax.jit(functools.partial(unet_down_conv, k=kernel_size, stride=stride,
                                    padding=padding, row_tile=8))
    out = jax.block_until_ready(fwd(x, params))
    assert out.shape == (2, out_channels, 16, 16), out.shape

    ref = _ref_forward(x, params, kernel_size, stride, padding)
    # bf16 MXU inputs + bf16 intermediate activations are deliberate (perf review); tolerance is
    # loosened accordingly versus a full-f32 computation.
    np.testing.assert_allclose(np.asarray(out), np.asarray(ref), rtol=3e-2, atol=3e-2)

    print("KERNEL_OK")
</pallas_src>

<mosaic_0001>
module attributes {stable_mosaic.version = 11 : i64} {
  func.func @_conv_kernel(%arg0: i32, %arg1: i32, %arg2: memref<1x4x128xf32, #tpu.memory_space<vmem>>, %arg3: memref<1x4x128xf32, #tpu.memory_space<vmem>>, %arg4: memref<1x4x128xf32, #tpu.memory_space<vmem>>, %arg5: memref<36x8xbf16, #tpu.memory_space<vmem>>, %arg6: memref<1x8xf32, #tpu.memory_space<vmem>>, %arg7: memref<1x8x128xbf16, #tpu.memory_space<vmem>>, %arg8: memref<1x1x2x8xf32, #tpu.memory_space<vmem>>) attributes {dimension_semantics = [#tpu.dimension_semantics<parallel>, #tpu.dimension_semantics<parallel>], iteration_bounds = array<i64: 2, 2>, scalar_prefetch = 0 : i64, scratch_operands = 0 : i64, tpu.core_type = #tpu.core_type<tc>, window_params = [{transform_indices = @transform_0, window_bounds = array<i64: 1, 4, 128>}, {transform_indices = @transform_1, window_bounds = array<i64: 1, 4, 128>}, {transform_indices = @transform_2, window_bounds = array<i64: 1, 4, 128>}, {pipeline_mode = #tpu.pipeline_mode<synchronous>, transform_indices = @transform_3, window_bounds = array<i64: 36, 8>}, {pipeline_mode = #tpu.pipeline_mode<synchronous>, transform_indices = @transform_4, window_bounds = array<i64: 1, 8>}, {transform_indices = @transform_5, window_bounds = array<i64: 1, 8, 128>}, {transform_indices = @transform_6, window_bounds = array<i64: 1, 1, 2, 8>}]} {
    %c0 = arith.constant 0 : index
    %c0_0 = arith.constant 0 : index
    %c0_1 = arith.constant 0 : index
    %0 = vector.load %arg2[%c0, %c0_0, %c0_1] : memref<1x4x128xf32, #tpu.memory_space<vmem>>, vector<1x4x128xf32>
    %1 = vector.shape_cast %0 : vector<1x4x128xf32> to vector<4x128xf32>
    %2 = tpu.transpose %1, [1, 0] : vector<4x128xf32> -> vector<128x4xf32>
    %3 = vector.shape_cast %2 : vector<128x4xf32> to vector<8x16x4xf32>
    %4 = arith.truncf %3 : vector<8x16x4xf32> to vector<8x16x4xbf16>
    %c0_2 = arith.constant 0 : index
    %c0_3 = arith.constant 0 : index
    %c0_4 = arith.constant 0 : index
    %5 = vector.load %arg3[%c0_2, %c0_3, %c0_4] : memref<1x4x128xf32, #tpu.memory_space<vmem>>, vector<1x4x128xf32>
    %6 = vector.shape_cast %5 : vector<1x4x128xf32> to vector<4x128xf32>
    %7 = tpu.transpose %6, [1, 0] : vector<4x128xf32> -> vector<128x4xf32>
    %8 = vector.shape_cast %7 : vector<128x4xf32> to vector<8x16x4xf32>
    %9 = arith.truncf %8 : vector<8x16x4xf32> to vector<8x16x4xbf16>
    %10 = vector.extract_strided_slice %9 {offsets = [7, 0, 0], sizes = [1, 16, 4], strides = [1, 1, 1]} : vector<8x16x4xbf16> to vector<1x16x4xbf16>
    %c0_5 = arith.constant 0 : index
    %c0_6 = arith.constant 0 : index
    %c0_7 = arith.constant 0 : index
    %11 = vector.load %arg4[%c0_5, %c0_6, %c0_7] : memref<1x4x128xf32, #tpu.memory_space<vmem>>, vector<1x4x128xf32>
    %12 = vector.shape_cast %11 : vector<1x4x128xf32> to vector<4x128xf32>
    %13 = tpu.transpose %12, [1, 0] : vector<4x128xf32> -> vector<128x4xf32>
    %14 = vector.shape_cast %13 : vector<128x4xf32> to vector<8x16x4xf32>
    %15 = arith.truncf %14 : vector<8x16x4xf32> to vector<8x16x4xbf16>
    %16 = vector.extract_strided_slice %15 {offsets = [0, 0, 0], sizes = [1, 16, 4], strides = [1, 1, 1]} : vector<8x16x4xbf16> to vector<1x16x4xbf16>
    %c0_i32 = arith.constant 0 : i32
    %17 = arith.cmpi sgt, %arg1, %c0_i32 : i32
    %18 = arith.extui %17 : i1 to i32
    %19 = arith.sitofp %18 : i32 to f32
    %c1_i32 = arith.constant 1 : i32
    %20 = arith.cmpi slt, %arg1, %c1_i32 : i32
    %21 = arith.extui %20 : i1 to i32
    %22 = arith.sitofp %21 : i32 to f32
    %23 = arith.extf %10 : vector<1x16x4xbf16> to vector<1x16x4xf32>
    %24 = vector.broadcast %19 : f32 to vector<1x16x4xf32>
    %25 = arith.mulf %23, %24 : vector<1x16x4xf32>
    %26 = arith.truncf %25 : vector<1x16x4xf32> to vector<1x16x4xbf16>
    %27 = arith.extf %16 : vector<1x16x4xbf16> to vector<1x16x4xf32>
    %28 = vector.broadcast %22 : f32 to vector<1x16x4xf32>
    %29 = arith.mulf %27, %28 : vector<1x16x4xf32>
    %30 = arith.truncf %29 : vector<1x16x4xf32> to vector<1x16x4xbf16>
    %31 = tpu.concatenate %26, %4, %30 in 0 : vector<1x16x4xbf16>, vector<8x16x4xbf16>, vector<1x16x4xbf16> -> vector<10x16x4xbf16>
    %cst = arith.constant 0.000000e+00 : bf16
    %32 = vector.broadcast %cst : bf16 to vector<10x1x4xbf16>
    %33 = tpu.concatenate %32, %31, %32 in 1 : vector<10x1x4xbf16>, vector<10x16x4xbf16>, vector<10x1x4xbf16> -> vector<10x18x4xbf16>
    %34 = vector.extract_strided_slice %33 {offsets = [0, 0, 0], sizes = [8, 16, 4], strides = [1, 1, 1]} : vector<10x18x4xbf16> to vector<8x16x4xbf16>
    %35 = vector.shape_cast %34 : vector<8x16x4xbf16> to vector<128x4xbf16>
    %36 = vector.extract_strided_slice %33 {offsets = [0, 1, 0], sizes = [8, 16, 4], strides = [1, 1, 1]} : vector<10x18x4xbf16> to vector<8x16x4xbf16>
    %37 = vector.shape_cast %36 : vector<8x16x4xbf16> to vector<128x4xbf16>
    %38 = vector.extract_strided_slice %33 {offsets = [0, 2, 0], sizes = [8, 16, 4], strides = [1, 1, 1]} : vector<10x18x4xbf16> to vector<8x16x4xbf16>
    %39 = vector.shape_cast %38 : vector<8x16x4xbf16> to vector<128x4xbf16>
    %40 = vector.extract_strided_slice %33 {offsets = [1, 0, 0], sizes = [8, 16, 4], strides = [1, 1, 1]} : vector<10x18x4xbf16> to vector<8x16x4xbf16>
    %41 = vector.shape_cast %40 : vector<8x16x4xbf16> to vector<128x4xbf16>
    %42 = vector.extract_strided_slice %33 {offsets = [1, 1, 0], sizes = [8, 16, 4], strides = [1, 1, 1]} : vector<10x18x4xbf16> to vector<8x16x4xbf16>
    %43 = vector.shape_cast %42 : vector<8x16x4xbf16> to vector<128x4xbf16>
    %44 = vector.extract_strided_slice %33 {offsets = [1, 2, 0], sizes = [8, 16, 4], strides = [1, 1, 1]} : vector<10x18x4xbf16> to vector<8x16x4xbf16>
    %45 = vector.shape_cast %44 : vector<8x16x4xbf16> to vector<128x4xbf16>
    %46 = vector.extract_strided_slice %33 {offsets = [2, 0, 0], sizes = [8, 16, 4], strides = [1, 1, 1]} : vector<10x18x4xbf16> to vector<8x16x4xbf16>
    %47 = vector.shape_cast %46 : vector<8x16x4xbf16> to vector<128x4xbf16>
    %48 = vector.extract_strided_slice %33 {offsets = [2, 1, 0], sizes = [8, 16, 4], strides = [1, 1, 1]} : vector<10x18x4xbf16> to vector<8x16x4xbf16>
    %49 = vector.shape_cast %48 : vector<8x16x4xbf16> to vector<128x4xbf16>
    %50 = vector.extract_strided_slice %33 {offsets = [2, 2, 0], sizes = [8, 16, 4], strides = [1, 1, 1]} : vector<10x18x4xbf16> to vector<8x16x4xbf16>
    %51 = vector.shape_cast %50 : vector<8x16x4xbf16> to vector<128x4xbf16>
    %52 = tpu.concatenate %35, %37, %39, %41, %43, %45, %47, %49, %51 in 1 : vector<128x4xbf16>, vector<128x4xbf16>, vector<128x4xbf16>, vector<128x4xbf16>, vector<128x4xbf16>, vector<128x4xbf16>, vector<128x4xbf16>, vector<128x4xbf16>, vector<128x4xbf16> -> vector<128x36xbf16>
    %c0_8 = arith.constant 0 : index
    %c0_9 = arith.constant 0 : index
    %53 = vector.load %arg5[%c0_8, %c0_9] : memref<36x8xbf16, #tpu.memory_space<vmem>>, vector<36x8xbf16>
    %cst_10 = arith.constant dense<0.000000e+00> : vector<128x8xf32>
    %54 = tpu.matmul %52, %53, %cst_10 {dimension_numbers = #tpu.dot_dimension_numbers<[1], [0], [0], [1], [0, 0, 1, 1], [], []>} : vector<128x36xbf16>, vector<36x8xbf16>, vector<128x8xf32> -> vector<128x8xf32>
    %c0_11 = arith.constant 0 : index
    %c0_12 = arith.constant 0 : index
    %55 = vector.load %arg6[%c0_11, %c0_12] : memref<1x8xf32, #tpu.memory_space<vmem>>, vector<1x8xf32>
    %56 = vector.broadcast %55 : vector<1x8xf32> to vector<128x8xf32>
    %57 = arith.addf %54, %56 : vector<128x8xf32>
    %58 = tpu.transpose %57, [1, 0] : vector<128x8xf32> -> vector<8x128xf32>
    %59 = arith.truncf %58 : vector<8x128xf32> to vector<8x128xbf16>
    %c0_13 = arith.constant 0 : index
    %c0_14 = arith.constant 0 : index
    %c0_15 = arith.constant 0 : index
    %60 = vector.load %arg7[%c0_13, %c0_14, %c0_15] : memref<1x8x128xbf16, #tpu.memory_space<vmem>>, vector<1x8x128xbf16>
    %61 = vector.shape_cast %60 : vector<1x8x128xbf16> to vector<8x128xbf16>
    %62 = vector.shape_cast %59 : vector<8x128xbf16> to vector<1x8x128xbf16>
    tpu.vector_store %arg7[%c0_13, %c0_14, %c0_15], %62 {strides = array<i32>} : memref<1x8x128xbf16, #tpu.memory_space<vmem>>, vector<1x8x128xbf16>,
    %63 = arith.truncf %57 : vector<128x8xf32> to vector<128x8xbf16>
    %64 = arith.extf %63 : vector<128x8xbf16> to vector<128x8xf32>
    %cst_16 = arith.constant dense<0.000000e+00> : vector<8xf32>
    %65 = vector.multi_reduction <add>, %64, %cst_16 [0] : vector<128x8xf32> to vector<8xf32>
    %66 = vector.shape_cast %65 : vector<8xf32> to vector<1x8xf32>
    %67 = arith.mulf %64, %64 : vector<128x8xf32>
    %cst_17 = arith.constant dense<0.000000e+00> : vector<8xf32>
    %68 = vector.multi_reduction <add>, %67, %cst_17 [0] : vector<128x8xf32> to vector<8xf32>
    %69 = vector.shape_cast %68 : vector<8xf32> to vector<1x8xf32>
    %70 = tpu.concatenate %66, %69 in 0 : vector<1x8xf32>, vector<1x8xf32> -> vector<2x8xf32>
    %c0_18 = arith.constant 0 : index
    %c0_19 = arith.constant 0 : index
    %c0_20 = arith.constant 0 : index
    %c0_21 = arith.constant 0 : index
    %71 = vector.load %arg8[%c0_18, %c0_19, %c0_20, %c0_21] : memref<1x1x2x8xf32, #tpu.memory_space<vmem>>, vector<1x1x2x8xf32>
    %72 = vector.shape_cast %71 : vector<1x1x2x8xf32> to vector<2x8xf32>
    %73 = vector.shape_cast %70 : vector<2x8xf32> to vector<1x1x2x8xf32>
    tpu.vector_store %arg8[%c0_18, %c0_19, %c0_20, %c0_21], %73 {strides = array<i32>} : memref<1x1x2x8xf32, #tpu.memory_space<vmem>>, vector<1x1x2x8xf32>,
    return
  }
  func.func @transform_0(%arg0: i32, %arg1: i32) -> (i32, i32, i32) {
    %c0_i32 = arith.constant 0 : i32
    %c0_i32_0 = arith.constant 0 : i32
    return %arg0, %c0_i32, %arg1 : i32, i32, i32
  }
  func.func @transform_1(%arg0: i32, %arg1: i32) -> (i32, i32, i32) {
    %c1_i32 = arith.constant 1 : i32
    %0 = arith.muli %arg1, %c1_i32 : i32
    %c1_i32_0 = arith.constant 1 : i32
    %1 = arith.subi %0, %c1_i32_0 : i32
    %c0_i32 = arith.constant 0 : i32
    %2 = arith.maxsi %1, %c0_i32 : i32
    %c0_i32_1 = arith.constant 0 : i32
    %c0_i32_2 = arith.constant 0 : i32
    return %arg0, %c0_i32_1, %2 : i32, i32, i32
  }
  func.func @transform_2(%arg0: i32, %arg1: i32) -> (i32, i32, i32) {
    %c1_i32 = arith.constant 1 : i32
    %0 = arith.addi %arg1, %c1_i32 : i32
    %c1_i32_0 = arith.constant 1 : i32
    %1 = arith.muli %0, %c1_i32_0 : i32
    %c1_i32_1 = arith.constant 1 : i32
    %2 = arith.minsi %1, %c1_i32_1 : i32
    %c0_i32 = arith.constant 0 : i32
    %c0_i32_2 = arith.constant 0 : i32
    return %arg0, %c0_i32, %2 : i32, i32, i32
  }
  func.func @transform_3(%arg0: i32, %arg1: i32) -> (i32, i32) {
    %c0_i32 = arith.constant 0 : i32
    %c0_i32_0 = arith.constant 0 : i32
    %c0_i32_1 = arith.constant 0 : i32
    return %c0_i32, %c0_i32_0 : i32, i32
  }
  func.func @transform_4(%arg0: i32, %arg1: i32) -> (i32, i32) {
    %c0_i32 = arith.constant 0 : i32
    %c0_i32_0 = arith.constant 0 : i32
    %c0_i32_1 = arith.constant 0 : i32
    return %c0_i32, %c0_i32_0 : i32, i32
  }
  func.func @transform_5(%arg0: i32, %arg1: i32) -> (i32, i32, i32) {
    %c0_i32 = arith.constant 0 : i32
    %c0_i32_0 = arith.constant 0 : i32
    return %arg0, %c0_i32, %arg1 : i32, i32, i32
  }
  func.func @transform_6(%arg0: i32, %arg1: i32) -> (i32, i32, i32, i32) {
    %c0_i32 = arith.constant 0 : i32
    %c0_i32_0 = arith.constant 0 : i32
    %c0_i32_1 = arith.constant 0 : i32
    return %arg0, %arg1, %c0_i32, %c0_i32_0 : i32, i32, i32, i32
  }
}

module attributes {stable_mosaic.version = 11 : i64} {
  func.func @_bn_relu_kernel(%arg0: i32, %arg1: i32, %arg2: memref<1x8x128xbf16, #tpu.memory_space<vmem>>, %arg3: memref<8x1xf32, #tpu.memory_space<vmem>>, %arg4: memref<8x1xf32, #tpu.memory_space<vmem>>, %arg5: memref<1x8x128xf32, #tpu.memory_space<vmem>>) attributes {dimension_semantics = [#tpu.dimension_semantics<parallel>, #tpu.dimension_semantics<parallel>], iteration_bounds = array<i64: 2, 2>, scalar_prefetch = 0 : i64, scratch_operands = 0 : i64, tpu.core_type = #tpu.core_type<tc>, window_params = [{transform_indices = @transform_0, window_bounds = array<i64: 1, 8, 128>}, {pipeline_mode = #tpu.pipeline_mode<synchronous>, transform_indices = @transform_1, window_bounds = array<i64: 8, 1>}, {pipeline_mode = #tpu.pipeline_mode<synchronous>, transform_indices = @transform_2, window_bounds = array<i64: 8, 1>}, {transform_indices = @transform_3, window_bounds = array<i64: 1, 8, 128>}]} {
    %c0 = arith.constant 0 : index
    %c0_0 = arith.constant 0 : index
    %c0_1 = arith.constant 0 : index
    %0 = vector.load %arg2[%c0, %c0_0, %c0_1] : memref<1x8x128xbf16, #tpu.memory_space<vmem>>, vector<1x8x128xbf16>
    %1 = arith.extf %0 : vector<1x8x128xbf16> to vector<1x8x128xf32>
    %c0_2 = arith.constant 0 : index
    %c0_3 = arith.constant 0 : index
    %2 = vector.load %arg3[%c0_2, %c0_3] : memref<8x1xf32, #tpu.memory_space<vmem>>, vector<8x1xf32>
    %3 = vector.shape_cast %2 : vector<8x1xf32> to vector<1x8x1xf32>
    %4 = vector.broadcast %3 : vector<1x8x1xf32> to vector<1x8x128xf32>
    %5 = arith.mulf %1, %4 : vector<1x8x128xf32>
    %c0_4 = arith.constant 0 : index
    %c0_5 = arith.constant 0 : index
    %6 = vector.load %arg4[%c0_4, %c0_5] : memref<8x1xf32, #tpu.memory_space<vmem>>, vector<8x1xf32>
    %7 = vector.shape_cast %6 : vector<8x1xf32> to vector<1x8x1xf32>
    %8 = vector.broadcast %7 : vector<1x8x1xf32> to vector<1x8x128xf32>
    %9 = arith.addf %5, %8 : vector<1x8x128xf32>
    %cst = arith.constant 0.000000e+00 : f32
    %10 = vector.broadcast %cst : f32 to vector<1x8x128xf32>
    %11 = arith.maximumf %9, %10 : vector<1x8x128xf32>
    %c0_6 = arith.constant 0 : index
    %c0_7 = arith.constant 0 : index
    %c0_8 = arith.constant 0 : index
    %12 = vector.load %arg5[%c0_6, %c0_7, %c0_8] : memref<1x8x128xf32, #tpu.memory_space<vmem>>, vector<1x8x128xf32>
    tpu.vector_store %arg5[%c0_6, %c0_7, %c0_8], %11 {strides = array<i32>} : memref<1x8x128xf32, #tpu.memory_space<vmem>>, vector<1x8x128xf32>,
    return
  }
  func.func @transform_0(%arg0: i32, %arg1: i32) -> (i32, i32, i32) {
    %c0_i32 = arith.constant 0 : i32
    %c0_i32_0 = arith.constant 0 : i32
    return %arg0, %c0_i32, %arg1 : i32, i32, i32
  }
  func.func @transform_1(%arg0: i32, %arg1: i32) -> (i32, i32) {
    %c0_i32 = arith.constant 0 : i32
    %c0_i32_0 = arith.constant 0 : i32
    %c0_i32_1 = arith.constant 0 : i32
    return %c0_i32, %c0_i32_0 : i32, i32
  }
  func.func @transform_2(%arg0: i32, %arg1: i32) -> (i32, i32) {
    %c0_i32 = arith.constant 0 : i32
    %c0_i32_0 = arith.constant 0 : i32
    %c0_i32_1 = arith.constant 0 : i32
    return %c0_i32, %c0_i32_0 : i32, i32
  }
  func.func @transform_3(%arg0: i32, %arg1: i32) -> (i32, i32, i32) {
    %c0_i32 = arith.constant 0 : i32
    %c0_i32_0 = arith.constant 0 : i32
    return %arg0, %c0_i32, %arg1 : i32, i32, i32
  }
}

module attributes {stable_mosaic.version = 11 : i64} {
  func.func @_conv_kernel(%arg0: i32, %arg1: i32, %arg2: memref<1x8x128xbf16, #tpu.memory_space<vmem>>, %arg3: memref<1x8x128xbf16, #tpu.memory_space<vmem>>, %arg4: memref<1x8x128xbf16, #tpu.memory_space<vmem>>, %arg5: memref<8x1xf32, #tpu.memory_space<vmem>>, %arg6: memref<8x1xf32, #tpu.memory_space<vmem>>, %arg7: memref<72x8xbf16, #tpu.memory_space<vmem>>, %arg8: memref<1x8xf32, #tpu.memory_space<vmem>>, %arg9: memref<1x8x128xbf16, #tpu.memory_space<vmem>>, %arg10: memref<1x1x2x8xf32, #tpu.memory_space<vmem>>) attributes {dimension_semantics = [#tpu.dimension_semantics<parallel>, #tpu.dimension_semantics<parallel>], iteration_bounds = array<i64: 2, 2>, scalar_prefetch = 0 : i64, scratch_operands = 0 : i64, tpu.core_type = #tpu.core_type<tc>, window_params = [{transform_indices = @transform_0, window_bounds = array<i64: 1, 8, 128>}, {transform_indices = @transform_1, window_bounds = array<i64: 1, 8, 128>}, {transform_indices = @transform_2, window_bounds = array<i64: 1, 8, 128>}, {pipeline_mode = #tpu.pipeline_mode<synchronous>, transform_indices = @transform_3, window_bounds = array<i64: 8, 1>}, {pipeline_mode = #tpu.pipeline_mode<synchronous>, transform_indices = @transform_4, window_bounds = array<i64: 8, 1>}, {pipeline_mode = #tpu.pipeline_mode<synchronous>, transform_indices = @transform_5, window_bounds = array<i64: 72, 8>}, {pipeline_mode = #tpu.pipeline_mode<synchronous>, transform_indices = @transform_6, window_bounds = array<i64: 1, 8>}, {transform_indices = @transform_7, window_bounds = array<i64: 1, 8, 128>}, {transform_indices = @transform_8, window_bounds = array<i64: 1, 1, 2, 8>}]} {
    %c0 = arith.constant 0 : index
    %c0_0 = arith.constant 0 : index
    %c0_1 = arith.constant 0 : index
    %0 = vector.load %arg2[%c0, %c0_0, %c0_1] : memref<1x8x128xbf16, #tpu.memory_space<vmem>>, vector<1x8x128xbf16>
    %1 = vector.shape_cast %0 : vector<1x8x128xbf16> to vector<8x128xbf16>
    %2 = arith.extf %1 : vector<8x128xbf16> to vector<8x128xf32>
    %c0_2 = arith.constant 0 : index
    %c0_3 = arith.constant 0 : index
    %3 = vector.load %arg5[%c0_2, %c0_3] : memref<8x1xf32, #tpu.memory_space<vmem>>, vector<8x1xf32>
    %4 = vector.broadcast %3 : vector<8x1xf32> to vector<8x128xf32>
    %5 = arith.mulf %2, %4 : vector<8x128xf32>
    %c0_4 = arith.constant 0 : index
    %c0_5 = arith.constant 0 : index
    %6 = vector.load %arg6[%c0_4, %c0_5] : memref<8x1xf32, #tpu.memory_space<vmem>>, vector<8x1xf32>
    %7 = vector.broadcast %6 : vector<8x1xf32> to vector<8x128xf32>
    %8 = arith.addf %5, %7 : vector<8x128xf32>
    %cst = arith.constant 0.000000e+00 : f32
    %9 = vector.broadcast %cst : f32 to vector<8x128xf32>
    %10 = arith.maximumf %8, %9 : vector<8x128xf32>
    %11 = tpu.transpose %10, [1, 0] : vector<8x128xf32> -> vector<128x8xf32>
    %12 = vector.shape_cast %11 : vector<128x8xf32> to vector<8x16x8xf32>
    %13 = arith.truncf %12 : vector<8x16x8xf32> to vector<8x16x8xbf16>
    %c0_6 = arith.constant 0 : index
    %c0_7 = arith.constant 0 : index
    %c0_8 = arith.constant 0 : index
    %14 = vector.load %arg3[%c0_6, %c0_7, %c0_8] : memref<1x8x128xbf16, #tpu.memory_space<vmem>>, vector<1x8x128xbf16>
    %15 = vector.shape_cast %14 : vector<1x8x128xbf16> to vector<8x128xbf16>
    %16 = arith.extf %15 : vector<8x128xbf16> to vector<8x128xf32>
    %c0_9 = arith.constant 0 : index
    %c0_10 = arith.constant 0 : index
    %17 = vector.load %arg5[%c0_9, %c0_10] : memref<8x1xf32, #tpu.memory_space<vmem>>, vector<8x1xf32>
    %18 = vector.broadcast %17 : vector<8x1xf32> to vector<8x128xf32>
    %19 = arith.mulf %16, %18 : vector<8x128xf32>
    %c0_11 = arith.constant 0 : index
    %c0_12 = arith.constant 0 : index
    %20 = vector.load %arg6[%c0_11, %c0_12] : memref<8x1xf32, #tpu.memory_space<vmem>>, vector<8x1xf32>
    %21 = vector.broadcast %20 : vector<8x1xf32> to vector<8x128xf32>
    %22 = arith.addf %19, %21 : vector<8x128xf32>
    %cst_13 = arith.constant 0.000000e+00 : f32
    %23 = vector.broadcast %cst_13 : f32 to vector<8x128xf32>
    %24 = arith.maximumf %22, %23 : vector<8x128xf32>
    %25 = tpu.transpose %24, [1, 0] : vector<8x128xf32> -> vector<128x8xf32>
    %26 = vector.shape_cast %25 : vector<128x8xf32> to vector<8x16x8xf32>
    %27 = arith.truncf %26 : vector<8x16x8xf32> to vector<8x16x8xbf16>
    %28 = vector.extract_strided_slice %27 {offsets = [7, 0, 0], sizes = [1, 16, 8], strides = [1, 1, 1]} : vector<8x16x8xbf16> to vector<1x16x8xbf16>
    %c0_14 = arith.constant 0 : index
    %c0_15 = arith.constant 0 : index
    %c0_16 = arith.constant 0 : index
    %29 = vector.load %arg4[%c0_14, %c0_15, %c0_16] : memref<1x8x128xbf16, #tpu.memory_space<vmem>>, vector<1x8x128xbf16>
    %30 = vector.shape_cast %29 : vector<1x8x128xbf16> to vector<8x128xbf16>
    %31 = arith.extf %30 : vector<8x128xbf16> to vector<8x128xf32>
    %c0_17 = arith.constant 0 : index
    %c0_18 = arith.constant 0 : index
    %32 = vector.load %arg5[%c0_17, %c0_18] : memref<8x1xf32, #tpu.memory_space<vmem>>, vector<8x1xf32>
    %33 = vector.broadcast %32 : vector<8x1xf32> to vector<8x128xf32>
    %34 = arith.mulf %31, %33 : vector<8x128xf32>
    %c0_19 = arith.constant 0 : index
    %c0_20 = arith.constant 0 : index
    %35 = vector.load %arg6[%c0_19, %c0_20] : memref<8x1xf32, #tpu.memory_space<vmem>>, vector<8x1xf32>
    %36 = vector.broadcast %35 : vector<8x1xf32> to vector<8x128xf32>
    %37 = arith.addf %34, %36 : vector<8x128xf32>
    %cst_21 = arith.constant 0.000000e+00 : f32
    %38 = vector.broadcast %cst_21 : f32 to vector<8x128xf32>
    %39 = arith.maximumf %37, %38 : vector<8x128xf32>
    %40 = tpu.transpose %39, [1, 0] : vector<8x128xf32> -> vector<128x8xf32>
    %41 = vector.shape_cast %40 : vector<128x8xf32> to vector<8x16x8xf32>
    %42 = arith.truncf %41 : vector<8x16x8xf32> to vector<8x16x8xbf16>
    %43 = vector.extract_strided_slice %42 {offsets = [0, 0, 0], sizes = [1, 16, 8], strides = [1, 1, 1]} : vector<8x16x8xbf16> to vector<1x16x8xbf16>
    %c0_i32 = arith.constant 0 : i32
    %44 = arith.cmpi sgt, %arg1, %c0_i32 : i32
    %45 = arith.extui %44 : i1 to i32
    %46 = arith.sitofp %45 : i32 to f32
    %c1_i32 = arith.constant 1 : i32
    %47 = arith.cmpi slt, %arg1, %c1_i32 : i32
    %48 = arith.extui %47 : i1 to i32
    %49 = arith.sitofp %48 : i32 to f32
    %50 = arith.extf %28 : vector<1x16x8xbf16> to vector<1x16x8xf32>
    %51 = vector.broadcast %46 : f32 to vector<1x16x8xf32>
    %52 = arith.mulf %50, %51 : vector<1x16x8xf32>
    %53 = arith.truncf %52 : vector<1x16x8xf32> to vector<1x16x8xbf16>
    %54 = arith.extf %43 : vector<1x16x8xbf16> to vector<1x16x8xf32>
    %55 = vector.broadcast %49 : f32 to vector<1x16x8xf32>
    %56 = arith.mulf %54, %55 : vector<1x16x8xf32>
    %57 = arith.truncf %56 : vector<1x16x8xf32> to vector<1x16x8xbf16>
    %58 = tpu.concatenate %53, %13, %57 in 0 : vector<1x16x8xbf16>, vector<8x16x8xbf16>, vector<1x16x8xbf16> -> vector<10x16x8xbf16>
    %cst_22 = arith.constant 0.000000e+00 : bf16
    %59 = vector.broadcast %cst_22 : bf16 to vector<10x1x8xbf16>
    %60 = tpu.concatenate %59, %58, %59 in 1 : vector<10x1x8xbf16>, vector<10x16x8xbf16>, vector<10x1x8xbf16> -> vector<10x18x8xbf16>
    %61 = vector.extract_strided_slice %60 {offsets = [0, 0, 0], sizes = [8, 16, 8], strides = [1, 1, 1]} : vector<10x18x8xbf16> to vector<8x16x8xbf16>
    %62 = vector.shape_cast %61 : vector<8x16x8xbf16> to vector<128x8xbf16>
    %63 = vector.extract_strided_slice %60 {offsets = [0, 1, 0], sizes = [8, 16, 8], strides = [1, 1, 1]} : vector<10x18x8xbf16> to vector<8x16x8xbf16>
    %64 = vector.shape_cast %63 : vector<8x16x8xbf16> to vector<128x8xbf16>
    %65 = vector.extract_strided_slice %60 {offsets = [0, 2, 0], sizes = [8, 16, 8], strides = [1, 1, 1]} : vector<10x18x8xbf16> to vector<8x16x8xbf16>
    %66 = vector.shape_cast %65 : vector<8x16x8xbf16> to vector<128x8xbf16>
    %67 = vector.extract_strided_slice %60 {offsets = [1, 0, 0], sizes = [8, 16, 8], strides = [1, 1, 1]} : vector<10x18x8xbf16> to vector<8x16x8xbf16>
    %68 = vector.shape_cast %67 : vector<8x16x8xbf16> to vector<128x8xbf16>
    %69 = vector.extract_strided_slice %60 {offsets = [1, 1, 0], sizes = [8, 16, 8], strides = [1, 1, 1]} : vector<10x18x8xbf16> to vector<8x16x8xbf16>
    %70 = vector.shape_cast %69 : vector<8x16x8xbf16> to vector<128x8xbf16>
    %71 = vector.extract_strided_slice %60 {offsets = [1, 2, 0], sizes = [8, 16, 8], strides = [1, 1, 1]} : vector<10x18x8xbf16> to vector<8x16x8xbf16>
    %72 = vector.shape_cast %71 : vector<8x16x8xbf16> to vector<128x8xbf16>
    %73 = vector.extract_strided_slice %60 {offsets = [2, 0, 0], sizes = [8, 16, 8], strides = [1, 1, 1]} : vector<10x18x8xbf16> to vector<8x16x8xbf16>
    %74 = vector.shape_cast %73 : vector<8x16x8xbf16> to vector<128x8xbf16>
    %75 = vector.extract_strided_slice %60 {offsets = [2, 1, 0], sizes = [8, 16, 8], strides = [1, 1, 1]} : vector<10x18x8xbf16> to vector<8x16x8xbf16>
    %76 = vector.shape_cast %75 : vector<8x16x8xbf16> to vector<128x8xbf16>
    %77 = vector.extract_strided_slice %60 {offsets = [2, 2, 0], sizes = [8, 16, 8], strides = [1, 1, 1]} : vector<10x18x8xbf16> to vector<8x16x8xbf16>
    %78 = vector.shape_cast %77 : vector<8x16x8xbf16> to vector<128x8xbf16>
    %79 = tpu.concatenate %62, %64, %66, %68, %70, %72, %74, %76, %78 in 1 : vector<128x8xbf16>, vector<128x8xbf16>, vector<128x8xbf16>, vector<128x8xbf16>, vector<128x8xbf16>, vector<128x8xbf16>, vector<128x8xbf16>, vector<128x8xbf16>, vector<128x8xbf16> -> vector<128x72xbf16>
    %c0_23 = arith.constant 0 : index
    %c0_24 = arith.constant 0 : index
    %80 = vector.load %arg7[%c0_23, %c0_24] : memref<72x8xbf16, #tpu.memory_space<vmem>>, vector<72x8xbf16>
    %cst_25 = arith.constant dense<0.000000e+00> : vector<128x8xf32>
    %81 = tpu.matmul %79, %80, %cst_25 {dimension_numbers = #tpu.dot_dimension_numbers<[1], [0], [0], [1], [0, 0, 1, 1], [], []>} : vector<128x72xbf16>, vector<72x8xbf16>, vector<128x8xf32> -> vector<128x8xf32>
    %c0_26 = arith.constant 0 : index
    %c0_27 = arith.constant 0 : index
    %82 = vector.load %arg8[%c0_26, %c0_27] : memref<1x8xf32, #tpu.memory_space<vmem>>, vector<1x8xf32>
    %83 = vector.broadcast %82 : vector<1x8xf32> to vector<128x8xf32>
    %84 = arith.addf %81, %83 : vector<128x8xf32>
    %85 = tpu.transpose %84, [1, 0] : vector<128x8xf32> -> vector<8x128xf32>
    %86 = arith.truncf %85 : vector<8x128xf32> to vector<8x128xbf16>
    %c0_28 = arith.constant 0 : index
    %c0_29 = arith.constant 0 : index
    %c0_30 = arith.constant 0 : index
    %87 = vector.load %arg9[%c0_28, %c0_29, %c0_30] : memref<1x8x128xbf16, #tpu.memory_space<vmem>>, vector<1x8x128xbf16>
    %88 = vector.shape_cast %87 : vector<1x8x128xbf16> to vector<8x128xbf16>
    %89 = vector.shape_cast %86 : vector<8x128xbf16> to vector<1x8x128xbf16>
    tpu.vector_store %arg9[%c0_28, %c0_29, %c0_30], %89 {strides = array<i32>} : memref<1x8x128xbf16, #tpu.memory_space<vmem>>, vector<1x8x128xbf16>,
    %90 = arith.truncf %84 : vector<128x8xf32> to vector<128x8xbf16>
    %91 = arith.extf %90 : vector<128x8xbf16> to vector<128x8xf32>
    %cst_31 = arith.constant dense<0.000000e+00> : vector<8xf32>
    %92 = vector.multi_reduction <add>, %91, %cst_31 [0] : vector<128x8xf32> to vector<8xf32>
    %93 = vector.shape_cast %92 : vector<8xf32> to vector<1x8xf32>
    %94 = arith.mulf %91, %91 : vector<128x8xf32>
    %cst_32 = arith.constant dense<0.000000e+00> : vector<8xf32>
    %95 = vector.multi_reduction <add>, %94, %cst_32 [0] : vector<128x8xf32> to vector<8xf32>
    %96 = vector.shape_cast %95 : vector<8xf32> to vector<1x8xf32>
    %97 = tpu.concatenate %93, %96 in 0 : vector<1x8xf32>, vector<1x8xf32> -> vector<2x8xf32>
    %c0_33 = arith.constant 0 : index
    %c0_34 = arith.constant 0 : index
    %c0_35 = arith.constant 0 : index
    %c0_36 = arith.constant 0 : index
    %98 = vector.load %arg10[%c0_33, %c0_34, %c0_35, %c0_36] : memref<1x1x2x8xf32, #tpu.memory_space<vmem>>, vector<1x1x2x8xf32>
    %99 = vector.shape_cast %98 : vector<1x1x2x8xf32> to vector<2x8xf32>
    %100 = vector.shape_cast %97 : vector<2x8xf32> to vector<1x1x2x8xf32>
    tpu.vector_store %arg10[%c0_33, %c0_34, %c0_35, %c0_36], %100 {strides = array<i32>} : memref<1x1x2x8xf32, #tpu.memory_space<vmem>>, vector<1x1x2x8xf32>,
    return
  }
  func.func @transform_0(%arg0: i32, %arg1: i32) -> (i32, i32, i32) {
    %c0_i32 = arith.constant 0 : i32
    %c0_i32_0 = arith.constant 0 : i32
    return %arg0, %c0_i32, %arg1 : i32, i32, i32
  }
  func.func @transform_1(%arg0: i32, %arg1: i32) -> (i32, i32, i32) {
    %c1_i32 = arith.constant 1 : i32
    %0 = arith.muli %arg1, %c1_i32 : i32
    %c1_i32_0 = arith.constant 1 : i32
    %1 = arith.subi %0, %c1_i32_0 : i32
    %c0_i32 = arith.constant 0 : i32
    %2 = arith.maxsi %1, %c0_i32 : i32
    %c0_i32_1 = arith.constant 0 : i32
    %c0_i32_2 = arith.constant 0 : i32
    return %arg0, %c0_i32_1, %2 : i32, i32, i32
  }
  func.func @transform_2(%arg0: i32, %arg1: i32) -> (i32, i32, i32) {
    %c1_i32 = arith.constant 1 : i32
    %0 = arith.addi %arg1, %c1_i32 : i32
    %c1_i32_0 = arith.constant 1 : i32
    %1 = arith.muli %0, %c1_i32_0 : i32
    %c1_i32_1 = arith.constant 1 : i32
    %2 = arith.minsi %1, %c1_i32_1 : i32
    %c0_i32 = arith.constant 0 : i32
    %c0_i32_2 = arith.constant 0 : i32
    return %arg0, %c0_i32, %2 : i32, i32, i32
  }
  func.func @transform_3(%arg0: i32, %arg1: i32) -> (i32, i32) {
    %c0_i32 = arith.constant 0 : i32
    %c0_i32_0 = arith.constant 0 : i32
    %c0_i32_1 = arith.constant 0 : i32
    return %c0_i32, %c0_i32_0 : i32, i32
  }
  func.func @transform_4(%arg0: i32, %arg1: i32) -> (i32, i32) {
    %c0_i32 = arith.constant 0 : i32
    %c0_i32_0 = arith.constant 0 : i32
    %c0_i32_1 = arith.constant 0 : i32
    return %c0_i32, %c0_i32_0 : i32, i32
  }
  func.func @transform_5(%arg0: i32, %arg1: i32) -> (i32, i32) {
    %c0_i32 = arith.constant 0 : i32
    %c0_i32_0 = arith.constant 0 : i32
    %c0_i32_1 = arith.constant 0 : i32
    return %c0_i32, %c0_i32_0 : i32, i32
  }
  func.func @transform_6(%arg0: i32, %arg1: i32) -> (i32, i32) {
    %c0_i32 = arith.constant 0 : i32
    %c0_i32_0 = arith.constant 0 : i32
    %c0_i32_1 = arith.constant 0 : i32
    return %c0_i32, %c0_i32_0 : i32, i32
  }
  func.func @transform_7(%arg0: i32, %arg1: i32) -> (i32, i32, i32) {
    %c0_i32 = arith.constant 0 : i32
    %c0_i32_0 = arith.constant 0 : i32
    return %arg0, %c0_i32, %arg1 : i32, i32, i32
  }
  func.func @transform_8(%arg0: i32, %arg1: i32) -> (i32, i32, i32, i32) {
    %c0_i32 = arith.constant 0 : i32
    %c0_i32_0 = arith.constant 0 : i32
    %c0_i32_1 = arith.constant 0 : i32
    return %arg0, %arg1, %c0_i32, %c0_i32_0 : i32, i32, i32, i32
  }
}

</mosaic_0001>

<llo_original>
// kernel: unet_down_conv.5
$region0: #{unet_down_conv.5}
  #allocation0 [shape = 'u32[]', space=smem, size = 0x4, offset = 0x4, fixed_abs, tag = 'smem constant byte address 0x4 - core index']
  #allocation1 [shape = 'u32[72,128]{1,0:T(1,128)}', space=vmem, size = 0x9000, scoped, tag = 'internal scratch']
  %s0 = inlined_call_operand.vmem [shape: bf16[2,8,256], index: 0, kind: input, shape index: {}]
  %s1 = inlined_call_operand.vmem [shape: f32[8,1], index: 1, kind: input, shape index: {}]
  %s2 = inlined_call_operand.vmem [shape: f32[8,1], index: 2, kind: input, shape index: {}]
  %s3 = inlined_call_operand.vmem [shape: f32[2,8,256], index: 3, kind: output, shape index: {}]
  %s4 = sld [smem:[#allocation0]]
  $region45: #{unet_down_conv.5} parent=0
    _
  %s6 = ssub.s32 1, %s4
  %s7 = scalar_select 0, %s6, %s4
  loop: start=0, step=1, limit=6
  $region2: #{unet_down_conv.5} parent=0 // loop_pre_header
    _
  $region3: #{unet_down_conv.5} parent=0 // loop_header
    %s9 = sphi 0, %s13
    %p10 = scmp.ge.s32.totalorder %s9, 6
    %s16 = sphi 0, %s28
    %s17 = sphi 0, %s24
    %s18 = sphi 0, %s16
    %s19 = sphi 0, %s17
    %s20 = sphi 0, %s18
    %s21 = sphi 0, %s19
    %s33 = sphi 0, %s35
    %s36 = sphi 0, %s33
    %s37 = sphi 0, %s36
    %s53 = sphi 0, %s37
    %s57 = sphi 0, %s57
    %s59 = sphi 0, %s57
    %s60 = sphi 0, %s59
    %s74 = sphi 0, %s60
    %s78 = sphi 0, %s78
    %s80 = sphi 0, %s78
    %s81 = sphi 0, %s80
    %s95 = sphi 0, %s81
    %s103 = sphi 0, %s105
    %s106 = sphi 0, %s103
    %s107 = sphi 0, %s106
    %s123 = sphi 0, %s107
  $region4: #{unet_down_conv.5} parent=0 // loop_header_branch
    %12 = sbr.rel (%p10) target = $region8
  $region5: #{unet_down_conv.5} parent=0 // loop_body
    %s14 = ssub.s32 %s9, 1
    %s15 = ssub.s32 %s9, 2
    %s22 = sadd.s32 1, %s17
    %p23 = scmp.ge.s32.totalorder %s22, 2
    %s24 = scalar_select %p23, 0, %s22
    %s25 = sadd.s32 1, %s16
    %s26 = scalar_select %p23, %s25, %s16
    %p27 = scmp.ge.s32.totalorder %s26, 2
    %s28 = scalar_select %p27, 0, %s26
    %s29 = ssub.s32 %s16, %s28
    %s30 = ssub.s32 %s17, %s24
    %s31 = sor.u32 %s29, %s30
    %p32 = scmp.eq.s32.totalorder %s31, 0
    %s34 = sadd.s32 %s33, 1
    %s35 = scalar_select %p32, %s33, %s34
    %p38 = pneg %p32
    %p39 = scmp.eq.s32.totalorder %s9, 3
    %p40 = por %p38, %p39
    %p41 = scmp.ne.s32.totalorder %s33, %s36
    %p42 = scmp.eq.s32.totalorder %s9, 0
    %p43 = por %p41, %p42
    %p44 = scmp.ne.s32.totalorder %s33, %s36
    %p45 = scmp.eq.s32.totalorder %s14, 3
    %p46 = por %p44, %p45
    %p47 = scmp.ne.s32.totalorder %s36, %s37
    %p48 = scmp.eq.s32.totalorder %s14, 0
    %p49 = por %p47, %p48
    %p50 = scmp.ne.s32.totalorder %s36, %s37
    %p51 = scmp.eq.s32.totalorder %s15, 3
    %p52 = por %p50, %p51
    %p54 = scmp.ne.s32.totalorder %s37, %s53
    %p55 = scmp.eq.s32.totalorder %s15, 0
    %p56 = por %p54, %p55
    %s58 = sadd.s32 %s57, 1
    %p61 = scmp.eq.s32.totalorder %s9, 3
    %p62 = scmp.ne.s32.totalorder %s57, %s59
    %p63 = scmp.eq.s32.totalorder %s9, 0
    %p64 = por %p62, %p63
    %p65 = scmp.ne.s32.totalorder %s57, %s59
    %p66 = scmp.eq.s32.totalorder %s14, 3
    %p67 = por %p65, %p66
    %p68 = scmp.ne.s32.totalorder %s59, %s60
    %p69 = scmp.eq.s32.totalorder %s14, 0
    %p70 = por %p68, %p69
    %p71 = scmp.ne.s32.totalorder %s59, %s60
    %p72 = scmp.eq.s32.totalorder %s15, 3
    %p73 = por %p71, %p72
    %p75 = scmp.ne.s32.totalorder %s60, %s74
    %p76 = scmp.eq.s32.totalorder %s15, 0
    %p77 = por %p75, %p76
    %s79 = sadd.s32 %s78, 1
    %p82 = scmp.eq.s32.totalorder %s9, 3
    %p83 = scmp.ne.s32.totalorder %s78, %s80
    %p84 = scmp.eq.s32.totalorder %s9, 0
    %p85 = por %p83, %p84
    %p86 = scmp.ne.s32.totalorder %s78, %s80
    %p87 = scmp.eq.s32.totalorder %s14, 3
    %p88 = por %p86, %p87
    %p89 = scmp.ne.s32.totalorder %s80, %s81
    %p90 = scmp.eq.s32.totalorder %s14, 0
    %p91 = por %p89, %p90
    %p92 = scmp.ne.s32.totalorder %s80, %s81
    %p93 = scmp.eq.s32.totalorder %s15, 3
    %p94 = por %p92, %p93
    %p96 = scmp.ne.s32.totalorder %s81, %s95
    %p97 = scmp.eq.s32.totalorder %s15, 0
    %p98 = por %p96, %p97
    %s99 = ssub.s32 %s16, %s28
    %s100 = ssub.s32 %s17, %s24
    %s101 = sor.u32 %s99, %s100
    %p102 = scmp.eq.s32.totalorder %s101, 0
    %s104 = sadd.s32 %s103, 1
    %s105 = scalar_select %p102, %s103, %s104
    %p108 = pneg %p102
    %p109 = scmp.eq.s32.totalorder %s9, 3
    %p110 = por %p108, %p109
    %p111 = scmp.ne.s32.totalorder %s103, %s106
    %p112 = scmp.eq.s32.totalorder %s9, 0
    %p113 = por %p111, %p112
    %p114 = scmp.ne.s32.totalorder %s103, %s106
    %p115 = scmp.eq.s32.totalorder %s14, 3
    %p116 = por %p114, %p115
    %p117 = scmp.ne.s32.totalorder %s106, %s107
    %p118 = scmp.eq.s32.totalorder %s14, 0
    %p119 = por %p117, %p118
    %p120 = scmp.ne.s32.totalorder %s106, %s107
    %p121 = scmp.eq.s32.totalorder %s15, 3
    %p122 = por %p120, %p121
    %p124 = scmp.ne.s32.totalorder %s107, %s123
    %p125 = scmp.eq.s32.totalorder %s15, 0
    %p126 = por %p124, %p125
    %p127 = scmp.le.s32.totalorder 1, %s9
    %p128 = scmp.lt.s32.totalorder %s9, 5
    %p129 = pnand %p127, %p128
    %p130 = pneg %p129
    // Predicated region
    $region9: #{unet_down_conv.5} parent=5 // pred_check
      _
    $region10: #{unet_down_conv.5} parent=5 // pred_check_branch
      %132 = sbr.rel (%p129) target = $region12
    $region11: #{unet_down_conv.5} parent=5 // pred_region
      %s133 = ssub.s32 %s9, 1
      // Predicated region
      $region13: #{unet_down_conv.5} parent=11 // pred_check
        %p134 = pneg %p70
      $region14: #{unet_down_conv.5} parent=11 // pred_check_branch
        %136 = sbr.rel (%p134) target = $region16
      $region15: #{unet_down_conv.5} parent=11 // pred_region
        _
      $region16: #{unet_down_conv.5} parent=11 // pred_fallthru
        _
      // Predicated region
      $region17: #{unet_down_conv.5} parent=11 // pred_check
        %p137 = pneg %p91
      $region18: #{unet_down_conv.5} parent=11 // pred_check_branch
        %139 = sbr.rel (%p137) target = $region20
      $region19: #{unet_down_conv.5} parent=11 // pred_region
        _
      $region20: #{unet_down_conv.5} parent=11 // pred_fallthru
        _
    $region12: #{unet_down_conv.5} parent=5 // pred_fallthru
      _
    %p140 = scmp.lt.s32.totalorder %s9, 4
    // Predicated region
    $region21: #{unet_down_conv.5} parent=5 // pred_check
      %p141 = pneg %p140
    $region22: #{unet_down_conv.5} parent=5 // pred_check_branch
      %143 = sbr.rel (%p141) target = $region24
    $region23: #{unet_down_conv.5} parent=5 // pred_region
      // Predicated region
      $region25: #{unet_down_conv.5} parent=23 // pred_check
        %p144 = pneg %p43
      $region26: #{unet_down_conv.5} parent=23 // pred_check_branch
        %146 = sbr.rel (%p144) target = $region28
      $region27: #{unet_down_conv.5} parent=23 // pred_region
        %p147 = scmp.lt.s32.totalorder %s16, 1
        %s148 = scalar_select %p147, %s16, 1
        %p149 = scmp.lt.s32.totalorder %s17, 1
        %s150 = scalar_select %p149, %s17, 1
        %s151 = smul.addr %s148, 2
        %s152 = sadd.s32 %s150, %s151
        %s153 = smul.addr %s152, 4
        %s154 = scalar_lea.vmem %s0, %s153
      $region28: #{unet_down_conv.5} parent=23 // pred_fallthru
        _
    $region24: #{unet_down_conv.5} parent=5 // pred_fallthru
      _
    %p155 = scmp.le.s32.totalorder 1, %s9
    %p156 = scmp.lt.s32.totalorder %s9, 5
    %p157 = pnand %p155, %p156
    %p158 = pneg %p157
    // Predicated region
    $region29: #{unet_down_conv.5} parent=5 // pred_check
      _
    $region30: #{unet_down_conv.5} parent=5 // pred_check_branch
      %160 = sbr.rel (%p157) target = $region32
    $region31: #{unet_down_conv.5} parent=5 // pred_region
      %s161 = ssub.s32 %s9, 1
      %p162 = scmp.lt.s32.totalorder %s18, 1
      %s163 = scalar_select %p162, %s18, 1
      %p164 = scmp.lt.s32.totalorder %s19, 1
      %s165 = scalar_select %p164, %s19, 1
      %s166 = smul.addr %s163, 2
      %s167 = sadd.s32 %s165, %s166
      %s168 = smul.addr %s167, 4
      %s169 = scalar_lea.vmem %s0, %s168
      %p170 = pneg %p49
      %p171 = pneg %p46
      %p172 = pneg %p70
      %p173 = pneg %p67
      %p174 = pneg %p91
      %p175 = pneg %p88
      %p176 = pneg %p119
      %p177 = pneg %p116
      %p178 = scmp.lt.s32.totalorder %s18, 1
      %s179 = scalar_select %p178, %s18, 1
      %p180 = scmp.lt.s32.totalorder %s19, 1
      %s181 = scalar_select %p180, %s19, 1
      %s182 = smul.addr %s179, 2
      %s183 = sadd.s32 %s181, %s182
      %s184 = smul.addr %s183, 8
      %s185 = scalar_lea.vmem %s3, %s184
      %p186 = scmp.lt.s32.totalorder %s18, 1
      %s187 = scalar_select %p186, %s18, 1
      %p188 = scmp.lt.s32.totalorder %s19, 1
      %s189 = scalar_select %p188, %s19, 1
      %s190 = smul.addr %s187, 2
      %s191 = sadd.s32 %s189, %s190
      %s192 = smul.addr %s191, 4
      %s193 = scalar_lea.vmem %s0, %s192
      %p194 = scmp.lt.s32.totalorder %s18, 1
      %s195 = scalar_select %p194, %s18, 1
      %p196 = scmp.lt.s32.totalorder %s19, 1
      %s197 = scalar_select %p196, %s19, 1
      %s198 = smul.addr %s195, 2
      %s199 = sadd.s32 %s197, %s198
      %s200 = smul.addr %s199, 8
      %s201 = scalar_lea.vmem %s3, %s200
      %v202 = vld [vmem:[%s193] sm:$0xf]
      %v203 = vunpack.c.l.bf16 %v202
      %v204 = vld [vmem:[%s1] sm:$0xff]
      %206 = vset.pattern.permute.xlu0 0
      %207 = vperm.xlu0 %206, %v204
      %v208 = vpop.permute.xlu0 %207
      %v210 = vmul.f32 %v203, %v208
      %v211 = vld [vmem:[%s2] sm:$0xff]
      %213 = vset.pattern.permute.xlu0 0
      %214 = vperm.xlu0 %213, %v211
      %v215 = vpop.permute.xlu0 %214
      %v217 = vadd.f32 %v210, %v215
      %v218 = vmax.f32 %v217, 0.0
      %219 = vst [vmem:[%s201] sm:$0xff] %v218
      %p220 = scmp.lt.s32.totalorder %s18, 1
      %s221 = scalar_select %p220, %s18, 1
      %p222 = scmp.lt.s32.totalorder %s19, 1
      %s223 = scalar_select %p222, %s19, 1
      %s224 = smul.addr %s221, 2
      %s225 = sadd.s32 %s223, %s224
      %s226 = smul.addr %s225, 8
      %s227 = scalar_lea.vmem %s3, %s226
      // Predicated region
      $region33: #{unet_down_conv.5} parent=31 // pred_check
        %p228 = pneg %p116
      $region34: #{unet_down_conv.5} parent=31 // pred_check_branch
        %230 = sbr.rel (%p228) target = $region36
      $region35: #{unet_down_conv.5} parent=31 // pred_region
        _
      $region36: #{unet_down_conv.5} parent=31 // pred_fallthru
        _
    $region32: #{unet_down_conv.5} parent=5 // pred_fallthru
      _
    %p231 = scmp.le.s32.totalorder 2, %s9
    // Predicated region
    $region37: #{unet_down_conv.5} parent=5 // pred_check
      %p232 = pneg %p231
    $region38: #{unet_down_conv.5} parent=5 // pred_check_branch
      %234 = sbr.rel (%p232) target = $region40
    $region39: #{unet_down_conv.5} parent=5 // pred_region
      %s235 = ssub.s32 %s9, 2
      // Predicated region
      $region41: #{unet_down_conv.5} parent=39 // pred_check
        %p236 = pneg %p122
      $region42: #{unet_down_conv.5} parent=39 // pred_check_branch
        %238 = sbr.rel (%p236) target = $region44
      $region43: #{unet_down_conv.5} parent=39 // pred_region
        %p239 = scmp.lt.s32.totalorder %s20, 1
        %s240 = scalar_select %p239, %s20, 1
        %p241 = scmp.lt.s32.totalorder %s21, 1
        %s242 = scalar_select %p241, %s21, 1
        %s243 = smul.addr %s240, 2
        %s244 = sadd.s32 %s242, %s243
        %s245 = smul.addr %s244, 8
        %s246 = scalar_lea.vmem %s3, %s245
      $region44: #{unet_down_conv.5} parent=39 // pred_fallthru
        _
    $region40: #{unet_down_conv.5} parent=5 // pred_fallthru
      _
  $region6: #{unet_down_conv.5} parent=0 // loop_footer
    %s13 = sadd.s32 1, %s9
  $region7: #{unet_down_conv.5} parent=0 // loop_footer_branch
    %8 = sbr.rel target = $region3
  $region8: #{unet_down_conv.5} parent=0 // loop_exit
    _

// kernel: unet_down_conv.4
$region0: #{unet_down_conv.4}
  #allocation0 [shape = 'u32[]', space=smem, size = 0x4, offset = 0x4, fixed_abs, tag = 'smem constant byte address 0x4 - core index']
  #allocation1 [shape = 'u32[72,128]{1,0:T(1,128)}', space=vmem, size = 0x9000, scoped, tag = 'internal scratch']
  %s0 = inlined_call_operand.vmem [shape: bf16[2,8,256], index: 0, kind: input, shape index: {}, may-alias: {0,1,2}]
  %s1 = inlined_call_operand.vmem [shape: bf16[2,8,256], index: 1, kind: input, shape index: {}, may-alias: {0,1,2}]
  %s2 = inlined_call_operand.vmem [shape: bf16[2,8,256], index: 2, kind: input, shape index: {}, may-alias: {0,1,2}]
  %s3 = inlined_call_operand.vmem [shape: f32[8,1], index: 3, kind: input, shape index: {}]
  %s4 = inlined_call_operand.vmem [shape: f32[8,1], index: 4, kind: input, shape index: {}]
  %s5 = inlined_call_operand.vmem [shape: bf16[72,8], index: 5, kind: input, shape index: {}]
  %s6 = inlined_call_operand.vmem [shape: f32[1,8], index: 6, kind: input, shape index: {}]
  %s7 = inlined_call_operand.vmem [shape: bf16[2,8,256], index: 7, kind: output, shape index: {0}]
  %s8 = inlined_call_operand.vmem [shape: f32[2,2,2,8], index: 8, kind: output, shape index: {1}]
  %9 = xla_tuple %s7, %s8
  %s10 = sld [smem:[#allocation0]]
  $region69: #{unet_down_conv.4} parent=0
    _
  %s12 = ssub.s32 1, %s10
  %s13 = scalar_select 0, %s12, %s10
  loop: start=0, step=1, limit=6
  $region2: #{unet_down_conv.4} parent=0 // loop_pre_header
    _
  $region3: #{unet_down_conv.4} parent=0 // loop_header
    %s15 = sphi 0, %s19
    %p16 = scmp.ge.s32.totalorder %s15, 6
    %s22 = sphi 0, %s34
    %s23 = sphi 0, %s30
    %s24 = sphi 0, %s22
    %s25 = sphi 0, %s23
    %s26 = sphi 0, %s24
    %s27 = sphi 0, %s25
    %s39 = sphi 0, %s41
    %s42 = sphi 0, %s39
    %s43 = sphi 0, %s42
    %s59 = sphi 0, %s43
    %s73 = sphi 0, %s75
    %s76 = sphi 0, %s73
    %s77 = sphi 0, %s76
    %s93 = sphi 0, %s77
    %s107 = sphi 0, %s109
    %s110 = sphi 0, %s107
    %s111 = sphi 0, %s110
    %s127 = sphi 0, %s111
    %s131 = sphi 0, %s131
    %s133 = sphi 0, %s131
    %s134 = sphi 0, %s133
    %s148 = sphi 0, %s134
    %s152 = sphi 0, %s152
    %s154 = sphi 0, %s152
    %s155 = sphi 0, %s154
    %s169 = sphi 0, %s155
    %s173 = sphi 0, %s173
    %s175 = sphi 0, %s173
    %s176 = sphi 0, %s175
    %s190 = sphi 0, %s176
    %s194 = sphi 0, %s194
    %s196 = sphi 0, %s194
    %s197 = sphi 0, %s196
    %s211 = sphi 0, %s197
    %s219 = sphi 0, %s221
    %s222 = sphi 0, %s219
    %s223 = sphi 0, %s222
    %s239 = sphi 0, %s223
    %s247 = sphi 0, %s249
    %s250 = sphi 0, %s247
    %s251 = sphi 0, %s250
    %s267 = sphi 0, %s251
  $region4: #{unet_down_conv.4} parent=0 // loop_header_branch
    %18 = sbr.rel (%p16) target = $region8
  $region5: #{unet_down_conv.4} parent=0 // loop_body
    %s20 = ssub.s32 %s15, 1
    %s21 = ssub.s32 %s15, 2
    %s28 = sadd.s32 1, %s23
    %p29 = scmp.ge.s32.totalorder %s28, 2
    %s30 = scalar_select %p29, 0, %s28
    %s31 = sadd.s32 1, %s22
    %s32 = scalar_select %p29, %s31, %s22
    %p33 = scmp.ge.s32.totalorder %s32, 2
    %s34 = scalar_select %p33, 0, %s32
    %s35 = ssub.s32 %s22, %s34
    %s36 = ssub.s32 %s23, %s30
    %s37 = sor.u32 %s35, %s36
    %p38 = scmp.eq.s32.totalorder %s37, 0
    %s40 = sadd.s32 %s39, 1
    %s41 = scalar_select %p38, %s39, %s40
    %p44 = pneg %p38
    %p45 = scmp.eq.s32.totalorder %s15, 3
    %p46 = por %p44, %p45
    %p47 = scmp.ne.s32.totalorder %s39, %s42
    %p48 = scmp.eq.s32.totalorder %s15, 0
    %p49 = por %p47, %p48
    %p50 = scmp.ne.s32.totalorder %s39, %s42
    %p51 = scmp.eq.s32.totalorder %s20, 3
    %p52 = por %p50, %p51
    %p53 = scmp.ne.s32.totalorder %s42, %s43
    %p54 = scmp.eq.s32.totalorder %s20, 0
    %p55 = por %p53, %p54
    %p56 = scmp.ne.s32.totalorder %s42, %s43
    %p57 = scmp.eq.s32.totalorder %s21, 3
    %p58 = por %p56, %p57
    %p60 = scmp.ne.s32.totalorder %s43, %s59
    %p61 = scmp.eq.s32.totalorder %s21, 0
    %p62 = por %p60, %p61
    %s63 = ssub.s32 %s23, 1
    %p64 = scmp.gt.s32.totalorder %s63, 0
    %s65 = scalar_select %p64, %s63, 0
    %s66 = ssub.s32 %s30, 1
    %p67 = scmp.gt.s32.totalorder %s66, 0
    %s68 = scalar_select %p67, %s66, 0
    %s69 = ssub.s32 %s22, %s34
    %s70 = ssub.s32 %s65, %s68
    %s71 = sor.u32 %s69, %s70
    %p72 = scmp.eq.s32.totalorder %s71, 0
    %s74 = sadd.s32 %s73, 1
    %s75 = scalar_select %p72, %s73, %s74
    %p78 = pneg %p72
    %p79 = scmp.eq.s32.totalorder %s15, 3
    %p80 = por %p78, %p79
    %p81 = scmp.ne.s32.totalorder %s73, %s76
    %p82 = scmp.eq.s32.totalorder %s15, 0
    %p83 = por %p81, %p82
    %p84 = scmp.ne.s32.totalorder %s73, %s76
    %p85 = scmp.eq.s32.totalorder %s20, 3
    %p86 = por %p84, %p85
    %p87 = scmp.ne.s32.totalorder %s76, %s77
    %p88 = scmp.eq.s32.totalorder %s20, 0
    %p89 = por %p87, %p88
    %p90 = scmp.ne.s32.totalorder %s76, %s77
    %p91 = scmp.eq.s32.totalorder %s21, 3
    %p92 = por %p90, %p91
    %p94 = scmp.ne.s32.totalorder %s77, %s93
    %p95 = scmp.eq.s32.totalorder %s21, 0
    %p96 = por %p94, %p95
    %s97 = sadd.s32 %s23, 1
    %p98 = scmp.lt.s32.totalorder %s97, 1
    %s99 = scalar_select %p98, %s97, 1
    %s100 = sadd.s32 %s30, 1
    %p101 = scmp.lt.s32.totalorder %s100, 1
    %s102 = scalar_select %p101, %s100, 1
    %s103 = ssub.s32 %s22, %s34
    %s104 = ssub.s32 %s99, %s102
    %s105 = sor.u32 %s103, %s104
    %p106 = scmp.eq.s32.totalorder %s105, 0
    %s108 = sadd.s32 %s107, 1
    %s109 = scalar_select %p106, %s107, %s108
    %p112 = pneg %p106
    %p113 = scmp.eq.s32.totalorder %s15, 3
    %p114 = por %p112, %p113
    %p115 = scmp.ne.s32.totalorder %s107, %s110
    %p116 = scmp.eq.s32.totalorder %s15, 0
    %p117 = por %p115, %p116
    %p118 = scmp.ne.s32.totalorder %s107, %s110
    %p119 = scmp.eq.s32.totalorder %s20, 3
    %p120 = por %p118, %p119
    %p121 = scmp.ne.s32.totalorder %s110, %s111
    %p122 = scmp.eq.s32.totalorder %s20, 0
    %p123 = por %p121, %p122
    %p124 = scmp.ne.s32.totalorder %s110, %s111
    %p125 = scmp.eq.s32.totalorder %s21, 3
    %p126 = por %p124, %p125
    %p128 = scmp.ne.s32.totalorder %s111, %s127
    %p129 = scmp.eq.s32.totalorder %s21, 0
    %p130 = por %p128, %p129
    %s132 = sadd.s32 %s131, 1
    %p135 = scmp.eq.s32.totalorder %s15, 3
    %p136 = scmp.ne.s32.totalorder %s131, %s133
    %p137 = scmp.eq.s32.totalorder %s15, 0
    %p138 = por %p136, %p137
    %p139 = scmp.ne.s32.totalorder %s131, %s133
    %p140 = scmp.eq.s32.totalorder %s20, 3
    %p141 = por %p139, %p140
    %p142 = scmp.ne.s32.totalorder %s133, %s134
    %p143 = scmp.eq.s32.totalorder %s20, 0
    %p144 = por %p142, %p143
    %p145 = scmp.ne.s32.totalorder %s133, %s134
    %p146 = scmp.eq.s32.totalorder %s21, 3
    %p147 = por %p145, %p146
    %p149 = scmp.ne.s32.totalorder %s134, %s148
    %p150 = scmp.eq.s32.totalorder %s21, 0
    %p151 = por %p149, %p150
    %s153 = sadd.s32 %s152, 1
    %p156 = scmp.eq.s32.totalorder %s15, 3
    %p157 = scmp.ne.s32.totalorder %s152, %s154
    %p158 = scmp.eq.s32.totalorder %s15, 0
    %p159 = por %p157, %p158
    %p160 = scmp.ne.s32.totalorder %s152, %s154
    %p161 = scmp.eq.s32.totalorder %s20, 3
    %p162 = por %p160, %p161
    %p163 = scmp.ne.s32.totalorder %s154, %s155
    %p164 = scmp.eq.s32.totalorder %s20, 0
    %p165 = por %p163, %p164
    %p166 = scmp.ne.s32.totalorder %s154, %s155
    %p167 = scmp.eq.s32.totalorder %s21, 3
    %p168 = por %p166, %p167
    %p170 = scmp.ne.s32.totalorder %s155, %s169
    %p171 = scmp.eq.s32.totalorder %s21, 0
    %p172 = por %p170, %p171
    %s174 = sadd.s32 %s173, 1
    %p177 = scmp.eq.s32.totalorder %s15, 3
    %p178 = scmp.ne.s32.totalorder %s173, %s175
    %p179 = scmp.eq.s32.totalorder %s15, 0
    %p180 = por %p178, %p179
    %p181 = scmp.ne.s32.totalorder %s173, %s175
    %p182 = scmp.eq.s32.totalorder %s20, 3
    %p183 = por %p181, %p182
    %p184 = scmp.ne.s32.totalorder %s175, %s176
    %p185 = scmp.eq.s32.totalorder %s20, 0
    %p186 = por %p184, %p185
    %p187 = scmp.ne.s32.totalorder %s175, %s176
    %p188 = scmp.eq.s32.totalorder %s21, 3
    %p189 = por %p187, %p188
    %p191 = scmp.ne.s32.totalorder %s176, %s190
    %p192 = scmp.eq.s32.totalorder %s21, 0
    %p193 = por %p191, %p192
    %s195 = sadd.s32 %s194, 1
    %p198 = scmp.eq.s32.totalorder %s15, 3
    %p199 = scmp.ne.s32.totalorder %s194, %s196
    %p200 = scmp.eq.s32.totalorder %s15, 0
    %p201 = por %p199, %p200
    %p202 = scmp.ne.s32.totalorder %s194, %s196
    %p203 = scmp.eq.s32.totalorder %s20, 3
    %p204 = por %p202, %p203
    %p205 = scmp.ne.s32.totalorder %s196, %s197
    %p206 = scmp.eq.s32.totalorder %s20, 0
    %p207 = por %p205, %p206
    %p208 = scmp.ne.s32.totalorder %s196, %s197
    %p209 = scmp.eq.s32.totalorder %s21, 3
    %p210 = por %p208, %p209
    %p212 = scmp.ne.s32.totalorder %s197, %s211
    %p213 = scmp.eq.s32.totalorder %s21, 0
    %p214 = por %p212, %p213
    %s215 = ssub.s32 %s22, %s34
    %s216 = ssub.s32 %s23, %s30
    %s217 = sor.u32 %s215, %s216
    %p218 = scmp.eq.s32.totalorder %s217, 0
    %s220 = sadd.s32 %s219, 1
    %s221 = scalar_select %p218, %s219, %s220
    %p224 = pneg %p218
    %p225 = scmp.eq.s32.totalorder %s15, 3
    %p226 = por %p224, %p225
    %p227 = scmp.ne.s32.totalorder %s219, %s222
    %p228 = scmp.eq.s32.totalorder %s15, 0
    %p229 = por %p227, %p228
    %p230 = scmp.ne.s32.totalorder %s219, %s222
    %p231 = scmp.eq.s32.totalorder %s20, 3
    %p232 = por %p230, %p231
    %p233 = scmp.ne.s32.totalorder %s222, %s223
    %p234 = scmp.eq.s32.totalorder %s20, 0
    %p235 = por %p233, %p234
    %p236 = scmp.ne.s32.totalorder %s222, %s223
    %p237 = scmp.eq.s32.totalorder %s21, 3
    %p238 = por %p236, %p237
    %p240 = scmp.ne.s32.totalorder %s223, %s239
    %p241 = scmp.eq.s32.totalorder %s21, 0
    %p242 = por %p240, %p241
    %s243 = ssub.s32 %s22, %s34
    %s244 = ssub.s32 %s23, %s30
    %s245 = sor.u32 %s243, %s244
    %p246 = scmp.eq.s32.totalorder %s245, 0
    %s248 = sadd.s32 %s247, 1
    %s249 = scalar_select %p246, %s247, %s248
    %p252 = pneg %p246
    %p253 = scmp.eq.s32.totalorder %s15, 3
    %p254 = por %p252, %p253
    %p255 = scmp.ne.s32.totalorder %s247, %s250
    %p256 = scmp.eq.s32.totalorder %s15, 0
    %p257 = por %p255, %p256
    %p258 = scmp.ne.s32.totalorder %s247, %s250
    %p259 = scmp.eq.s32.totalorder %s20, 3
    %p260 = por %p258, %p259
    %p261 = scmp.ne.s32.totalorder %s250, %s251
    %p262 = scmp.eq.s32.totalorder %s20, 0
    %p263 = por %p261, %p262
    %p264 = scmp.ne.s32.totalorder %s250, %s251
    %p265 = scmp.eq.s32.totalorder %s21, 3
    %p266 = por %p264, %p265
    %p268 = scmp.ne.s32.totalorder %s251, %s267
    %p269 = scmp.eq.s32.totalorder %s21, 0
    %p270 = por %p268, %p269
    %p271 = scmp.le.s32.totalorder 1, %s15
    %p272 = scmp.lt.s32.totalorder %s15, 5
    %p273 = pnand %p271, %p272
    %p274 = pneg %p273
    // Predicated region
    $region9: #{unet_down_conv.4} parent=5 // pred_check
      _
    $region10: #{unet_down_conv.4} parent=5 // pred_check_branch
      %276 = sbr.rel (%p273) target = $region12
    $region11: #{unet_down_conv.4} parent=5 // pred_region
      %s277 = ssub.s32 %s15, 1
      // Predicated region
      $region13: #{unet_down_conv.4} parent=11 // pred_check
        %p278 = pneg %p144
      $region14: #{unet_down_conv.4} parent=11 // pred_check_branch
        %280 = sbr.rel (%p278) target = $region16
      $region15: #{unet_down_conv.4} parent=11 // pred_region
        _
      $region16: #{unet_down_conv.4} parent=11 // pred_fallthru
        _
      // Predicated region
      $region17: #{unet_down_conv.4} parent=11 // pred_check
        %p281 = pneg %p165
      $region18: #{unet_down_conv.4} parent=11 // pred_check_branch
        %283 = sbr.rel (%p281) target = $region20
      $region19: #{unet_down_conv.4} parent=11 // pred_region
        _
      $region20: #{unet_down_conv.4} parent=11 // pred_fallthru
        _
      // Predicated region
      $region21: #{unet_down_conv.4} parent=11 // pred_check
        %p284 = pneg %p186
      $region22: #{unet_down_conv.4} parent=11 // pred_check_branch
        %286 = sbr.rel (%p284) target = $region24
      $region23: #{unet_down_conv.4} parent=11 // pred_region
        _
      $region24: #{unet_down_conv.4} parent=11 // pred_fallthru
        _
      // Predicated region
      $region25: #{unet_down_conv.4} parent=11 // pred_check
        %p287 = pneg %p207
      $region26: #{unet_down_conv.4} parent=11 // pred_check_branch
        %289 = sbr.rel (%p287) target = $region28
      $region27: #{unet_down_conv.4} parent=11 // pred_region
        _
      $region28: #{unet_down_conv.4} parent=11 // pred_fallthru
        _
    $region12: #{unet_down_conv.4} parent=5 // pred_fallthru
      _
    %p290 = scmp.lt.s32.totalorder %s15, 4
    // Predicated region
    $region29: #{unet_down_conv.4} parent=5 // pred_check
      %p291 = pneg %p290
    $region30: #{unet_down_conv.4} parent=5 // pred_check_branch
      %293 = sbr.rel (%p291) target = $region32
    $region31: #{unet_down_conv.4} parent=5 // pred_region
      // Predicated region
      $region33: #{unet_down_conv.4} parent=31 // pred_check
        %p294 = pneg %p49
      $region34: #{unet_down_conv.4} parent=31 // pred_check_branch
        %296 = sbr.rel (%p294) target = $region36
      $region35: #{unet_down_conv.4} parent=31 // pred_region
        %p297 = scmp.lt.s32.totalorder %s22, 1
        %s298 = scalar_select %p297, %s22, 1
        %p299 = scmp.lt.s32.totalorder %s23, 1
        %s300 = scalar_select %p299, %s23, 1
        %s301 = smul.addr %s298, 2
        %s302 = sadd.s32 %s300, %s301
        %s303 = smul.addr %s302, 4
        %s304 = scalar_lea.vmem %s0, %s303
      $region36: #{unet_down_conv.4} parent=31 // pred_fallthru
        _
      // Predicated region
      $region37: #{unet_down_conv.4} parent=31 // pred_check
        %p305 = pneg %p83
      $region38: #{unet_down_conv.4} parent=31 // pred_check_branch
        %307 = sbr.rel (%p305) target = $region40
      $region39: #{unet_down_conv.4} parent=31 // pred_region
        %s308 = ssub.s32 %s23, 1
        %p309 = scmp.gt.s32.totalorder %s308, 0
        %s310 = scalar_select %p309, %s308, 0
        %p311 = scmp.lt.s32.totalorder %s22, 1
        %s312 = scalar_select %p311, %s22, 1
        %p313 = scmp.lt.s32.totalorder %s310, 1
        %s314 = scalar_select %p313, %s310, 1
        %s315 = smul.addr %s312, 2
        %s316 = sadd.s32 %s314, %s315
        %s317 = smul.addr %s316, 4
        %s318 = scalar_lea.vmem %s1, %s317
        %s319 = ssub.s32 %s23, 1
        %p320 = scmp.gt.s32.totalorder %s319, 0
        %s321 = scalar_select %p320, %s319, 0
      $region40: #{unet_down_conv.4} parent=31 // pred_fallthru
        _
      // Predicated region
      $region41: #{unet_down_conv.4} parent=31 // pred_check
        %p322 = pneg %p117
      $region42: #{unet_down_conv.4} parent=31 // pred_check_branch
        %324 = sbr.rel (%p322) target = $region44
      $region43: #{unet_down_conv.4} parent=31 // pred_region
        %s325 = sadd.s32 %s23, 1
        %p326 = scmp.lt.s32.totalorder %s325, 1
        %s327 = scalar_select %p326, %s325, 1
        %p328 = scmp.lt.s32.totalorder %s22, 1
        %s329 = scalar_select %p328, %s22, 1
        %p330 = scmp.lt.s32.totalorder %s327, 1
        %s331 = scalar_select %p330, %s327, 1
        %s332 = smul.addr %s329, 2
        %s333 = sadd.s32 %s331, %s332
        %s334 = smul.addr %s333, 4
        %s335 = scalar_lea.vmem %s2, %s334
        %s336 = sadd.s32 %s23, 1
        %p337 = scmp.lt.s32.totalorder %s336, 1
        %s338 = scalar_select %p337, %s336, 1
      $region44: #{unet_down_conv.4} parent=31 // pred_fallthru
        _
    $region32: #{unet_down_conv.4} parent=5 // pred_fallthru
      _
    %p339 = scmp.le.s32.totalorder 1, %s15
    %p340 = scmp.lt.s32.totalorder %s15, 5
    %p341 = pnand %p339, %p340
    %p342 = pneg %p341
    // Predicated region
    $region45: #{unet_down_conv.4} parent=5 // pred_check
      _
    $region46: #{unet_down_conv.4} parent=5 // pred_check_branch
      %344 = sbr.rel (%p341) target = $region48
    $region47: #{unet_down_conv.4} parent=5 // pred_region
      %s345 = ssub.s32 %s15, 1
      %p346 = scmp.lt.s32.totalorder %s24, 1
      %s347 = scalar_select %p346, %s24, 1
      %p348 = scmp.lt.s32.totalorder %s25, 1
      %s349 = scalar_select %p348, %s25, 1
      %s350 = smul.addr %s347, 2
      %s351 = sadd.s32 %s349, %s350
      %s352 = smul.addr %s351, 4
      %s353 = scalar_lea.vmem %s0, %s352
      %p354 = pneg %p55
      %p355 = pneg %p52
      %s356 = ssub.s32 %s25, 1
      %p357 = scmp.gt.s32.totalorder %s356, 0
      %s358 = scalar_select %p357, %s356, 0
      %p359 = scmp.lt.s32.totalorder %s24, 1
      %s360 = scalar_select %p359, %s24, 1
      %p361 = scmp.lt.s32.totalorder %s358, 1
      %s362 = scalar_select %p361, %s358, 1
      %s363 = smul.addr %s360, 2
      %s364 = sadd.s32 %s362, %s363
      %s365 = smul.addr %s364, 4
      %s366 = scalar_lea.vmem %s1, %s365
      %p367 = pneg %p89
      %p368 = pneg %p86
      %s369 = sadd.s32 %s25, 1
      %p370 = scmp.lt.s32.totalorder %s369, 1
      %s371 = scalar_select %p370, %s369, 1
      %p372 = scmp.lt.s32.totalorder %s24, 1
      %s373 = scalar_select %p372, %s24, 1
      %p374 = scmp.lt.s32.totalorder %s371, 1
      %s375 = scalar_select %p374, %s371, 1
      %s376 = smul.addr %s373, 2
      %s377 = sadd.s32 %s375, %s376
      %s378 = smul.addr %s377, 4
      %s379 = scalar_lea.vmem %s2, %s378
      %p380 = pneg %p123
      %p381 = pneg %p120
      %p382 = pneg %p144
      %p383 = pneg %p141
      %p384 = pneg %p165
      %p385 = pneg %p162
      %p386 = pneg %p186
      %p387 = pneg %p183
      %p388 = pneg %p207
      %p389 = pneg %p204
      %p390 = pneg %p235
      %p391 = pneg %p232
      %p392 = scmp.lt.s32.totalorder %s24, 1
      %s393 = scalar_select %p392, %s24, 1
      %p394 = scmp.lt.s32.totalorder %s25, 1
      %s395 = scalar_select %p394, %s25, 1
      %s396 = smul.addr %s393, 2
      %s397 = sadd.s32 %s395, %s396
      %s398 = smul.addr %s397, 4
      %s399 = scalar_lea.vmem %s7, %s398
      %p400 = pneg %p263
      %p401 = pneg %p260
      %p402 = scmp.lt.s32.totalorder %s24, 1
      %s403 = scalar_select %p402, %s24, 1
      %p404 = scmp.lt.s32.totalorder %s25, 1
      %s405 = scalar_select %p404, %s25, 1
      %s406 = smul.addr %s403, 2
      %s407 = sadd.s32 %s405, %s406
      %s408 = smul.addr %s407, 2
      %s409 = scalar_lea.vmem %s8, %s408
      %p410 = scmp.lt.s32.totalorder %s24, 1
      %s411 = scalar_select %p410, %s24, 1
      %p412 = scmp.lt.s32.totalorder %s25, 1
      %s413 = scalar_select %p412, %s25, 1
      %s414 = smul.addr %s411, 2
      %s415 = sadd.s32 %s413, %s414
      %s416 = smul.addr %s415, 4
      %s417 = scalar_lea.vmem %s0, %s416
      %s418 = ssub.s32 %s25, 1
      %p419 = scmp.gt.s32.totalorder %s418, 0
      %s420 = scalar_select %p419, %s418, 0
      %p421 = scmp.lt.s32.totalorder %s24, 1
      %s422 = scalar_select %p421, %s24, 1
      %p423 = scmp.lt.s32.totalorder %s420, 1
      %s424 = scalar_select %p423, %s420, 1
      %s425 = smul.addr %s422, 2
      %s426 = sadd.s32 %s424, %s425
      %s427 = smul.addr %s426, 4
      %s428 = scalar_lea.vmem %s1, %s427
      %s429 = ssub.s32 %s25, 1
      %p430 = scmp.gt.s32.totalorder %s429, 0
      %s431 = scalar_select %p430, %s429, 0
      %s432 = sadd.s32 %s25, 1
      %p433 = scmp.lt.s32.totalorder %s432, 1
      %s434 = scalar_select %p433, %s432, 1
      %p435 = scmp.lt.s32.totalorder %s24, 1
      %s436 = scalar_select %p435, %s24, 1
      %p437 = scmp.lt.s32.totalorder %s434, 1
      %s438 = scalar_select %p437, %s434, 1
      %s439 = smul.addr %s436, 2
      %s440 = sadd.s32 %s438, %s439
      %s441 = smul.addr %s440, 4
      %s442 = scalar_lea.vmem %s2, %s441
      %s443 = sadd.s32 %s25, 1
      %p444 = scmp.lt.s32.totalorder %s443, 1
      %s445 = scalar_select %p444, %s443, 1
      %p446 = scmp.lt.s32.totalorder %s24, 1
      %s447 = scalar_select %p446, %s24, 1
      %p448 = scmp.lt.s32.totalorder %s25, 1
      %s449 = scalar_select %p448, %s25, 1
      %s450 = smul.addr %s447, 2
      %s451 = sadd.s32 %s449, %s450
      %s452 = smul.addr %s451, 4
      %s453 = scalar_lea.vmem %s7, %s452
      %p454 = scmp.lt.s32.totalorder %s24, 1
      %s455 = scalar_select %p454, %s24, 1
      %p456 = scmp.lt.s32.totalorder %s25, 1
      %s457 = scalar_select %p456, %s25, 1
      %s458 = smul.addr %s455, 2
      %s459 = sadd.s32 %s457, %s458
      %s460 = smul.addr %s459, 2
      %s461 = scalar_lea.vmem %s8, %s460
      %v463 = vld [vmem:[%s417] sm:$0xf]
      %v464 = vunpack.c.l.bf16 %v463
      %v465 = vld [vmem:[%s3] sm:$0xff]
      %467 = vset.pattern.permute.xlu0 0
      %468 = vperm.xlu0 %467, %v465
      %v469 = vpop.permute.xlu0 %468
      %v471 = vmul.f32 %v464, %v469
      %v472 = vld [vmem:[%s4] sm:$0xff]
      %474 = vset.pattern.permute.xlu0 0
      %475 = vperm.xlu0 %474, %v472
      %v476 = vpop.permute.xlu0 %475
      %v478 = vadd.f32 %v471, %v476
      %v479 = vmax.f32 %v478, 0.0
      %480 = vxpose.xlu0.b32.start [1/16] %v479, 128
      %481 = vxpose.xlu0.b32.cont [2/16] 0.0, 128
      %482 = vxpose.xlu0.b32.cont [3/16] 0.0, 128
      %483 = vxpose.xlu0.b32.cont [4/16] 0.0, 128
      %484 = vxpose.xlu0.b32.cont [5/16] 0.0, 128
      %485 = vxpose.xlu0.b32.cont [6/16] 0.0, 128
      %486 = vxpose.xlu0.b32.cont [7/16] 0.0, 128
      %487 = vxpose.xlu0.b32.cont [8/16] 0.0, 128
      %488 = vxpose.xlu0.b32.cont [9/16] 0.0, 128
      %489 = vxpose.xlu0.b32.cont [10/16] 0.0, 128
      %490 = vxpose.xlu0.b32.cont [11/16] 0.0, 128
      %491 = vxpose.xlu0.b32.cont [12/16] 0.0, 128
      %492 = vxpose.xlu0.b32.cont [13/16] 0.0, 128
      %493 = vxpose.xlu0.b32.cont [14/16] 0.0, 128
      %494 = vxpose.xlu0.b32.cont [15/16] 0.0, 128
      %495 = vxpose.xlu0.b32.end [16/16] 0.0, 128
      %v496 = vpop.trf.xlu0
      %v497 = vpop.trf.xlu0
      %v498 = vpop.trf.xlu0
      %v499 = vpop.trf.xlu0
      %v500 = vpop.trf.xlu0
      %v501 = vpop.trf.xlu0
      %v502 = vpop.trf.xlu0
      %v503 = vpop.trf.xlu0
      %v504 = vpop.trf.xlu0
      %v505 = vpop.trf.xlu0
      %v506 = vpop.trf.xlu0
      %v507 = vpop.trf.xlu0
      %v508 = vpop.trf.xlu0
      %v509 = vpop.trf.xlu0
      %v510 = vpop.trf.xlu0
      %v511 = vpop.trf.xlu0
      %v512 = vpack.c.bf16 %v496, %v496
      %v513 = vpack.c.bf16 %v497, %v497
      %v514 = vpack.c.bf16 %v498, %v498
      %v515 = vpack.c.bf16 %v499, %v499
      %v516 = vpack.c.bf16 %v500, %v500
      %v517 = vpack.c.bf16 %v501, %v501
      %v518 = vpack.c.bf16 %v502, %v502
      %v519 = vpack.c.bf16 %v503, %v503
      %v520 = vpack.c.bf16 %v504, %v504
      %v521 = vpack.c.bf16 %v505, %v505
      %v522 = vpack.c.bf16 %v506, %v506
      %v523 = vpack.c.bf16 %v507, %v507
      %v524 = vpack.c.bf16 %v508, %v508
      %v525 = vpack.c.bf16 %v509, %v509
      %v526 = vpack.c.bf16 %v510, %v510
      %v527 = vpack.c.bf16 %v511, %v511
      %v528 = vld [vmem:[%s428] sm:$0xf]
      %v529 = vunpack.c.l.bf16 %v528
      %v530 = vmul.f32 %v529, %v469
      %v531 = vadd.f32 %v530, %v476
      %v532 = vmax.f32 %v531, 0.0
      %533 = vxpose.xlu0.b32.start [1/16] %v532, 128
      %534 = vxpose.xlu0.b32.cont [2/16] 0.0, 128
      %535 = vxpose.xlu0.b32.cont [3/16] 0.0, 128
      %536 = vxpose.xlu0.b32.cont [4/16] 0.0, 128
      %537 = vxpose.xlu0.b32.cont [5/16] 0.0, 128
      %538 = vxpose.xlu0.b32.cont [6/16] 0.0, 128
      %539 = vxpose.xlu0.b32.cont [7/16] 0.0, 128
      %540 = vxpose.xlu0.b32.cont [8/16] 0.0, 128
      %541 = vxpose.xlu0.b32.cont [9/16] 0.0, 128
      %542 = vxpose.xlu0.b32.cont [10/16] 0.0, 128
      %543 = vxpose.xlu0.b32.cont [11/16] 0.0, 128
      %544 = vxpose.xlu0.b32.cont [12/16] 0.0, 128
      %545 = vxpose.xlu0.b32.cont [13/16] 0.0, 128
      %546 = vxpose.xlu0.b32.cont [14/16] 0.0, 128
      %547 = vxpose.xlu0.b32.cont [15/16] 0.0, 128
      %548 = vxpose.xlu0.b32.end [16/16] 0.0, 128
      %v549 = vpop.trf.xlu0
      %v550 = vpop.trf.xlu0
      %v551 = vpop.trf.xlu0
      %v552 = vpop.trf.xlu0
      %v553 = vpop.trf.xlu0
      %v554 = vpop.trf.xlu0
      %v555 = vpop.trf.xlu0
      %v556 = vpop.trf.xlu0
      %v557 = vpop.trf.xlu0
      %v558 = vpop.trf.xlu0
      %v559 = vpop.trf.xlu0
      %v560 = vpop.trf.xlu0
      %v561 = vpop.trf.xlu0
      %v562 = vpop.trf.xlu0
      %v563 = vpop.trf.xlu0
      %v564 = vpop.trf.xlu0
      %v565 = vpack.c.bf16 %v563, %v563
      %v566 = vpack.c.bf16 %v564, %v564
      %v567 = vld [vmem:[%s442] sm:$0xf]
      %v568 = vunpack.c.l.bf16 %v567
      %v569 = vmul.f32 %v568, %v469
      %v570 = vadd.f32 %v569, %v476
      %v571 = vmax.f32 %v570, 0.0
      %572 = vxpose.xlu0.b32.start [1/16] %v571, 128
      %573 = vxpose.xlu0.b32.cont [2/16] 0.0, 128
      %574 = vxpose.xlu0.b32.cont [3/16] 0.0, 128
      %575 = vxpose.xlu0.b32.cont [4/16] 0.0, 128
      %576 = vxpose.xlu0.b32.cont [5/16] 0.0, 128
      %577 = vxpose.xlu0.b32.cont [6/16] 0.0, 128
      %578 = vxpose.xlu0.b32.cont [7/16] 0.0, 128
      %579 = vxpose.xlu0.b32.cont [8/16] 0.0, 128
      %580 = vxpose.xlu0.b32.cont [9/16] 0.0, 128
      %581 = vxpose.xlu0.b32.cont [10/16] 0.0, 128
      %582 = vxpose.xlu0.b32.cont [11/16] 0.0, 128
      %583 = vxpose.xlu0.b32.cont [12/16] 0.0, 128
      %584 = vxpose.xlu0.b32.cont [13/16] 0.0, 128
      %585 = vxpose.xlu0.b32.cont [14/16] 0.0, 128
      %586 = vxpose.xlu0.b32.cont [15/16] 0.0, 128
      %587 = vxpose.xlu0.b32.end [16/16] 0.0, 128
      %v588 = vpop.trf.xlu0
      %v589 = vpop.trf.xlu0
      %v590 = vpop.trf.xlu0
      %v591 = vpop.trf.xlu0
      %v592 = vpop.trf.xlu0
      %v593 = vpop.trf.xlu0
      %v594 = vpop.trf.xlu0
      %v595 = vpop.trf.xlu0
      %v596 = vpop.trf.xlu0
      %v597 = vpop.trf.xlu0
      %v598 = vpop.trf.xlu0
      %v599 = vpop.trf.xlu0
      %v600 = vpop.trf.xlu0
      %v601 = vpop.trf.xlu0
      %v602 = vpop.trf.xlu0
      %v603 = vpop.trf.xlu0
      %v604 = vpack.c.bf16 %v588, %v588
      %v605 = vpack.c.bf16 %v589, %v589
      %p606 = scmp.gt.s32.totalorder %s25, 0
      %s607 = scalar_select %p606, 1, 0
      %s608 = scvt.s32.f32 %s607
      %p609 = scmp.lt.s32.totalorder %s25, 1
      %s610 = scalar_select %p609, 1, 0
      %s611 = scvt.s32.f32 %s610
      %v612 = vunpack.c.l.bf16 %v565
      %v613 = vunpack.c.l.bf16 %v566
      %v614 = vstv %s608
      %v615 = vmul.f32 %v612, %v614
      %v616 = vmul.f32 %v613, %v614
      %v617 = vpack.c.bf16 %v615, %v615
      %v618 = vpack.c.bf16 %v616, %v616
      %v619 = vunpack.c.l.bf16 %v604
      %v620 = vunpack.c.l.bf16 %v605
      %v621 = vstv %s611
      %v622 = vmul.f32 %v619, %v621
      %v623 = vmul.f32 %v620, %v621
      %v624 = vpack.c.bf16 %v622, %v622
      %v625 = vpack.c.bf16 %v623, %v623
      %v646 = vunpack.c.l.b16 %v617
      %v647 = vunpack.c.l.b16 %v618
      %v648 = vunpack.c.l.b16 %v512
      %v649 = vunpack.c.l.b16 %v513
      %v650 = vunpack.c.l.b16 %v514
      %v651 = vunpack.c.l.b16 %v515
      %v652 = vunpack.c.l.b16 %v516
      %v653 = vunpack.c.l.b16 %v517
      %v654 = vunpack.c.l.b16 %v518
      %v655 = vunpack.c.l.b16 %v519
      %v656 = vunpack.c.l.b16 %v520
      %v657 = vunpack.c.l.b16 %v521
      %v658 = vunpack.c.l.b16 %v522
      %v659 = vunpack.c.l.b16 %v523
      %v660 = vunpack.c.l.b16 %v524
      %v661 = vunpack.c.l.b16 %v525
      %v662 = vunpack.c.l.b16 %v526
      %v663 = vunpack.c.l.b16 %v527
      %v664 = vunpack.c.l.b16 %v624
      %v665 = vunpack.c.l.b16 %v625
      %v666 = vpack.c.b16 %v647, %v646
      %v667 = vpack.c.b16 %v649, %v648
      %v668 = vpack.c.b16 %v651, %v650
      %v669 = vpack.c.b16 %v653, %v652
      %v670 = vpack.c.b16 %v655, %v654
      %v671 = vpack.c.b16 %v657, %v656
      %v672 = vpack.c.b16 %v659, %v658
      %v673 = vpack.c.b16 %v661, %v660
      %v674 = vpack.c.b16 %v663, %v662
      %v675 = vpack.c.b16 %v665, %v664
      %v677 = vshrl.u32 %v666, 16
      %v679 = vrot.slane %v677, 7
      %v680 = vshll.u32 %v666, 16
      %v682 = vor.u32 %v679, %v680
      %v684 = vshrl.u32 %v667, 16
      %v686 = vrot.slane %v684, 7
      %v687 = vshll.u32 %v667, 16
      %v689 = vor.u32 %v686, %v687
      %v691 = vshrl.u32 %v668, 16
      %v693 = vrot.slane %v691, 7
      %v694 = vshll.u32 %v668, 16
      %v696 = vor.u32 %v693, %v694
      %v698 = vshrl.u32 %v669, 16
      %v700 = vrot.slane %v698, 7
      %v701 = vshll.u32 %v669, 16
      %v703 = vor.u32 %v700, %v701
      %v705 = vshrl.u32 %v670, 16
      %v707 = vrot.slane %v705, 7
      %v708 = vshll.u32 %v670, 16
      %v710 = vor.u32 %v707, %v708
      %v712 = vshrl.u32 %v671, 16
      %v714 = vrot.slane %v712, 7
      %v715 = vshll.u32 %v671, 16
      %v717 = vor.u32 %v714, %v715
      %v719 = vshrl.u32 %v672, 16
      %v721 = vrot.slane %v719, 7
      %v722 = vshll.u32 %v672, 16
      %v724 = vor.u32 %v721, %v722
      %v726 = vshrl.u32 %v673, 16
      %v728 = vrot.slane %v726, 7
      %v729 = vshll.u32 %v673, 16
      %v731 = vor.u32 %v728, %v729
      %v733 = vshrl.u32 %v674, 16
      %v735 = vrot.slane %v733, 7
      %v736 = vshll.u32 %v674, 16
      %v738 = vor.u32 %v735, %v736
      %v740 = vshrl.u32 %v675, 16
      %v742 = vrot.slane %v740, 7
      %v743 = vshll.u32 %v675, 16
      %v745 = vor.u32 %v742, %v743
      %vm766 = vcmask 1040384
      %vm767 = vsmask.f32 256
      %vm768 = vmand %vm766, %vm767
      %v769 = vsel %vm768, 0, %v682
      %v770 = vsel %vm768, 0, %v689
      %v771 = vsel %vm768, 0, %v696
      %v772 = vsel %vm768, 0, %v703
      %v773 = vsel %vm768, 0, %v710
      %v774 = vsel %vm768, 0, %v717
      %v775 = vsel %vm768, 0, %v724
      %v776 = vsel %vm768, 0, %v731
      %v777 = vsel %vm768, 0, %v738
      %v778 = vsel %vm768, 0, %v745
      %v779 = vsel %vm768, %v679, 0
      %v780 = vsel %vm768, %v686, 0
      %v781 = vsel %vm768, %v693, 0
      %v782 = vsel %vm768, %v700, 0
      %v783 = vsel %vm768, %v707, 0
      %v784 = vsel %vm768, %v714, 0
      %v785 = vsel %vm768, %v721, 0
      %v786 = vsel %vm768, %v728, 0
      %v787 = vsel %vm768, %v735, 0
      %v788 = vsel %vm768, %v742, 0
      %vm789 = vsmask.f32 7424
      %v791 = vshrl.u32 %v769, 16
      %v793 = vshll.u32 %v769, 16
      %v795 = vrot.slane %v793, 1
      %v796 = vor.u32 %v791, %v795
      %v798 = vshll.u32 %v779, 16
      %v800 = vrot.slane %v798, 1
      %v801 = vsel %vm789, %v796, %v800
      %v803 = vshrl.u32 %v770, 16
      %v805 = vshll.u32 %v770, 16
      %v807 = vrot.slane %v805, 1
      %v808 = vor.u32 %v803, %v807
      %v810 = vshll.u32 %v780, 16
      %v812 = vrot.slane %v810, 1
      %v813 = vsel %vm789, %v808, %v812
      %v815 = vshrl.u32 %v771, 16
      %v817 = vshll.u32 %v771, 16
      %v819 = vrot.slane %v817, 1
      %v820 = vor.u32 %v815, %v819
      %v822 = vshll.u32 %v781, 16
      %v824 = vrot.slane %v822, 1
      %v825 = vsel %vm789, %v820, %v824
      %v827 = vshrl.u32 %v772, 16
      %v829 = vshll.u32 %v772, 16
      %v831 = vrot.slane %v829, 1
      %v832 = vor.u32 %v827, %v831
      %v834 = vshll.u32 %v782, 16
      %v836 = vrot.slane %v834, 1
      %v837 = vsel %vm789, %v832, %v836
      %v839 = vshrl.u32 %v773, 16
      %v841 = vshll.u32 %v773, 16
      %v843 = vrot.slane %v841, 1
      %v844 = vor.u32 %v839, %v843
      %v846 = vshll.u32 %v783, 16
      %v848 = vrot.slane %v846, 1
      %v849 = vsel %vm789, %v844, %v848
      %v851 = vshrl.u32 %v774, 16
      %v853 = vshll.u32 %v774, 16
      %v855 = vrot.slane %v853, 1
      %v856 = vor.u32 %v851, %v855
      %v858 = vshll.u32 %v784, 16
      %v860 = vrot.slane %v858, 1
      %v861 = vsel %vm789, %v856, %v860
      %v863 = vshrl.u32 %v775, 16
      %v865 = vshll.u32 %v775, 16
      %v867 = vrot.slane %v865, 1
      %v868 = vor.u32 %v863, %v867
      %v870 = vshll.u32 %v785, 16
      %v872 = vrot.slane %v870, 1
      %v873 = vsel %vm789, %v868, %v872
      %v875 = vshrl.u32 %v776, 16
      %v877 = vshll.u32 %v776, 16
      %v879 = vrot.slane %v877, 1
      %v880 = vor.u32 %v875, %v879
      %v882 = vshll.u32 %v786, 16
      %v884 = vrot.slane %v882, 1
      %v885 = vsel %vm789, %v880, %v884
      %vm902 = vcmask 1046528
      %v903 = vrot.slane %v769, 1
      %v904 = vrot.slane %v779, 1
      %v905 = vsel %vm902, %v903, %v904
      %v906 = vrot.slane %v770, 1
      %v907 = vrot.slane %v780, 1
      %v908 = vsel %vm902, %v906, %v907
      %v909 = vrot.slane %v771, 1
      %v910 = vrot.slane %v781, 1
      %v911 = vsel %vm902, %v909, %v910
      %v912 = vrot.slane %v772, 1
      %v913 = vrot.slane %v782, 1
      %v914 = vsel %vm902, %v912, %v913
      %v915 = vrot.slane %v773, 1
      %v916 = vrot.slane %v783, 1
      %v917 = vsel %vm902, %v915, %v916
      %v918 = vrot.slane %v774, 1
      %v919 = vrot.slane %v784, 1
      %v920 = vsel %vm902, %v918, %v919
      %v921 = vrot.slane %v775, 1
      %v922 = vrot.slane %v785, 1
      %v923 = vsel %vm902, %v921, %v922
      %v924 = vrot.slane %v776, 1
      %v925 = vrot.slane %v786, 1
      %v926 = vsel %vm902, %v924, %v925
      %v928 = vshrl.u32 %v777, 16
      %v930 = vshll.u32 %v777, 16
      %v932 = vrot.slane %v930, 1
      %v933 = vor.u32 %v928, %v932
      %v935 = vshll.u32 %v787, 16
      %v937 = vrot.slane %v935, 1
      %v938 = vsel %vm789, %v933, %v937
      %v941 = vrot.slane %v777, 1
      %v942 = vrot.slane %v787, 1
      %v943 = vsel %vm902, %v941, %v942
      %v945 = vshrl.u32 %v778, 16
      %v947 = vshll.u32 %v778, 16
      %v949 = vrot.slane %v947, 1
      %v950 = vor.u32 %v945, %v949
      %v952 = vshll.u32 %v788, 16
      %v954 = vrot.slane %v952, 1
      %v955 = vsel %vm789, %v950, %v954
      %v958 = vrot.slane %v778, 1
      %v959 = vrot.slane %v788, 1
      %v960 = vsel %vm902, %v958, %v959
      %961 = vrot.lane.b32.xlu0 %v801, 8
      %v962 = vpop.permute.xlu0 %961
      %963 = vrot.lane.b32.xlu0 %v813, 8
      %v964 = vpop.permute.xlu0 %963
      %965 = vrot.lane.b32.xlu0 %v825, 8
      %v966 = vpop.permute.xlu0 %965
      %967 = vrot.lane.b32.xlu0 %v837, 8
      %v968 = vpop.permute.xlu0 %967
      %969 = vrot.lane.b32.xlu0 %v849, 8
      %v970 = vpop.permute.xlu0 %969
      %971 = vrot.lane.b32.xlu0 %v861, 8
      %v972 = vpop.permute.xlu0 %971
      %973 = vrot.lane.b32.xlu0 %v873, 8
      %v974 = vpop.permute.xlu0 %973
      %975 = vrot.lane.b32.xlu0 %v885, 8
      %v976 = vpop.permute.xlu0 %975
      %977 = vrot.lane.b32.xlu0 %v905, 16
      %v978 = vpop.permute.xlu0 %977
      %979 = vrot.lane.b32.xlu0 %v908, 16
      %v980 = vpop.permute.xlu0 %979
      %981 = vrot.lane.b32.xlu0 %v911, 16
      %v982 = vpop.permute.xlu0 %981
      %983 = vrot.lane.b32.xlu0 %v914, 16
      %v984 = vpop.permute.xlu0 %983
      %985 = vrot.lane.b32.xlu0 %v917, 16
      %v986 = vpop.permute.xlu0 %985
      %987 = vrot.lane.b32.xlu0 %v920, 16
      %v988 = vpop.permute.xlu0 %987
      %989 = vrot.lane.b32.xlu0 %v923, 16
      %v990 = vpop.permute.xlu0 %989
      %991 = vrot.lane.b32.xlu0 %v926, 16
      %v992 = vpop.permute.xlu0 %991
      %993 = vrot.lane.b32.xlu0 %v770, 24
      %v994 = vpop.permute.xlu0 %993
      %995 = vrot.lane.b32.xlu0 %v771, 24
      %v996 = vpop.permute.xlu0 %995
      %997 = vrot.lane.b32.xlu0 %v772, 24
      %v998 = vpop.permute.xlu0 %997
      %999 = vrot.lane.b32.xlu0 %v773, 24
      %v1000 = vpop.permute.xlu0 %999
      %1001 = vrot.lane.b32.xlu0 %v774, 24
      %v1002 = vpop.permute.xlu0 %1001
      %1003 = vrot.lane.b32.xlu0 %v775, 24
      %v1004 = vpop.permute.xlu0 %1003
      %1005 = vrot.lane.b32.xlu0 %v776, 24
      %v1006 = vpop.permute.xlu0 %1005
      %1007 = vrot.lane.b32.xlu0 %v777, 24
      %v1008 = vpop.permute.xlu0 %1007
      %1009 = vrot.lane.b32.xlu0 %v813, 32
      %v1010 = vpop.permute.xlu0 %1009
      %1011 = vrot.lane.b32.xlu0 %v825, 32
      %v1012 = vpop.permute.xlu0 %1011
      %1013 = vrot.lane.b32.xlu0 %v837, 32
      %v1014 = vpop.permute.xlu0 %1013
      %1015 = vrot.lane.b32.xlu0 %v849, 32
      %v1016 = vpop.permute.xlu0 %1015
      %1017 = vrot.lane.b32.xlu0 %v861, 32
      %v1018 = vpop.permute.xlu0 %1017
      %1019 = vrot.lane.b32.xlu0 %v873, 32
      %v1020 = vpop.permute.xlu0 %1019
      %1021 = vrot.lane.b32.xlu0 %v885, 32
      %v1022 = vpop.permute.xlu0 %1021
      %1023 = vrot.lane.b32.xlu0 %v938, 32
      %v1024 = vpop.permute.xlu0 %1023
      %1025 = vrot.lane.b32.xlu0 %v908, 40
      %v1026 = vpop.permute.xlu0 %1025
      %1027 = vrot.lane.b32.xlu0 %v911, 40
      %v1028 = vpop.permute.xlu0 %1027
      %1029 = vrot.lane.b32.xlu0 %v914, 40
      %v1030 = vpop.permute.xlu0 %1029
      %1031 = vrot.lane.b32.xlu0 %v917, 40
      %v1032 = vpop.permute.xlu0 %1031
      %1033 = vrot.lane.b32.xlu0 %v920, 40
      %v1034 = vpop.permute.xlu0 %1033
      %1035 = vrot.lane.b32.xlu0 %v923, 40
      %v1036 = vpop.permute.xlu0 %1035
      %1037 = vrot.lane.b32.xlu0 %v926, 40
      %v1038 = vpop.permute.xlu0 %1037
      %1039 = vrot.lane.b32.xlu0 %v943, 40
      %v1040 = vpop.permute.xlu0 %1039
      %1041 = vrot.lane.b32.xlu0 %v771, 48
      %v1042 = vpop.permute.xlu0 %1041
      %1043 = vrot.lane.b32.xlu0 %v772, 48
      %v1044 = vpop.permute.xlu0 %1043
      %1045 = vrot.lane.b32.xlu0 %v773, 48
      %v1046 = vpop.permute.xlu0 %1045
      %1047 = vrot.lane.b32.xlu0 %v774, 48
      %v1048 = vpop.permute.xlu0 %1047
      %1049 = vrot.lane.b32.xlu0 %v775, 48
      %v1050 = vpop.permute.xlu0 %1049
      %1051 = vrot.lane.b32.xlu0 %v776, 48
      %v1052 = vpop.permute.xlu0 %1051
      %1053 = vrot.lane.b32.xlu0 %v777, 48
      %v1054 = vpop.permute.xlu0 %1053
      %1055 = vrot.lane.b32.xlu0 %v778, 48
      %v1056 = vpop.permute.xlu0 %1055
      %1057 = vrot.lane.b32.xlu0 %v825, 56
      %v1058 = vpop.permute.xlu0 %1057
      %1059 = vrot.lane.b32.xlu0 %v837, 56
      %v1060 = vpop.permute.xlu0 %1059
      %1061 = vrot.lane.b32.xlu0 %v849, 56
      %v1062 = vpop.permute.xlu0 %1061
      %1063 = vrot.lane.b32.xlu0 %v861, 56
      %v1064 = vpop.permute.xlu0 %1063
      %1065 = vrot.lane.b32.xlu0 %v873, 56
      %v1066 = vpop.permute.xlu0 %1065
      %1067 = vrot.lane.b32.xlu0 %v885, 56
      %v1068 = vpop.permute.xlu0 %1067
      %1069 = vrot.lane.b32.xlu0 %v938, 56
      %v1070 = vpop.permute.xlu0 %1069
      %1071 = vrot.lane.b32.xlu0 %v955, 56
      %v1072 = vpop.permute.xlu0 %1071
      %1073 = vrot.lane.b32.xlu0 %v911, 64
      %v1074 = vpop.permute.xlu0 %1073
      %1075 = vrot.lane.b32.xlu0 %v914, 64
      %v1076 = vpop.permute.xlu0 %1075
      %1077 = vrot.lane.b32.xlu0 %v917, 64
      %v1078 = vpop.permute.xlu0 %1077
      %1079 = vrot.lane.b32.xlu0 %v920, 64
      %v1080 = vpop.permute.xlu0 %1079
      %1081 = vrot.lane.b32.xlu0 %v923, 64
      %v1082 = vpop.permute.xlu0 %1081
      %1083 = vrot.lane.b32.xlu0 %v926, 64
      %v1084 = vpop.permute.xlu0 %1083
      %1085 = vrot.lane.b32.xlu0 %v943, 64
      %v1086 = vpop.permute.xlu0 %1085
      %1087 = vrot.lane.b32.xlu0 %v960, 64
      %v1088 = vpop.permute.xlu0 %1087
      %vm1089 = vcmask 64512
      %v1091 = vsel %vm1089, %v769, %v962
      %v1093 = vsel %vm1089, %v770, %v964
      %v1095 = vsel %vm1089, %v771, %v966
      %v1097 = vsel %vm1089, %v772, %v968
      %v1099 = vsel %vm1089, %v773, %v970
      %v1101 = vsel %vm1089, %v774, %v972
      %v1103 = vsel %vm1089, %v775, %v974
      %v1105 = vsel %vm1089, %v776, %v976
      %vm1106 = vcmask 130048
      %v1108 = vsel %vm1106, %v1091, %v978
      %v1110 = vsel %vm1106, %v1093, %v980
      %v1112 = vsel %vm1106, %v1095, %v982
      %v1114 = vsel %vm1106, %v1097, %v984
      %v1116 = vsel %vm1106, %v1099, %v986
      %v1118 = vsel %vm1106, %v1101, %v988
      %v1120 = vsel %vm1106, %v1103, %v990
      %v1122 = vsel %vm1106, %v1105, %v992
      %vm1123 = vcmask 195584
      %v1125 = vsel %vm1123, %v1108, %v994
      %v1127 = vsel %vm1123, %v1110, %v996
      %v1129 = vsel %vm1123, %v1112, %v998
      %v1131 = vsel %vm1123, %v1114, %v1000
      %v1133 = vsel %vm1123, %v1116, %v1002
      %v1135 = vsel %vm1123, %v1118, %v1004
      %v1137 = vsel %vm1123, %v1120, %v1006
      %v1139 = vsel %vm1123, %v1122, %v1008
      %vm1140 = vcmask 261120
      %v1142 = vsel %vm1140, %v1125, %v1010
      %v1144 = vsel %vm1140, %v1127, %v1012
      %v1146 = vsel %vm1140, %v1129, %v1014
      %v1148 = vsel %vm1140, %v1131, %v1016
      %v1150 = vsel %vm1140, %v1133, %v1018
      %v1152 = vsel %vm1140, %v1135, %v1020
      %v1154 = vsel %vm1140, %v1137, %v1022
      %v1156 = vsel %vm1140, %v1139, %v1024
      %vm1157 = vcmask 326656
      %v1159 = vsel %vm1157, %v1142, %v1026
      %v1161 = vsel %vm1157, %v1144, %v1028
      %v1163 = vsel %vm1157, %v1146, %v1030
      %v1165 = vsel %vm1157, %v1148, %v1032
      %v1167 = vsel %vm1157, %v1150, %v1034
      %v1169 = vsel %vm1157, %v1152, %v1036
      %v1171 = vsel %vm1157, %v1154, %v1038
      %v1173 = vsel %vm1157, %v1156, %v1040
      %vm1174 = vcmask 392192
      %v1176 = vsel %vm1174, %v1159, %v1042
      %v1178 = vsel %vm1174, %v1161, %v1044
      %v1180 = vsel %vm1174, %v1163, %v1046
      %v1182 = vsel %vm1174, %v1165, %v1048
      %v1184 = vsel %vm1174, %v1167, %v1050
      %v1186 = vsel %vm1174, %v1169, %v1052
      %v1188 = vsel %vm1174, %v1171, %v1054
      %v1190 = vsel %vm1174, %v1173, %v1056
      %vm1191 = vcmask 457728
      %v1193 = vsel %vm1191, %v1176, %v1058
      %v1195 = vsel %vm1191, %v1178, %v1060
      %v1197 = vsel %vm1191, %v1180, %v1062
      %v1199 = vsel %vm1191, %v1182, %v1064
      %v1201 = vsel %vm1191, %v1184, %v1066
      %v1203 = vsel %vm1191, %v1186, %v1068
      %v1205 = vsel %vm1191, %v1188, %v1070
      %v1207 = vsel %vm1191, %v1190, %v1072
      %vm1208 = vcmask 523264
      %v1210 = vsel %vm1208, %v1193, %v1074
      %v1212 = vsel %vm1208, %v1195, %v1076
      %v1214 = vsel %vm1208, %v1197, %v1078
      %v1216 = vsel %vm1208, %v1199, %v1080
      %v1218 = vsel %vm1208, %v1201, %v1082
      %v1220 = vsel %vm1208, %v1203, %v1084
      %v1222 = vsel %vm1208, %v1205, %v1086
      %v1224 = vsel %vm1208, %v1207, %v1088
      %v1225 = vld [vmem:[%s5] sm:$0xf]
      %v1226 = vld [vmem:[%s5 + $0x4] sm:$0xf]
      %v1227 = vld [vmem:[%s5 + $0x8] sm:$0xf]
      %v1228 = vld [vmem:[%s5 + $0xc] sm:$0xf]
      %v1229 = vld [vmem:[%s5 + $0x10] sm:$0xf]
      %v1230 = vld [vmem:[%s5 + $0x14] sm:$0xf]
      %v1231 = vld [vmem:[%s5 + $0x18] sm:$0xf]
      %v1232 = vld [vmem:[%s5 + $0x1c] sm:$0xf]
      %v1233 = vld [vmem:[%s5 + $0x20] sm:$0xf]
      %v1234 = vld [vmem:[%s6] sm:$0x1]
      %v1236 = vperm.slane %v1234, 0
      %v1247 = vunpack.c.l.b16 %v1225
      %v1248 = vunpack.c.l.b16 %v1226
      %v1249 = vunpack.c.l.b16 %v1227
      %v1250 = vunpack.c.l.b16 %v1228
      %v1251 = vunpack.c.l.b16 %v1229
      %v1252 = vunpack.c.l.b16 %v1230
      %v1253 = vunpack.c.l.b16 %v1231
      %v1254 = vunpack.c.l.b16 %v1232
      %v1255 = vunpack.c.l.b16 %v1233
      %v1256 = vpack.c.b16 %v1248, %v1247
      %v1257 = vpack.c.b16 %v1250, %v1249
      %v1258 = vpack.c.b16 %v1252, %v1251
      %v1259 = vpack.c.b16 %v1254, %v1253
      %v1260 = vpack.c.b16 %v1255, %v1255
      %vm1265 = vcmask 588800
      %v1266 = vsel %vm1265, %v1210, 0
      %v1268 = vsel %vm1265, %v1212, 0
      %v1270 = vsel %vm1265, %v1214, 0
      %v1272 = vsel %vm1265, %v1216, 0
      %v1274 = vsel %vm1265, %v1218, 0
      %v1276 = vsel %vm1265, %v1220, 0
      %v1278 = vsel %vm1265, %v1222, 0
      %v1280 = vsel %vm1265, %v1224, 0
      %vm1282 = vcmask 1043456
      %v1284 = vsel %vm1282, %v1260, 0
      %1286 = vmatpush.bf16.msra.mxu0 0
      %1287 = vmatpush.bf16.msra.mxu0 0
      %1288 = vmatpush.bf16.msra.mxu0 0
      %1289 = vmatpush.bf16.msra.mxu0 %v1284
      %1290 = vmatpush.bf16.msra.mxu0 %v1259
      %1291 = vmatpush.bf16.msra.mxu0 %v1258
      %1292 = vmatpush.bf16.msra.mxu0 %v1257
      %1293 = vmatpush.bf16.msra.mxu0 %v1256
      %1294 = vmatmul.bf16.gmra.mxu0 %v1266
      %v1295 = vpop.f32.mrf.mxu0
      %v1296 = vadd.f32 %v1236, %v1295
      %v1297 = vpop.f32.mrf.mxu0
      %v1298 = vadd.f32 %v1236, %v1297
      %1299 = vmatmul.bf16.gmra.mxu0 %v1268
      %v1300 = vpop.f32.mrf.mxu0
      %v1301 = vadd.f32 %v1236, %v1300
      %v1302 = vpop.f32.mrf.mxu0
      %v1303 = vadd.f32 %v1236, %v1302
      %1304 = vmatmul.bf16.gmra.mxu0 %v1270
      %v1305 = vpop.f32.mrf.mxu0
      %v1306 = vadd.f32 %v1236, %v1305
      %v1307 = vpop.f32.mrf.mxu0
      %v1308 = vadd.f32 %v1236, %v1307
      %1309 = vmatmul.bf16.gmra.mxu0 %v1272
      %v1310 = vpop.f32.mrf.mxu0
      %v1311 = vadd.f32 %v1236, %v1310
      %v1312 = vpop.f32.mrf.mxu0
      %v1313 = vadd.f32 %v1236, %v1312
      %1314 = vmatmul.bf16.gmra.mxu0 %v1274
      %v1315 = vpop.f32.mrf.mxu0
      %v1316 = vadd.f32 %v1236, %v1315
      %v1317 = vpop.f32.mrf.mxu0
      %v1318 = vadd.f32 %v1236, %v1317
      %1319 = vmatmul.bf16.gmra.mxu0 %v1276
      %v1320 = vpop.f32.mrf.mxu0
      %v1321 = vadd.f32 %v1236, %v1320
      %v1322 = vpop.f32.mrf.mxu0
      %v1323 = vadd.f32 %v1236, %v1322
      %1324 = vmatmul.bf16.gmra.mxu0 %v1278
      %v1325 = vpop.f32.mrf.mxu0
      %v1326 = vadd.f32 %v1236, %v1325
      %v1327 = vpop.f32.mrf.mxu0
      %v1328 = vadd.f32 %v1236, %v1327
      %1329 = vmatmul.bf16.gmra.mxu0 %v1280
      %v1330 = vpop.f32.mrf.mxu0
      %v1331 = vadd.f32 %v1236, %v1330
      %v1332 = vpop.f32.mrf.mxu0
      %v1333 = vadd.f32 %v1236, %v1332
      %1334 = vdwg.mxu0
      %1335 = vxpose.xlu0.b32.start [1/16] %v1296, 128
      %1336 = vxpose.xlu0.b32.cont [2/16] %v1298, 128
      %1337 = vxpose.xlu0.b32.cont [3/16] %v1301, 128
      %1338 = vxpose.xlu0.b32.cont [4/16] %v1303, 128
      %1339 = vxpose.xlu0.b32.cont [5/16] %v1306, 128
      %1340 = vxpose.xlu0.b32.cont [6/16] %v1308, 128
      %1341 = vxpose.xlu0.b32.cont [7/16] %v1311, 128
      %1342 = vxpose.xlu0.b32.cont [8/16] %v1313, 128
      %1343 = vxpose.xlu0.b32.cont [9/16] %v1316, 128
      %1344 = vxpose.xlu0.b32.cont [10/16] %v1318, 128
      %1345 = vxpose.xlu0.b32.cont [11/16] %v1321, 128
      %1346 = vxpose.xlu0.b32.cont [12/16] %v1323, 128
      %1347 = vxpose.xlu0.b32.cont [13/16] %v1326, 128
      %1348 = vxpose.xlu0.b32.cont [14/16] %v1328, 128
      %1349 = vxpose.xlu0.b32.cont [15/16] %v1331, 128
      %1350 = vxpose.xlu0.b32.end [16/16] %v1333, 128
      %v1351 = vpop.trf.xlu0
      %v1352 = vpop.trf.xlu0
      %v1353 = vpop.trf.xlu0
      %v1354 = vpop.trf.xlu0
      %v1355 = vpop.trf.xlu0
      %v1356 = vpop.trf.xlu0
      %v1357 = vpop.trf.xlu0
      %v1358 = vpop.trf.xlu0
      %v1359 = vpop.trf.xlu0
      %v1360 = vpop.trf.xlu0
      %v1361 = vpop.trf.xlu0
      %v1362 = vpop.trf.xlu0
      %v1363 = vpop.trf.xlu0
      %v1364 = vpop.trf.xlu0
      %v1365 = vpop.trf.xlu0
      %v1366 = vpop.trf.xlu0
      %v1367 = vpack.c.bf16 %v1351, %v1351
      %1368 = vst [vmem:[%s453] sm:$0xf] %v1367
      %v1369 = vpack.c.bf16 %v1296, %v1296
      %v1370 = vpack.c.bf16 %v1298, %v1298
      %v1371 = vpack.c.bf16 %v1301, %v1301
      %v1372 = vpack.c.bf16 %v1303, %v1303
      %v1373 = vpack.c.bf16 %v1306, %v1306
      %v1374 = vpack.c.bf16 %v1308, %v1308
      %v1375 = vpack.c.bf16 %v1311, %v1311
      %v1376 = vpack.c.bf16 %v1313, %v1313
      %v1377 = vpack.c.bf16 %v1316, %v1316
      %v1378 = vpack.c.bf16 %v1318, %v1318
      %v1379 = vpack.c.bf16 %v1321, %v1321
      %v1380 = vpack.c.bf16 %v1323, %v1323
      %v1381 = vpack.c.bf16 %v1326, %v1326
      %v1382 = vpack.c.bf16 %v1328, %v1328
      %v1383 = vpack.c.bf16 %v1331, %v1331
      %v1384 = vpack.c.bf16 %v1333, %v1333
      %v1385 = vunpack.c.l.bf16 %v1369
      %v1386 = vunpack.c.l.bf16 %v1370
      %v1387 = vunpack.c.l.bf16 %v1371
      %v1388 = vunpack.c.l.bf16 %v1372
      %v1389 = vunpack.c.l.bf16 %v1373
      %v1390 = vunpack.c.l.bf16 %v1374
      %v1391 = vunpack.c.l.bf16 %v1375
      %v1392 = vunpack.c.l.bf16 %v1376
      %v1393 = vunpack.c.l.bf16 %v1377
      %v1394 = vunpack.c.l.bf16 %v1378
      %v1395 = vunpack.c.l.bf16 %v1379
      %v1396 = vunpack.c.l.bf16 %v1380
      %v1397 = vunpack.c.l.bf16 %v1381
      %v1398 = vunpack.c.l.bf16 %v1382
      %v1399 = vunpack.c.l.bf16 %v1383
      %v1400 = vunpack.c.l.bf16 %v1384
      %v1401 = vsel %vm1089, %v1385, 0.0
      %v1402 = vsel %vm1089, %v1386, 0.0
      %v1403 = vadd.f32 %v1401, %v1402
      %v1404 = vsel %vm1089, %v1387, 0.0
      %v1405 = vadd.f32 %v1403, %v1404
      %v1406 = vsel %vm1089, %v1388, 0.0
      %v1407 = vadd.f32 %v1405, %v1406
      %v1408 = vsel %vm1089, %v1389, 0.0
      %v1409 = vadd.f32 %v1407, %v1408
      %v1410 = vsel %vm1089, %v1390, 0.0
      %v1411 = vadd.f32 %v1409, %v1410
      %v1412 = vsel %vm1089, %v1391, 0.0
      %v1413 = vadd.f32 %v1411, %v1412
      %v1414 = vsel %vm1089, %v1392, 0.0
      %v1415 = vadd.f32 %v1413, %v1414
      %v1416 = vsel %vm1089, %v1393, 0.0
      %v1417 = vadd.f32 %v1415, %v1416
      %v1418 = vsel %vm1089, %v1394, 0.0
      %v1419 = vadd.f32 %v1417, %v1418
      %v1420 = vsel %vm1089, %v1395, 0.0
      %v1421 = vadd.f32 %v1419, %v1420
      %v1422 = vsel %vm1089, %v1396, 0.0
      %v1423 = vadd.f32 %v1421, %v1422
      %v1424 = vsel %vm1089, %v1397, 0.0
      %v1425 = vadd.f32 %v1423, %v1424
      %v1426 = vsel %vm1089, %v1398, 0.0
      %v1427 = vadd.f32 %v1425, %v1426
      %v1428 = vsel %vm1089, %v1399, 0.0
      %v1429 = vadd.f32 %v1427, %v1428
      %v1430 = vsel %vm1089, %v1400, 0.0
      %v1431 = vadd.f32 %v1429, %v1430
      %v1432 = vrot.slane %v1431, 4
      %v1433 = vadd.f32 %v1431, %v1432
      %v1434 = vrot.slane %v1433, 2
      %v1435 = vadd.f32 %v1433, %v1434
      %v1436 = vrot.slane %v1435, 1
      %v1437 = vadd.f32 %v1435, %v1436
      %v1438 = vmul.f32 %v1385, %v1385
      %v1439 = vmul.f32 %v1386, %v1386
      %v1440 = vmul.f32 %v1387, %v1387
      %v1441 = vmul.f32 %v1388, %v1388
      %v1442 = vmul.f32 %v1389, %v1389
      %v1443 = vmul.f32 %v1390, %v1390
      %v1444 = vmul.f32 %v1391, %v1391
      %v1445 = vmul.f32 %v1392, %v1392
      %v1446 = vmul.f32 %v1393, %v1393
      %v1447 = vmul.f32 %v1394, %v1394
      %v1448 = vmul.f32 %v1395, %v1395
      %v1449 = vmul.f32 %v1396, %v1396
      %v1450 = vmul.f32 %v1397, %v1397
      %v1451 = vmul.f32 %v1398, %v1398
      %v1452 = vmul.f32 %v1399, %v1399
      %v1453 = vmul.f32 %v1400, %v1400
      %v1454 = vsel %vm1089, %v1438, 0.0
      %v1455 = vsel %vm1089, %v1439, 0.0
      %v1456 = vadd.f32 %v1454, %v1455
      %v1457 = vsel %vm1089, %v1440, 0.0
      %v1458 = vadd.f32 %v1456, %v1457
      %v1459 = vsel %vm1089, %v1441, 0.0
      %v1460 = vadd.f32 %v1458, %v1459
      %v1461 = vsel %vm1089, %v1442, 0.0
      %v1462 = vadd.f32 %v1460, %v1461
      %v1463 = vsel %vm1089, %v1443, 0.0
      %v1464 = vadd.f32 %v1462, %v1463
      %v1465 = vsel %vm1089, %v1444, 0.0
      %v1466 = vadd.f32 %v1464, %v1465
      %v1467 = vsel %vm1089, %v1445, 0.0
      %v1468 = vadd.f32 %v1466, %v1467
      %v1469 = vsel %vm1089, %v1446, 0.0
      %v1470 = vadd.f32 %v1468, %v1469
      %v1471 = vsel %vm1089, %v1447, 0.0
      %v1472 = vadd.f32 %v1470, %v1471
      %v1473 = vsel %vm1089, %v1448, 0.0
      %v1474 = vadd.f32 %v1472, %v1473
      %v1475 = vsel %vm1089, %v1449, 0.0
      %v1476 = vadd.f32 %v1474, %v1475
      %v1477 = vsel %vm1089, %v1450, 0.0
      %v1478 = vadd.f32 %v1476, %v1477
      %v1479 = vsel %vm1089, %v1451, 0.0
      %v1480 = vadd.f32 %v1478, %v1479
      %v1481 = vsel %vm1089, %v1452, 0.0
      %v1482 = vadd.f32 %v1480, %v1481
      %v1483 = vsel %vm1089, %v1453, 0.0
      %v1484 = vadd.f32 %v1482, %v1483
      %v1485 = vrot.slane %v1484, 4
      %v1486 = vadd.f32 %v1484, %v1485
      %v1487 = vrot.slane %v1486, 2
      %v1488 = vadd.f32 %v1486, %v1487
      %v1489 = vrot.slane %v1488, 1
      %v1490 = vadd.f32 %v1488, %v1489
      %vm1491 = vcmask 1040384
      %v1492 = vsel %vm1491, %v1437, %v1490
      %vm1493 = vcmask 58368
      %1494 = vst.msk [vmem:[%s461] sm:$0x3] %vm1493, %v1492
      %p1495 = scmp.lt.s32.totalorder %s24, 1
      %s1496 = scalar_select %p1495, %s24, 1
      %p1497 = scmp.lt.s32.totalorder %s25, 1
      %s1498 = scalar_select %p1497, %s25, 1
      %s1499 = smul.addr %s1496, 2
      %s1500 = sadd.s32 %s1498, %s1499
      %s1501 = smul.addr %s1500, 4
      %s1502 = scalar_lea.vmem %s7, %s1501
      %p1503 = scmp.lt.s32.totalorder %s24, 1
      %s1504 = scalar_select %p1503, %s24, 1
      %p1505 = scmp.lt.s32.totalorder %s25, 1
      %s1506 = scalar_select %p1505, %s25, 1
      %s1507 = smul.addr %s1504, 2
      %s1508 = sadd.s32 %s1506, %s1507
      %s1509 = smul.addr %s1508, 2
      %s1510 = scalar_lea.vmem %s8, %s1509
      // Predicated region
      $region49: #{unet_down_conv.4} parent=47 // pred_check
        %p1511 = pneg %p232
      $region50: #{unet_down_conv.4} parent=47 // pred_check_branch
        %1513 = sbr.rel (%p1511) target = $region52
      $region51: #{unet_down_conv.4} parent=47 // pred_region
        _
      $region52: #{unet_down_conv.4} parent=47 // pred_fallthru
        _
      // Predicated region
      $region53: #{unet_down_conv.4} parent=47 // pred_check
        %p1514 = pneg %p260
      $region54: #{unet_down_conv.4} parent=47 // pred_check_branch
        %1516 = sbr.rel (%p1514) target = $region56
      $region55: #{unet_down_conv.4} parent=47 // pred_region
        _
      $region56: #{unet_down_conv.4} parent=47 // pred_fallthru
        _
    $region48: #{unet_down_conv.4} parent=5 // pred_fallthru
      _
    %p1517 = scmp.le.s32.totalorder 2, %s15
    // Predicated region
    $region57: #{unet_down_conv.4} parent=5 // pred_check
      %p1518 = pneg %p1517
    $region58: #{unet_down_conv.4} parent=5 // pred_check_branch
      %1520 = sbr.rel (%p1518) target = $region60
    $region59: #{unet_down_conv.4} parent=5 // pred_region
      %s1521 = ssub.s32 %s15, 2
      // Predicated region
      $region61: #{unet_down_conv.4} parent=59 // pred_check
        %p1522 = pneg %p238
      $region62: #{unet_down_conv.4} parent=59 // pred_check_branch
        %1524 = sbr.rel (%p1522) target = $region64
      $region63: #{unet_down_conv.4} parent=59 // pred_region
        %p1525 = scmp.lt.s32.totalorder %s26, 1
        %s1526 = scalar_select %p1525, %s26, 1
        %p1527 = scmp.lt.s32.totalorder %s27, 1
        %s1528 = scalar_select %p1527, %s27, 1
        %s1529 = smul.addr %s1526, 2
        %s1530 = sadd.s32 %s1528, %s1529
        %s1531 = smul.addr %s1530, 4
        %s1532 = scalar_lea.vmem %s7, %s1531
      $region64: #{unet_down_conv.4} parent=59 // pred_fallthru
        _
      // Predicated region
      $region65: #{unet_down_conv.4} parent=59 // pred_check
        %p1533 = pneg %p266
      $region66: #{unet_down_conv.4} parent=59 // pred_check_branch
        %1535 = sbr.rel (%p1533) target = $region68
      $region67: #{unet_down_conv.4} parent=59 // pred_region
        %p1536 = scmp.lt.s32.totalorder %s26, 1
        %s1537 = scalar_select %p1536, %s26, 1
        %p1538 = scmp.lt.s32.totalorder %s27, 1
        %s1539 = scalar_select %p1538, %s27, 1
        %s1540 = smul.addr %s1537, 2
        %s1541 = sadd.s32 %s1539, %s1540
        %s1542 = smul.addr %s1541, 2
        %s1543 = scalar_lea.vmem %s8, %s1542
      $region68: #{unet_down_conv.4} parent=59 // pred_fallthru
        _
    $region60: #{unet_down_conv.4} parent=5 // pred_fallthru
      _
  $region6: #{unet_down_conv.4} parent=0 // loop_footer
    %s19 = sadd.s32 1, %s15
  $region7: #{unet_down_conv.4} parent=0 // loop_footer_branch
    %14 = sbr.rel target = $region3
  $region8: #{unet_down_conv.4} parent=0 // loop_exit
    _

// kernel: unet_down_conv.3
$region0: #{unet_down_conv.3}
  #allocation0 [shape = 'u32[]', space=smem, size = 0x4, offset = 0x4, fixed_abs, tag = 'smem constant byte address 0x4 - core index']
  #allocation1 [shape = 'u32[72,128]{1,0:T(1,128)}', space=vmem, size = 0x9000, scoped, tag = 'internal scratch']
  %s0 = inlined_call_operand.vmem [shape: f32[2,4,256], index: 0, kind: input, shape index: {}, may-alias: {0,1,2}]
  %s1 = inlined_call_operand.vmem [shape: f32[2,4,256], index: 1, kind: input, shape index: {}, may-alias: {0,1,2}]
  %s2 = inlined_call_operand.vmem [shape: f32[2,4,256], index: 2, kind: input, shape index: {}, may-alias: {0,1,2}]
  %s3 = inlined_call_operand.vmem [shape: bf16[36,8], index: 3, kind: input, shape index: {}]
  %s4 = inlined_call_operand.vmem [shape: f32[1,8], index: 4, kind: input, shape index: {}]
  %s5 = inlined_call_operand.vmem [shape: bf16[2,8,256], index: 5, kind: output, shape index: {0}]
  %s6 = inlined_call_operand.vmem [shape: f32[2,2,2,8], index: 6, kind: output, shape index: {1}]
  %7 = xla_tuple %s5, %s6
  %s8 = sld [smem:[#allocation0]]
  $region61: #{unet_down_conv.3} parent=0
    _
  %s10 = ssub.s32 1, %s8
  %s11 = scalar_select 0, %s10, %s8
  loop: start=0, step=1, limit=6
  $region2: #{unet_down_conv.3} parent=0 // loop_pre_header
    _
  $region3: #{unet_down_conv.3} parent=0 // loop_header
    %s13 = sphi 0, %s17
    %p14 = scmp.ge.s32.totalorder %s13, 6
    %s20 = sphi 0, %s32
    %s21 = sphi 0, %s28
    %s22 = sphi 0, %s20
    %s23 = sphi 0, %s21
    %s24 = sphi 0, %s22
    %s25 = sphi 0, %s23
    %s37 = sphi 0, %s39
    %s40 = sphi 0, %s37
    %s41 = sphi 0, %s40
    %s57 = sphi 0, %s41
    %s71 = sphi 0, %s73
    %s74 = sphi 0, %s71
    %s75 = sphi 0, %s74
    %s91 = sphi 0, %s75
    %s105 = sphi 0, %s107
    %s108 = sphi 0, %s105
    %s109 = sphi 0, %s108
    %s125 = sphi 0, %s109
    %s129 = sphi 0, %s129
    %s131 = sphi 0, %s129
    %s132 = sphi 0, %s131
    %s146 = sphi 0, %s132
    %s150 = sphi 0, %s150
    %s152 = sphi 0, %s150
    %s153 = sphi 0, %s152
    %s167 = sphi 0, %s153
    %s175 = sphi 0, %s177
    %s178 = sphi 0, %s175
    %s179 = sphi 0, %s178
    %s195 = sphi 0, %s179
    %s203 = sphi 0, %s205
    %s206 = sphi 0, %s203
    %s207 = sphi 0, %s206
    %s223 = sphi 0, %s207
  $region4: #{unet_down_conv.3} parent=0 // loop_header_branch
    %16 = sbr.rel (%p14) target = $region8
  $region5: #{unet_down_conv.3} parent=0 // loop_body
    %s18 = ssub.s32 %s13, 1
    %s19 = ssub.s32 %s13, 2
    %s26 = sadd.s32 1, %s21
    %p27 = scmp.ge.s32.totalorder %s26, 2
    %s28 = scalar_select %p27, 0, %s26
    %s29 = sadd.s32 1, %s20
    %s30 = scalar_select %p27, %s29, %s20
    %p31 = scmp.ge.s32.totalorder %s30, 2
    %s32 = scalar_select %p31, 0, %s30
    %s33 = ssub.s32 %s20, %s32
    %s34 = ssub.s32 %s21, %s28
    %s35 = sor.u32 %s33, %s34
    %p36 = scmp.eq.s32.totalorder %s35, 0
    %s38 = sadd.s32 %s37, 1
    %s39 = scalar_select %p36, %s37, %s38
    %p42 = pneg %p36
    %p43 = scmp.eq.s32.totalorder %s13, 3
    %p44 = por %p42, %p43
    %p45 = scmp.ne.s32.totalorder %s37, %s40
    %p46 = scmp.eq.s32.totalorder %s13, 0
    %p47 = por %p45, %p46
    %p48 = scmp.ne.s32.totalorder %s37, %s40
    %p49 = scmp.eq.s32.totalorder %s18, 3
    %p50 = por %p48, %p49
    %p51 = scmp.ne.s32.totalorder %s40, %s41
    %p52 = scmp.eq.s32.totalorder %s18, 0
    %p53 = por %p51, %p52
    %p54 = scmp.ne.s32.totalorder %s40, %s41
    %p55 = scmp.eq.s32.totalorder %s19, 3
    %p56 = por %p54, %p55
    %p58 = scmp.ne.s32.totalorder %s41, %s57
    %p59 = scmp.eq.s32.totalorder %s19, 0
    %p60 = por %p58, %p59
    %s61 = ssub.s32 %s21, 1
    %p62 = scmp.gt.s32.totalorder %s61, 0
    %s63 = scalar_select %p62, %s61, 0
    %s64 = ssub.s32 %s28, 1
    %p65 = scmp.gt.s32.totalorder %s64, 0
    %s66 = scalar_select %p65, %s64, 0
    %s67 = ssub.s32 %s20, %s32
    %s68 = ssub.s32 %s63, %s66
    %s69 = sor.u32 %s67, %s68
    %p70 = scmp.eq.s32.totalorder %s69, 0
    %s72 = sadd.s32 %s71, 1
    %s73 = scalar_select %p70, %s71, %s72
    %p76 = pneg %p70
    %p77 = scmp.eq.s32.totalorder %s13, 3
    %p78 = por %p76, %p77
    %p79 = scmp.ne.s32.totalorder %s71, %s74
    %p80 = scmp.eq.s32.totalorder %s13, 0
    %p81 = por %p79, %p80
    %p82 = scmp.ne.s32.totalorder %s71, %s74
    %p83 = scmp.eq.s32.totalorder %s18, 3
    %p84 = por %p82, %p83
    %p85 = scmp.ne.s32.totalorder %s74, %s75
    %p86 = scmp.eq.s32.totalorder %s18, 0
    %p87 = por %p85, %p86
    %p88 = scmp.ne.s32.totalorder %s74, %s75
    %p89 = scmp.eq.s32.totalorder %s19, 3
    %p90 = por %p88, %p89
    %p92 = scmp.ne.s32.totalorder %s75, %s91
    %p93 = scmp.eq.s32.totalorder %s19, 0
    %p94 = por %p92, %p93
    %s95 = sadd.s32 %s21, 1
    %p96 = scmp.lt.s32.totalorder %s95, 1
    %s97 = scalar_select %p96, %s95, 1
    %s98 = sadd.s32 %s28, 1
    %p99 = scmp.lt.s32.totalorder %s98, 1
    %s100 = scalar_select %p99, %s98, 1
    %s101 = ssub.s32 %s20, %s32
    %s102 = ssub.s32 %s97, %s100
    %s103 = sor.u32 %s101, %s102
    %p104 = scmp.eq.s32.totalorder %s103, 0
    %s106 = sadd.s32 %s105, 1
    %s107 = scalar_select %p104, %s105, %s106
    %p110 = pneg %p104
    %p111 = scmp.eq.s32.totalorder %s13, 3
    %p112 = por %p110, %p111
    %p113 = scmp.ne.s32.totalorder %s105, %s108
    %p114 = scmp.eq.s32.totalorder %s13, 0
    %p115 = por %p113, %p114
    %p116 = scmp.ne.s32.totalorder %s105, %s108
    %p117 = scmp.eq.s32.totalorder %s18, 3
    %p118 = por %p116, %p117
    %p119 = scmp.ne.s32.totalorder %s108, %s109
    %p120 = scmp.eq.s32.totalorder %s18, 0
    %p121 = por %p119, %p120
    %p122 = scmp.ne.s32.totalorder %s108, %s109
    %p123 = scmp.eq.s32.totalorder %s19, 3
    %p124 = por %p122, %p123
    %p126 = scmp.ne.s32.totalorder %s109, %s125
    %p127 = scmp.eq.s32.totalorder %s19, 0
    %p128 = por %p126, %p127
    %s130 = sadd.s32 %s129, 1
    %p133 = scmp.eq.s32.totalorder %s13, 3
    %p134 = scmp.ne.s32.totalorder %s129, %s131
    %p135 = scmp.eq.s32.totalorder %s13, 0
    %p136 = por %p134, %p135
    %p137 = scmp.ne.s32.totalorder %s129, %s131
    %p138 = scmp.eq.s32.totalorder %s18, 3
    %p139 = por %p137, %p138
    %p140 = scmp.ne.s32.totalorder %s131, %s132
    %p141 = scmp.eq.s32.totalorder %s18, 0
    %p142 = por %p140, %p141
    %p143 = scmp.ne.s32.totalorder %s131, %s132
    %p144 = scmp.eq.s32.totalorder %s19, 3
    %p145 = por %p143, %p144
    %p147 = scmp.ne.s32.totalorder %s132, %s146
    %p148 = scmp.eq.s32.totalorder %s19, 0
    %p149 = por %p147, %p148
    %s151 = sadd.s32 %s150, 1
    %p154 = scmp.eq.s32.totalorder %s13, 3
    %p155 = scmp.ne.s32.totalorder %s150, %s152
    %p156 = scmp.eq.s32.totalorder %s13, 0
    %p157 = por %p155, %p156
    %p158 = scmp.ne.s32.totalorder %s150, %s152
    %p159 = scmp.eq.s32.totalorder %s18, 3
    %p160 = por %p158, %p159
    %p161 = scmp.ne.s32.totalorder %s152, %s153
    %p162 = scmp.eq.s32.totalorder %s18, 0
    %p163 = por %p161, %p162
    %p164 = scmp.ne.s32.totalorder %s152, %s153
    %p165 = scmp.eq.s32.totalorder %s19, 3
    %p166 = por %p164, %p165
    %p168 = scmp.ne.s32.totalorder %s153, %s167
    %p169 = scmp.eq.s32.totalorder %s19, 0
    %p170 = por %p168, %p169
    %s171 = ssub.s32 %s20, %s32
    %s172 = ssub.s32 %s21, %s28
    %s173 = sor.u32 %s171, %s172
    %p174 = scmp.eq.s32.totalorder %s173, 0
    %s176 = sadd.s32 %s175, 1
    %s177 = scalar_select %p174, %s175, %s176
    %p180 = pneg %p174
    %p181 = scmp.eq.s32.totalorder %s13, 3
    %p182 = por %p180, %p181
    %p183 = scmp.ne.s32.totalorder %s175, %s178
    %p184 = scmp.eq.s32.totalorder %s13, 0
    %p185 = por %p183, %p184
    %p186 = scmp.ne.s32.totalorder %s175, %s178
    %p187 = scmp.eq.s32.totalorder %s18, 3
    %p188 = por %p186, %p187
    %p189 = scmp.ne.s32.totalorder %s178, %s179
    %p190 = scmp.eq.s32.totalorder %s18, 0
    %p191 = por %p189, %p190
    %p192 = scmp.ne.s32.totalorder %s178, %s179
    %p193 = scmp.eq.s32.totalorder %s19, 3
    %p194 = por %p192, %p193
    %p196 = scmp.ne.s32.totalorder %s179, %s195
    %p197 = scmp.eq.s32.totalorder %s19, 0
    %p198 = por %p196, %p197
    %s199 = ssub.s32 %s20, %s32
    %s200 = ssub.s32 %s21, %s28
    %s201 = sor.u32 %s199, %s200
    %p202 = scmp.eq.s32.totalorder %s201, 0
    %s204 = sadd.s32 %s203, 1
    %s205 = scalar_select %p202, %s203, %s204
    %p208 = pneg %p202
    %p209 = scmp.eq.s32.totalorder %s13, 3
    %p210 = por %p208, %p209
    %p211 = scmp.ne.s32.totalorder %s203, %s206
    %p212 = scmp.eq.s32.totalorder %s13, 0
    %p213 = por %p211, %p212
    %p214 = scmp.ne.s32.totalorder %s203, %s206
    %p215 = scmp.eq.s32.totalorder %s18, 3
    %p216 = por %p214, %p215
    %p217 = scmp.ne.s32.totalorder %s206, %s207
    %p218 = scmp.eq.s32.totalorder %s18, 0
    %p219 = por %p217, %p218
    %p220 = scmp.ne.s32.totalorder %s206, %s207
    %p221 = scmp.eq.s32.totalorder %s19, 3
    %p222 = por %p220, %p221
    %p224 = scmp.ne.s32.totalorder %s207, %s223
    %p225 = scmp.eq.s32.totalorder %s19, 0
    %p226 = por %p224, %p225
    %p227 = scmp.le.s32.totalorder 1, %s13
    %p228 = scmp.lt.s32.totalorder %s13, 5
    %p229 = pnand %p227, %p228
    %p230 = pneg %p229
    // Predicated region
    $region9: #{unet_down_conv.3} parent=5 // pred_check
      _
    $region10: #{unet_down_conv.3} parent=5 // pred_check_branch
      %232 = sbr.rel (%p229) target = $region12
    $region11: #{unet_down_conv.3} parent=5 // pred_region
      %s233 = ssub.s32 %s13, 1
      // Predicated region
      $region13: #{unet_down_conv.3} parent=11 // pred_check
        %p234 = pneg %p142
      $region14: #{unet_down_conv.3} parent=11 // pred_check_branch
        %236 = sbr.rel (%p234) target = $region16
      $region15: #{unet_down_conv.3} parent=11 // pred_region
        _
      $region16: #{unet_down_conv.3} parent=11 // pred_fallthru
        _
      // Predicated region
      $region17: #{unet_down_conv.3} parent=11 // pred_check
        %p237 = pneg %p163
      $region18: #{unet_down_conv.3} parent=11 // pred_check_branch
        %239 = sbr.rel (%p237) target = $region20
      $region19: #{unet_down_conv.3} parent=11 // pred_region
        _
      $region20: #{unet_down_conv.3} parent=11 // pred_fallthru
        _
    $region12: #{unet_down_conv.3} parent=5 // pred_fallthru
      _
    %p240 = scmp.lt.s32.totalorder %s13, 4
    // Predicated region
    $region21: #{unet_down_conv.3} parent=5 // pred_check
      %p241 = pneg %p240
    $region22: #{unet_down_conv.3} parent=5 // pred_check_branch
      %243 = sbr.rel (%p241) target = $region24
    $region23: #{unet_down_conv.3} parent=5 // pred_region
      // Predicated region
      $region25: #{unet_down_conv.3} parent=23 // pred_check
        %p244 = pneg %p47
      $region26: #{unet_down_conv.3} parent=23 // pred_check_branch
        %246 = sbr.rel (%p244) target = $region28
      $region27: #{unet_down_conv.3} parent=23 // pred_region
        %p247 = scmp.lt.s32.totalorder %s20, 1
        %s248 = scalar_select %p247, %s20, 1
        %p249 = scmp.lt.s32.totalorder %s21, 1
        %s250 = scalar_select %p249, %s21, 1
        %s251 = smul.addr %s248, 2
        %s252 = sadd.s32 %s250, %s251
        %s253 = smul.addr %s252, 4
        %s254 = scalar_lea.vmem %s0, %s253
      $region28: #{unet_down_conv.3} parent=23 // pred_fallthru
        _
      // Predicated region
      $region29: #{unet_down_conv.3} parent=23 // pred_check
        %p255 = pneg %p81
      $region30: #{unet_down_conv.3} parent=23 // pred_check_branch
        %257 = sbr.rel (%p255) target = $region32
      $region31: #{unet_down_conv.3} parent=23 // pred_region
        %s258 = ssub.s32 %s21, 1
        %p259 = scmp.gt.s32.totalorder %s258, 0
        %s260 = scalar_select %p259, %s258, 0
        %p261 = scmp.lt.s32.totalorder %s20, 1
        %s262 = scalar_select %p261, %s20, 1
        %p263 = scmp.lt.s32.totalorder %s260, 1
        %s264 = scalar_select %p263, %s260, 1
        %s265 = smul.addr %s262, 2
        %s266 = sadd.s32 %s264, %s265
        %s267 = smul.addr %s266, 4
        %s268 = scalar_lea.vmem %s1, %s267
        %s269 = ssub.s32 %s21, 1
        %p270 = scmp.gt.s32.totalorder %s269, 0
        %s271 = scalar_select %p270, %s269, 0
      $region32: #{unet_down_conv.3} parent=23 // pred_fallthru
        _
      // Predicated region
      $region33: #{unet_down_conv.3} parent=23 // pred_check
        %p272 = pneg %p115
      $region34: #{unet_down_conv.3} parent=23 // pred_check_branch
        %274 = sbr.rel (%p272) target = $region36
      $region35: #{unet_down_conv.3} parent=23 // pred_region
        %s275 = sadd.s32 %s21, 1
        %p276 = scmp.lt.s32.totalorder %s275, 1
        %s277 = scalar_select %p276, %s275, 1
        %p278 = scmp.lt.s32.totalorder %s20, 1
        %s279 = scalar_select %p278, %s20, 1
        %p280 = scmp.lt.s32.totalorder %s277, 1
        %s281 = scalar_select %p280, %s277, 1
        %s282 = smul.addr %s279, 2
        %s283 = sadd.s32 %s281, %s282
        %s284 = smul.addr %s283, 4
        %s285 = scalar_lea.vmem %s2, %s284
        %s286 = sadd.s32 %s21, 1
        %p287 = scmp.lt.s32.totalorder %s286, 1
        %s288 = scalar_select %p287, %s286, 1
      $region36: #{unet_down_conv.3} parent=23 // pred_fallthru
        _
    $region24: #{unet_down_conv.3} parent=5 // pred_fallthru
      _
    %p289 = scmp.le.s32.totalorder 1, %s13
    %p290 = scmp.lt.s32.totalorder %s13, 5
    %p291 = pnand %p289, %p290
    %p292 = pneg %p291
    // Predicated region
    $region37: #{unet_down_conv.3} parent=5 // pred_check
      _
    $region38: #{unet_down_conv.3} parent=5 // pred_check_branch
      %294 = sbr.rel (%p291) target = $region40
    $region39: #{unet_down_conv.3} parent=5 // pred_region
      %s295 = ssub.s32 %s13, 1
      %p296 = scmp.lt.s32.totalorder %s22, 1
      %s297 = scalar_select %p296, %s22, 1
      %p298 = scmp.lt.s32.totalorder %s23, 1
      %s299 = scalar_select %p298, %s23, 1
      %s300 = smul.addr %s297, 2
      %s301 = sadd.s32 %s299, %s300
      %s302 = smul.addr %s301, 4
      %s303 = scalar_lea.vmem %s0, %s302
      %p304 = pneg %p53
      %p305 = pneg %p50
      %s306 = ssub.s32 %s23, 1
      %p307 = scmp.gt.s32.totalorder %s306, 0
      %s308 = scalar_select %p307, %s306, 0
      %p309 = scmp.lt.s32.totalorder %s22, 1
      %s310 = scalar_select %p309, %s22, 1
      %p311 = scmp.lt.s32.totalorder %s308, 1
      %s312 = scalar_select %p311, %s308, 1
      %s313 = smul.addr %s310, 2
      %s314 = sadd.s32 %s312, %s313
      %s315 = smul.addr %s314, 4
      %s316 = scalar_lea.vmem %s1, %s315
      %p317 = pneg %p87
      %p318 = pneg %p84
      %s319 = sadd.s32 %s23, 1
      %p320 = scmp.lt.s32.totalorder %s319, 1
      %s321 = scalar_select %p320, %s319, 1
      %p322 = scmp.lt.s32.totalorder %s22, 1
      %s323 = scalar_select %p322, %s22, 1
      %p324 = scmp.lt.s32.totalorder %s321, 1
      %s325 = scalar_select %p324, %s321, 1
      %s326 = smul.addr %s323, 2
      %s327 = sadd.s32 %s325, %s326
      %s328 = smul.addr %s327, 4
      %s329 = scalar_lea.vmem %s2, %s328
      %p330 = pneg %p121
      %p331 = pneg %p118
      %p332 = pneg %p142
      %p333 = pneg %p139
      %p334 = pneg %p163
      %p335 = pneg %p160
      %p336 = pneg %p191
      %p337 = pneg %p188
      %p338 = scmp.lt.s32.totalorder %s22, 1
      %s339 = scalar_select %p338, %s22, 1
      %p340 = scmp.lt.s32.totalorder %s23, 1
      %s341 = scalar_select %p340, %s23, 1
      %s342 = smul.addr %s339, 2
      %s343 = sadd.s32 %s341, %s342
      %s344 = smul.addr %s343, 4
      %s345 = scalar_lea.vmem %s5, %s344
      %p346 = pneg %p219
      %p347 = pneg %p216
      %p348 = scmp.lt.s32.totalorder %s22, 1
      %s349 = scalar_select %p348, %s22, 1
      %p350 = scmp.lt.s32.totalorder %s23, 1
      %s351 = scalar_select %p350, %s23, 1
      %s352 = smul.addr %s349, 2
      %s353 = sadd.s32 %s351, %s352
      %s354 = smul.addr %s353, 2
      %s355 = scalar_lea.vmem %s6, %s354
      %p356 = scmp.lt.s32.totalorder %s22, 1
      %s357 = scalar_select %p356, %s22, 1
      %p358 = scmp.lt.s32.totalorder %s23, 1
      %s359 = scalar_select %p358, %s23, 1
      %s360 = smul.addr %s357, 2
      %s361 = sadd.s32 %s359, %s360
      %s362 = smul.addr %s361, 4
      %s363 = scalar_lea.vmem %s0, %s362
      %s364 = ssub.s32 %s23, 1
      %p365 = scmp.gt.s32.totalorder %s364, 0
      %s366 = scalar_select %p365, %s364, 0
      %p367 = scmp.lt.s32.totalorder %s22, 1
      %s368 = scalar_select %p367, %s22, 1
      %p369 = scmp.lt.s32.totalorder %s366, 1
      %s370 = scalar_select %p369, %s366, 1
      %s371 = smul.addr %s368, 2
      %s372 = sadd.s32 %s370, %s371
      %s373 = smul.addr %s372, 4
      %s374 = scalar_lea.vmem %s1, %s373
      %s375 = ssub.s32 %s23, 1
      %p376 = scmp.gt.s32.totalorder %s375, 0
      %s377 = scalar_select %p376, %s375, 0
      %s378 = sadd.s32 %s23, 1
      %p379 = scmp.lt.s32.totalorder %s378, 1
      %s380 = scalar_select %p379, %s378, 1
      %p381 = scmp.lt.s32.totalorder %s22, 1
      %s382 = scalar_select %p381, %s22, 1
      %p383 = scmp.lt.s32.totalorder %s380, 1
      %s384 = scalar_select %p383, %s380, 1
      %s385 = smul.addr %s382, 2
      %s386 = sadd.s32 %s384, %s385
      %s387 = smul.addr %s386, 4
      %s388 = scalar_lea.vmem %s2, %s387
      %s389 = sadd.s32 %s23, 1
      %p390 = scmp.lt.s32.totalorder %s389, 1
      %s391 = scalar_select %p390, %s389, 1
      %p392 = scmp.lt.s32.totalorder %s22, 1
      %s393 = scalar_select %p392, %s22, 1
      %p394 = scmp.lt.s32.totalorder %s23, 1
      %s395 = scalar_select %p394, %s23, 1
      %s396 = smul.addr %s393, 2
      %s397 = sadd.s32 %s395, %s396
      %s398 = smul.addr %s397, 4
      %s399 = scalar_lea.vmem %s5, %s398
      %p400 = scmp.lt.s32.totalorder %s22, 1
      %s401 = scalar_select %p400, %s22, 1
      %p402 = scmp.lt.s32.totalorder %s23, 1
      %s403 = scalar_select %p402, %s23, 1
      %s404 = smul.addr %s401, 2
      %s405 = sadd.s32 %s403, %s404
      %s406 = smul.addr %s405, 2
      %s407 = scalar_lea.vmem %s6, %s406
      %v409 = vld [vmem:[%s363] sm:$0xf]
      %410 = vxpose.xlu0.b32.start [1/16] %v409, 128
      %411 = vxpose.xlu0.b32.cont [2/16] 0.0, 128
      %412 = vxpose.xlu0.b32.cont [3/16] 0.0, 128
      %413 = vxpose.xlu0.b32.cont [4/16] 0.0, 128
      %414 = vxpose.xlu0.b32.cont [5/16] 0.0, 128
      %415 = vxpose.xlu0.b32.cont [6/16] 0.0, 128
      %416 = vxpose.xlu0.b32.cont [7/16] 0.0, 128
      %417 = vxpose.xlu0.b32.cont [8/16] 0.0, 128
      %418 = vxpose.xlu0.b32.cont [9/16] 0.0, 128
      %419 = vxpose.xlu0.b32.cont [10/16] 0.0, 128
      %420 = vxpose.xlu0.b32.cont [11/16] 0.0, 128
      %421 = vxpose.xlu0.b32.cont [12/16] 0.0, 128
      %422 = vxpose.xlu0.b32.cont [13/16] 0.0, 128
      %423 = vxpose.xlu0.b32.cont [14/16] 0.0, 128
      %424 = vxpose.xlu0.b32.cont [15/16] 0.0, 128
      %425 = vxpose.xlu0.b32.end [16/16] 0.0, 128
      %v426 = vpop.trf.xlu0
      %v427 = vpop.trf.xlu0
      %v428 = vpop.trf.xlu0
      %v429 = vpop.trf.xlu0
      %v430 = vpop.trf.xlu0
      %v431 = vpop.trf.xlu0
      %v432 = vpop.trf.xlu0
      %v433 = vpop.trf.xlu0
      %v434 = vpop.trf.xlu0
      %v435 = vpop.trf.xlu0
      %v436 = vpop.trf.xlu0
      %v437 = vpop.trf.xlu0
      %v438 = vpop.trf.xlu0
      %v439 = vpop.trf.xlu0
      %v440 = vpop.trf.xlu0
      %v441 = vpop.trf.xlu0
      %v442 = vpack.c.bf16 %v426, %v426
      %v443 = vpack.c.bf16 %v427, %v427
      %v444 = vpack.c.bf16 %v428, %v428
      %v445 = vpack.c.bf16 %v429, %v429
      %v446 = vpack.c.bf16 %v430, %v430
      %v447 = vpack.c.bf16 %v431, %v431
      %v448 = vpack.c.bf16 %v432, %v432
      %v449 = vpack.c.bf16 %v433, %v433
      %v450 = vpack.c.bf16 %v434, %v434
      %v451 = vpack.c.bf16 %v435, %v435
      %v452 = vpack.c.bf16 %v436, %v436
      %v453 = vpack.c.bf16 %v437, %v437
      %v454 = vpack.c.bf16 %v438, %v438
      %v455 = vpack.c.bf16 %v439, %v439
      %v456 = vpack.c.bf16 %v440, %v440
      %v457 = vpack.c.bf16 %v441, %v441
      %v458 = vld [vmem:[%s374] sm:$0xf]
      %459 = vxpose.xlu0.b32.start [1/16] %v458, 128
      %460 = vxpose.xlu0.b32.cont [2/16] 0.0, 128
      %461 = vxpose.xlu0.b32.cont [3/16] 0.0, 128
      %462 = vxpose.xlu0.b32.cont [4/16] 0.0, 128
      %463 = vxpose.xlu0.b32.cont [5/16] 0.0, 128
      %464 = vxpose.xlu0.b32.cont [6/16] 0.0, 128
      %465 = vxpose.xlu0.b32.cont [7/16] 0.0, 128
      %466 = vxpose.xlu0.b32.cont [8/16] 0.0, 128
      %467 = vxpose.xlu0.b32.cont [9/16] 0.0, 128
      %468 = vxpose.xlu0.b32.cont [10/16] 0.0, 128
      %469 = vxpose.xlu0.b32.cont [11/16] 0.0, 128
      %470 = vxpose.xlu0.b32.cont [12/16] 0.0, 128
      %471 = vxpose.xlu0.b32.cont [13/16] 0.0, 128
      %472 = vxpose.xlu0.b32.cont [14/16] 0.0, 128
      %473 = vxpose.xlu0.b32.cont [15/16] 0.0, 128
      %474 = vxpose.xlu0.b32.end [16/16] 0.0, 128
      %v475 = vpop.trf.xlu0
      %v476 = vpop.trf.xlu0
      %v477 = vpop.trf.xlu0
      %v478 = vpop.trf.xlu0
      %v479 = vpop.trf.xlu0
      %v480 = vpop.trf.xlu0
      %v481 = vpop.trf.xlu0
      %v482 = vpop.trf.xlu0
      %v483 = vpop.trf.xlu0
      %v484 = vpop.trf.xlu0
      %v485 = vpop.trf.xlu0
      %v486 = vpop.trf.xlu0
      %v487 = vpop.trf.xlu0
      %v488 = vpop.trf.xlu0
      %v489 = vpop.trf.xlu0
      %v490 = vpop.trf.xlu0
      %v491 = vpack.c.bf16 %v489, %v489
      %v492 = vpack.c.bf16 %v490, %v490
      %v493 = vld [vmem:[%s388] sm:$0xf]
      %494 = vxpose.xlu0.b32.start [1/16] %v493, 128
      %495 = vxpose.xlu0.b32.cont [2/16] 0.0, 128
      %496 = vxpose.xlu0.b32.cont [3/16] 0.0, 128
      %497 = vxpose.xlu0.b32.cont [4/16] 0.0, 128
      %498 = vxpose.xlu0.b32.cont [5/16] 0.0, 128
      %499 = vxpose.xlu0.b32.cont [6/16] 0.0, 128
      %500 = vxpose.xlu0.b32.cont [7/16] 0.0, 128
      %501 = vxpose.xlu0.b32.cont [8/16] 0.0, 128
      %502 = vxpose.xlu0.b32.cont [9/16] 0.0, 128
      %503 = vxpose.xlu0.b32.cont [10/16] 0.0, 128
      %504 = vxpose.xlu0.b32.cont [11/16] 0.0, 128
      %505 = vxpose.xlu0.b32.cont [12/16] 0.0, 128
      %506 = vxpose.xlu0.b32.cont [13/16] 0.0, 128
      %507 = vxpose.xlu0.b32.cont [14/16] 0.0, 128
      %508 = vxpose.xlu0.b32.cont [15/16] 0.0, 128
      %509 = vxpose.xlu0.b32.end [16/16] 0.0, 128
      %v510 = vpop.trf.xlu0
      %v511 = vpop.trf.xlu0
      %v512 = vpop.trf.xlu0
      %v513 = vpop.trf.xlu0
      %v514 = vpop.trf.xlu0
      %v515 = vpop.trf.xlu0
      %v516 = vpop.trf.xlu0
      %v517 = vpop.trf.xlu0
      %v518 = vpop.trf.xlu0
      %v519 = vpop.trf.xlu0
      %v520 = vpop.trf.xlu0
      %v521 = vpop.trf.xlu0
      %v522 = vpop.trf.xlu0
      %v523 = vpop.trf.xlu0
      %v524 = vpop.trf.xlu0
      %v525 = vpop.trf.xlu0
      %v526 = vpack.c.bf16 %v510, %v510
      %v527 = vpack.c.bf16 %v511, %v511
      %p528 = scmp.gt.s32.totalorder %s23, 0
      %s529 = scalar_select %p528, 1, 0
      %s530 = scvt.s32.f32 %s529
      %p531 = scmp.lt.s32.totalorder %s23, 1
      %s532 = scalar_select %p531, 1, 0
      %s533 = scvt.s32.f32 %s532
      %v534 = vunpack.c.l.bf16 %v491
      %v535 = vunpack.c.l.bf16 %v492
      %v536 = vstv %s530
      %v537 = vmul.f32 %v534, %v536
      %v538 = vmul.f32 %v535, %v536
      %v539 = vpack.c.bf16 %v537, %v537
      %v540 = vpack.c.bf16 %v538, %v538
      %v541 = vunpack.c.l.bf16 %v526
      %v542 = vunpack.c.l.bf16 %v527
      %v543 = vstv %s533
      %v544 = vmul.f32 %v541, %v543
      %v545 = vmul.f32 %v542, %v543
      %v546 = vpack.c.bf16 %v544, %v544
      %v547 = vpack.c.bf16 %v545, %v545
      %v568 = vunpack.c.l.b16 %v539
      %v569 = vunpack.c.l.b16 %v540
      %v570 = vunpack.c.l.b16 %v442
      %v571 = vunpack.c.l.b16 %v443
      %v572 = vunpack.c.l.b16 %v444
      %v573 = vunpack.c.l.b16 %v445
      %v574 = vunpack.c.l.b16 %v446
      %v575 = vunpack.c.l.b16 %v447
      %v576 = vunpack.c.l.b16 %v448
      %v577 = vunpack.c.l.b16 %v449
      %v578 = vunpack.c.l.b16 %v450
      %v579 = vunpack.c.l.b16 %v451
      %v580 = vunpack.c.l.b16 %v452
      %v581 = vunpack.c.l.b16 %v453
      %v582 = vunpack.c.l.b16 %v454
      %v583 = vunpack.c.l.b16 %v455
      %v584 = vunpack.c.l.b16 %v456
      %v585 = vunpack.c.l.b16 %v457
      %v586 = vunpack.c.l.b16 %v546
      %v587 = vunpack.c.l.b16 %v547
      %v588 = vpack.c.b16 %v569, %v568
      %v589 = vpack.c.b16 %v571, %v570
      %v590 = vpack.c.b16 %v573, %v572
      %v591 = vpack.c.b16 %v575, %v574
      %v592 = vpack.c.b16 %v577, %v576
      %v593 = vpack.c.b16 %v579, %v578
      %v594 = vpack.c.b16 %v581, %v580
      %v595 = vpack.c.b16 %v583, %v582
      %v596 = vpack.c.b16 %v585, %v584
      %v597 = vpack.c.b16 %v587, %v586
      %v599 = vshrl.u32 %v588, 16
      %v601 = vrot.slane %v599, 7
      %v602 = vshll.u32 %v588, 16
      %v604 = vor.u32 %v601, %v602
      %v606 = vshrl.u32 %v589, 16
      %v608 = vrot.slane %v606, 7
      %v609 = vshll.u32 %v589, 16
      %v611 = vor.u32 %v608, %v609
      %v613 = vshrl.u32 %v590, 16
      %v615 = vrot.slane %v613, 7
      %v616 = vshll.u32 %v590, 16
      %v618 = vor.u32 %v615, %v616
      %v620 = vshrl.u32 %v591, 16
      %v622 = vrot.slane %v620, 7
      %v623 = vshll.u32 %v591, 16
      %v625 = vor.u32 %v622, %v623
      %v627 = vshrl.u32 %v592, 16
      %v629 = vrot.slane %v627, 7
      %v630 = vshll.u32 %v592, 16
      %v632 = vor.u32 %v629, %v630
      %v634 = vshrl.u32 %v593, 16
      %v636 = vrot.slane %v634, 7
      %v637 = vshll.u32 %v593, 16
      %v639 = vor.u32 %v636, %v637
      %v641 = vshrl.u32 %v594, 16
      %v643 = vrot.slane %v641, 7
      %v644 = vshll.u32 %v594, 16
      %v646 = vor.u32 %v643, %v644
      %v648 = vshrl.u32 %v595, 16
      %v650 = vrot.slane %v648, 7
      %v651 = vshll.u32 %v595, 16
      %v653 = vor.u32 %v650, %v651
      %v655 = vshrl.u32 %v596, 16
      %v657 = vrot.slane %v655, 7
      %v658 = vshll.u32 %v596, 16
      %v660 = vor.u32 %v657, %v658
      %v662 = vshrl.u32 %v597, 16
      %v664 = vrot.slane %v662, 7
      %v665 = vshll.u32 %v597, 16
      %v667 = vor.u32 %v664, %v665
      %vm688 = vcmask 1040384
      %vm689 = vsmask.f32 256
      %vm690 = vmand %vm688, %vm689
      %v691 = vsel %vm690, 0, %v604
      %v692 = vsel %vm690, 0, %v611
      %v693 = vsel %vm690, 0, %v618
      %v694 = vsel %vm690, 0, %v625
      %v695 = vsel %vm690, 0, %v632
      %v696 = vsel %vm690, 0, %v639
      %v697 = vsel %vm690, 0, %v646
      %v698 = vsel %vm690, 0, %v653
      %v699 = vsel %vm690, 0, %v660
      %v700 = vsel %vm690, 0, %v667
      %v701 = vsel %vm690, %v601, 0
      %v702 = vsel %vm690, %v608, 0
      %v703 = vsel %vm690, %v615, 0
      %v704 = vsel %vm690, %v622, 0
      %v705 = vsel %vm690, %v629, 0
      %v706 = vsel %vm690, %v636, 0
      %v707 = vsel %vm690, %v643, 0
      %v708 = vsel %vm690, %v650, 0
      %v709 = vsel %vm690, %v657, 0
      %v710 = vsel %vm690, %v664, 0
      %vm711 = vsmask.f32 7424
      %v713 = vshrl.u32 %v691, 16
      %v715 = vshll.u32 %v691, 16
      %v717 = vrot.slane %v715, 1
      %v718 = vor.u32 %v713, %v717
      %v720 = vshll.u32 %v701, 16
      %v722 = vrot.slane %v720, 1
      %v723 = vsel %vm711, %v718, %v722
      %v725 = vshrl.u32 %v692, 16
      %v727 = vshll.u32 %v692, 16
      %v729 = vrot.slane %v727, 1
      %v730 = vor.u32 %v725, %v729
      %v732 = vshll.u32 %v702, 16
      %v734 = vrot.slane %v732, 1
      %v735 = vsel %vm711, %v730, %v734
      %v737 = vshrl.u32 %v693, 16
      %v739 = vshll.u32 %v693, 16
      %v741 = vrot.slane %v739, 1
      %v742 = vor.u32 %v737, %v741
      %v744 = vshll.u32 %v703, 16
      %v746 = vrot.slane %v744, 1
      %v747 = vsel %vm711, %v742, %v746
      %v749 = vshrl.u32 %v694, 16
      %v751 = vshll.u32 %v694, 16
      %v753 = vrot.slane %v751, 1
      %v754 = vor.u32 %v749, %v753
      %v756 = vshll.u32 %v704, 16
      %v758 = vrot.slane %v756, 1
      %v759 = vsel %vm711, %v754, %v758
      %v761 = vshrl.u32 %v695, 16
      %v763 = vshll.u32 %v695, 16
      %v765 = vrot.slane %v763, 1
      %v766 = vor.u32 %v761, %v765
      %v768 = vshll.u32 %v705, 16
      %v770 = vrot.slane %v768, 1
      %v771 = vsel %vm711, %v766, %v770
      %v773 = vshrl.u32 %v696, 16
      %v775 = vshll.u32 %v696, 16
      %v777 = vrot.slane %v775, 1
      %v778 = vor.u32 %v773, %v777
      %v780 = vshll.u32 %v706, 16
      %v782 = vrot.slane %v780, 1
      %v783 = vsel %vm711, %v778, %v782
      %v785 = vshrl.u32 %v697, 16
      %v787 = vshll.u32 %v697, 16
      %v789 = vrot.slane %v787, 1
      %v790 = vor.u32 %v785, %v789
      %v792 = vshll.u32 %v707, 16
      %v794 = vrot.slane %v792, 1
      %v795 = vsel %vm711, %v790, %v794
      %v797 = vshrl.u32 %v698, 16
      %v799 = vshll.u32 %v698, 16
      %v801 = vrot.slane %v799, 1
      %v802 = vor.u32 %v797, %v801
      %v804 = vshll.u32 %v708, 16
      %v806 = vrot.slane %v804, 1
      %v807 = vsel %vm711, %v802, %v806
      %vm824 = vcmask 1046528
      %v825 = vrot.slane %v691, 1
      %v826 = vrot.slane %v701, 1
      %v827 = vsel %vm824, %v825, %v826
      %v828 = vrot.slane %v692, 1
      %v829 = vrot.slane %v702, 1
      %v830 = vsel %vm824, %v828, %v829
      %v831 = vrot.slane %v693, 1
      %v832 = vrot.slane %v703, 1
      %v833 = vsel %vm824, %v831, %v832
      %v834 = vrot.slane %v694, 1
      %v835 = vrot.slane %v704, 1
      %v836 = vsel %vm824, %v834, %v835
      %v837 = vrot.slane %v695, 1
      %v838 = vrot.slane %v705, 1
      %v839 = vsel %vm824, %v837, %v838
      %v840 = vrot.slane %v696, 1
      %v841 = vrot.slane %v706, 1
      %v842 = vsel %vm824, %v840, %v841
      %v843 = vrot.slane %v697, 1
      %v844 = vrot.slane %v707, 1
      %v845 = vsel %vm824, %v843, %v844
      %v846 = vrot.slane %v698, 1
      %v847 = vrot.slane %v708, 1
      %v848 = vsel %vm824, %v846, %v847
      %v850 = vshrl.u32 %v699, 16
      %v852 = vshll.u32 %v699, 16
      %v854 = vrot.slane %v852, 1
      %v855 = vor.u32 %v850, %v854
      %v857 = vshll.u32 %v709, 16
      %v859 = vrot.slane %v857, 1
      %v860 = vsel %vm711, %v855, %v859
      %v863 = vrot.slane %v699, 1
      %v864 = vrot.slane %v709, 1
      %v865 = vsel %vm824, %v863, %v864
      %v867 = vshrl.u32 %v700, 16
      %v869 = vshll.u32 %v700, 16
      %v871 = vrot.slane %v869, 1
      %v872 = vor.u32 %v867, %v871
      %v874 = vshll.u32 %v710, 16
      %v876 = vrot.slane %v874, 1
      %v877 = vsel %vm711, %v872, %v876
      %v880 = vrot.slane %v700, 1
      %v881 = vrot.slane %v710, 1
      %v882 = vsel %vm824, %v880, %v881
      %883 = vrot.lane.b32.xlu0 %v723, 4
      %v884 = vpop.permute.xlu0 %883
      %885 = vrot.lane.b32.xlu0 %v735, 4
      %v886 = vpop.permute.xlu0 %885
      %887 = vrot.lane.b32.xlu0 %v747, 4
      %v888 = vpop.permute.xlu0 %887
      %889 = vrot.lane.b32.xlu0 %v759, 4
      %v890 = vpop.permute.xlu0 %889
      %891 = vrot.lane.b32.xlu0 %v771, 4
      %v892 = vpop.permute.xlu0 %891
      %893 = vrot.lane.b32.xlu0 %v783, 4
      %v894 = vpop.permute.xlu0 %893
      %895 = vrot.lane.b32.xlu0 %v795, 4
      %v896 = vpop.permute.xlu0 %895
      %897 = vrot.lane.b32.xlu0 %v807, 4
      %v898 = vpop.permute.xlu0 %897
      %899 = vrot.lane.b32.xlu0 %v827, 8
      %v900 = vpop.permute.xlu0 %899
      %901 = vrot.lane.b32.xlu0 %v830, 8
      %v902 = vpop.permute.xlu0 %901
      %903 = vrot.lane.b32.xlu0 %v833, 8
      %v904 = vpop.permute.xlu0 %903
      %905 = vrot.lane.b32.xlu0 %v836, 8
      %v906 = vpop.permute.xlu0 %905
      %907 = vrot.lane.b32.xlu0 %v839, 8
      %v908 = vpop.permute.xlu0 %907
      %909 = vrot.lane.b32.xlu0 %v842, 8
      %v910 = vpop.permute.xlu0 %909
      %911 = vrot.lane.b32.xlu0 %v845, 8
      %v912 = vpop.permute.xlu0 %911
      %913 = vrot.lane.b32.xlu0 %v848, 8
      %v914 = vpop.permute.xlu0 %913
      %915 = vrot.lane.b32.xlu0 %v692, 12
      %v916 = vpop.permute.xlu0 %915
      %917 = vrot.lane.b32.xlu0 %v693, 12
      %v918 = vpop.permute.xlu0 %917
      %919 = vrot.lane.b32.xlu0 %v694, 12
      %v920 = vpop.permute.xlu0 %919
      %921 = vrot.lane.b32.xlu0 %v695, 12
      %v922 = vpop.permute.xlu0 %921
      %923 = vrot.lane.b32.xlu0 %v696, 12
      %v924 = vpop.permute.xlu0 %923
      %925 = vrot.lane.b32.xlu0 %v697, 12
      %v926 = vpop.permute.xlu0 %925
      %927 = vrot.lane.b32.xlu0 %v698, 12
      %v928 = vpop.permute.xlu0 %927
      %929 = vrot.lane.b32.xlu0 %v699, 12
      %v930 = vpop.permute.xlu0 %929
      %931 = vrot.lane.b32.xlu0 %v735, 16
      %v932 = vpop.permute.xlu0 %931
      %933 = vrot.lane.b32.xlu0 %v747, 16
      %v934 = vpop.permute.xlu0 %933
      %935 = vrot.lane.b32.xlu0 %v759, 16
      %v936 = vpop.permute.xlu0 %935
      %937 = vrot.lane.b32.xlu0 %v771, 16
      %v938 = vpop.permute.xlu0 %937
      %939 = vrot.lane.b32.xlu0 %v783, 16
      %v940 = vpop.permute.xlu0 %939
      %941 = vrot.lane.b32.xlu0 %v795, 16
      %v942 = vpop.permute.xlu0 %941
      %943 = vrot.lane.b32.xlu0 %v807, 16
      %v944 = vpop.permute.xlu0 %943
      %945 = vrot.lane.b32.xlu0 %v860, 16
      %v946 = vpop.permute.xlu0 %945
      %947 = vrot.lane.b32.xlu0 %v830, 20
      %v948 = vpop.permute.xlu0 %947
      %949 = vrot.lane.b32.xlu0 %v833, 20
      %v950 = vpop.permute.xlu0 %949
      %951 = vrot.lane.b32.xlu0 %v836, 20
      %v952 = vpop.permute.xlu0 %951
      %953 = vrot.lane.b32.xlu0 %v839, 20
      %v954 = vpop.permute.xlu0 %953
      %955 = vrot.lane.b32.xlu0 %v842, 20
      %v956 = vpop.permute.xlu0 %955
      %957 = vrot.lane.b32.xlu0 %v845, 20
      %v958 = vpop.permute.xlu0 %957
      %959 = vrot.lane.b32.xlu0 %v848, 20
      %v960 = vpop.permute.xlu0 %959
      %961 = vrot.lane.b32.xlu0 %v865, 20
      %v962 = vpop.permute.xlu0 %961
      %963 = vrot.lane.b32.xlu0 %v693, 24
      %v964 = vpop.permute.xlu0 %963
      %965 = vrot.lane.b32.xlu0 %v694, 24
      %v966 = vpop.permute.xlu0 %965
      %967 = vrot.lane.b32.xlu0 %v695, 24
      %v968 = vpop.permute.xlu0 %967
      %969 = vrot.lane.b32.xlu0 %v696, 24
      %v970 = vpop.permute.xlu0 %969
      %971 = vrot.lane.b32.xlu0 %v697, 24
      %v972 = vpop.permute.xlu0 %971
      %973 = vrot.lane.b32.xlu0 %v698, 24
      %v974 = vpop.permute.xlu0 %973
      %975 = vrot.lane.b32.xlu0 %v699, 24
      %v976 = vpop.permute.xlu0 %975
      %977 = vrot.lane.b32.xlu0 %v700, 24
      %v978 = vpop.permute.xlu0 %977
      %979 = vrot.lane.b32.xlu0 %v747, 28
      %v980 = vpop.permute.xlu0 %979
      %981 = vrot.lane.b32.xlu0 %v759, 28
      %v982 = vpop.permute.xlu0 %981
      %983 = vrot.lane.b32.xlu0 %v771, 28
      %v984 = vpop.permute.xlu0 %983
      %985 = vrot.lane.b32.xlu0 %v783, 28
      %v986 = vpop.permute.xlu0 %985
      %987 = vrot.lane.b32.xlu0 %v795, 28
      %v988 = vpop.permute.xlu0 %987
      %989 = vrot.lane.b32.xlu0 %v807, 28
      %v990 = vpop.permute.xlu0 %989
      %991 = vrot.lane.b32.xlu0 %v860, 28
      %v992 = vpop.permute.xlu0 %991
      %993 = vrot.lane.b32.xlu0 %v877, 28
      %v994 = vpop.permute.xlu0 %993
      %995 = vrot.lane.b32.xlu0 %v833, 32
      %v996 = vpop.permute.xlu0 %995
      %997 = vrot.lane.b32.xlu0 %v836, 32
      %v998 = vpop.permute.xlu0 %997
      %999 = vrot.lane.b32.xlu0 %v839, 32
      %v1000 = vpop.permute.xlu0 %999
      %1001 = vrot.lane.b32.xlu0 %v842, 32
      %v1002 = vpop.permute.xlu0 %1001
      %1003 = vrot.lane.b32.xlu0 %v845, 32
      %v1004 = vpop.permute.xlu0 %1003
      %1005 = vrot.lane.b32.xlu0 %v848, 32
      %v1006 = vpop.permute.xlu0 %1005
      %1007 = vrot.lane.b32.xlu0 %v865, 32
      %v1008 = vpop.permute.xlu0 %1007
      %1009 = vrot.lane.b32.xlu0 %v882, 32
      %v1010 = vpop.permute.xlu0 %1009
      %vm1011 = vcmask 31744
      %v1013 = vsel %vm1011, %v691, %v884
      %v1015 = vsel %vm1011, %v692, %v886
      %v1017 = vsel %vm1011, %v693, %v888
      %v1019 = vsel %vm1011, %v694, %v890
      %v1021 = vsel %vm1011, %v695, %v892
      %v1023 = vsel %vm1011, %v696, %v894
      %v1025 = vsel %vm1011, %v697, %v896
      %v1027 = vsel %vm1011, %v698, %v898
      %vm1028 = vcmask 64512
      %v1030 = vsel %vm1028, %v1013, %v900
      %v1032 = vsel %vm1028, %v1015, %v902
      %v1034 = vsel %vm1028, %v1017, %v904
      %v1036 = vsel %vm1028, %v1019, %v906
      %v1038 = vsel %vm1028, %v1021, %v908
      %v1040 = vsel %vm1028, %v1023, %v910
      %v1042 = vsel %vm1028, %v1025, %v912
      %v1044 = vsel %vm1028, %v1027, %v914
      %vm1045 = vcmask 97280
      %v1047 = vsel %vm1045, %v1030, %v916
      %v1049 = vsel %vm1045, %v1032, %v918
      %v1051 = vsel %vm1045, %v1034, %v920
      %v1053 = vsel %vm1045, %v1036, %v922
      %v1055 = vsel %vm1045, %v1038, %v924
      %v1057 = vsel %vm1045, %v1040, %v926
      %v1059 = vsel %vm1045, %v1042, %v928
      %v1061 = vsel %vm1045, %v1044, %v930
      %vm1062 = vcmask 130048
      %v1064 = vsel %vm1062, %v1047, %v932
      %v1066 = vsel %vm1062, %v1049, %v934
      %v1068 = vsel %vm1062, %v1051, %v936
      %v1070 = vsel %vm1062, %v1053, %v938
      %v1072 = vsel %vm1062, %v1055, %v940
      %v1074 = vsel %vm1062, %v1057, %v942
      %v1076 = vsel %vm1062, %v1059, %v944
      %v1078 = vsel %vm1062, %v1061, %v946
      %vm1079 = vcmask 162816
      %v1081 = vsel %vm1079, %v1064, %v948
      %v1083 = vsel %vm1079, %v1066, %v950
      %v1085 = vsel %vm1079, %v1068, %v952
      %v1087 = vsel %vm1079, %v1070, %v954
      %v1089 = vsel %vm1079, %v1072, %v956
      %v1091 = vsel %vm1079, %v1074, %v958
      %v1093 = vsel %vm1079, %v1076, %v960
      %v1095 = vsel %vm1079, %v1078, %v962
      %vm1096 = vcmask 195584
      %v1098 = vsel %vm1096, %v1081, %v964
      %v1100 = vsel %vm1096, %v1083, %v966
      %v1102 = vsel %vm1096, %v1085, %v968
      %v1104 = vsel %vm1096, %v1087, %v970
      %v1106 = vsel %vm1096, %v1089, %v972
      %v1108 = vsel %vm1096, %v1091, %v974
      %v1110 = vsel %vm1096, %v1093, %v976
      %v1112 = vsel %vm1096, %v1095, %v978
      %vm1113 = vcmask 228352
      %v1115 = vsel %vm1113, %v1098, %v980
      %v1117 = vsel %vm1113, %v1100, %v982
      %v1119 = vsel %vm1113, %v1102, %v984
      %v1121 = vsel %vm1113, %v1104, %v986
      %v1123 = vsel %vm1113, %v1106, %v988
      %v1125 = vsel %vm1113, %v1108, %v990
      %v1127 = vsel %vm1113, %v1110, %v992
      %v1129 = vsel %vm1113, %v1112, %v994
      %vm1130 = vcmask 261120
      %v1132 = vsel %vm1130, %v1115, %v996
      %v1134 = vsel %vm1130, %v1117, %v998
      %v1136 = vsel %vm1130, %v1119, %v1000
      %v1138 = vsel %vm1130, %v1121, %v1002
      %v1140 = vsel %vm1130, %v1123, %v1004
      %v1142 = vsel %vm1130, %v1125, %v1006
      %v1144 = vsel %vm1130, %v1127, %v1008
      %v1146 = vsel %vm1130, %v1129, %v1010
      %v1147 = vld [vmem:[%s3] sm:$0xf]
      %v1148 = vld [vmem:[%s3 + $0x4] sm:$0xf]
      %v1149 = vld [vmem:[%s3 + $0x8] sm:$0xf]
      %v1150 = vld [vmem:[%s3 + $0xc] sm:$0xf]
      %v1151 = vld [vmem:[%s3 + $0x10] sm:$0x3]
      %v1152 = vld [vmem:[%s4] sm:$0x1]
      %v1154 = vperm.slane %v1152, 0
      %v1161 = vunpack.c.l.b16 %v1147
      %v1162 = vunpack.c.l.b16 %v1148
      %v1163 = vunpack.c.l.b16 %v1149
      %v1164 = vunpack.c.l.b16 %v1150
      %v1165 = vunpack.c.l.b16 %v1151
      %v1166 = vpack.c.b16 %v1162, %v1161
      %v1167 = vpack.c.b16 %v1164, %v1163
      %v1168 = vpack.c.b16 %v1165, %v1165
      %vm1171 = vcmask 293888
      %v1172 = vsel %vm1171, %v1132, 0
      %v1174 = vsel %vm1171, %v1134, 0
      %v1176 = vsel %vm1171, %v1136, 0
      %v1178 = vsel %vm1171, %v1138, 0
      %v1180 = vsel %vm1171, %v1140, 0
      %v1182 = vsel %vm1171, %v1142, 0
      %v1184 = vsel %vm1171, %v1144, 0
      %v1186 = vsel %vm1171, %v1146, 0
      %vm1188 = vcmask 1041408
      %v1190 = vsel %vm1188, %v1168, 0
      %1192 = vmatpush.bf16.msra.mxu0 0
      %1193 = vmatpush.bf16.msra.mxu0 0
      %1194 = vmatpush.bf16.msra.mxu0 0
      %1195 = vmatpush.bf16.msra.mxu0 0
      %1196 = vmatpush.bf16.msra.mxu0 0
      %1197 = vmatpush.bf16.msra.mxu0 %v1190
      %1198 = vmatpush.bf16.msra.mxu0 %v1167
      %1199 = vmatpush.bf16.msra.mxu0 %v1166
      %1200 = vmatmul.bf16.gmra.mxu0 %v1172
      %v1201 = vpop.f32.mrf.mxu0
      %v1202 = vadd.f32 %v1154, %v1201
      %v1203 = vpop.f32.mrf.mxu0
      %v1204 = vadd.f32 %v1154, %v1203
      %1205 = vmatmul.bf16.gmra.mxu0 %v1174
      %v1206 = vpop.f32.mrf.mxu0
      %v1207 = vadd.f32 %v1154, %v1206
      %v1208 = vpop.f32.mrf.mxu0
      %v1209 = vadd.f32 %v1154, %v1208
      %1210 = vmatmul.bf16.gmra.mxu0 %v1176
      %v1211 = vpop.f32.mrf.mxu0
      %v1212 = vadd.f32 %v1154, %v1211
      %v1213 = vpop.f32.mrf.mxu0
      %v1214 = vadd.f32 %v1154, %v1213
      %1215 = vmatmul.bf16.gmra.mxu0 %v1178
      %v1216 = vpop.f32.mrf.mxu0
      %v1217 = vadd.f32 %v1154, %v1216
      %v1218 = vpop.f32.mrf.mxu0
      %v1219 = vadd.f32 %v1154, %v1218
      %1220 = vmatmul.bf16.gmra.mxu0 %v1180
      %v1221 = vpop.f32.mrf.mxu0
      %v1222 = vadd.f32 %v1154, %v1221
      %v1223 = vpop.f32.mrf.mxu0
      %v1224 = vadd.f32 %v1154, %v1223
      %1225 = vmatmul.bf16.gmra.mxu0 %v1182
      %v1226 = vpop.f32.mrf.mxu0
      %v1227 = vadd.f32 %v1154, %v1226
      %v1228 = vpop.f32.mrf.mxu0
      %v1229 = vadd.f32 %v1154, %v1228
      %1230 = vmatmul.bf16.gmra.mxu0 %v1184
      %v1231 = vpop.f32.mrf.mxu0
      %v1232 = vadd.f32 %v1154, %v1231
      %v1233 = vpop.f32.mrf.mxu0
      %v1234 = vadd.f32 %v1154, %v1233
      %1235 = vmatmul.bf16.gmra.mxu0 %v1186
      %v1236 = vpop.f32.mrf.mxu0
      %v1237 = vadd.f32 %v1154, %v1236
      %v1238 = vpop.f32.mrf.mxu0
      %v1239 = vadd.f32 %v1154, %v1238
      %1240 = vdwg.mxu0
      %1241 = vxpose.xlu0.b32.start [1/16] %v1202, 128
      %1242 = vxpose.xlu0.b32.cont [2/16] %v1204, 128
      %1243 = vxpose.xlu0.b32.cont [3/16] %v1207, 128
      %1244 = vxpose.xlu0.b32.cont [4/16] %v1209, 128
      %1245 = vxpose.xlu0.b32.cont [5/16] %v1212, 128
      %1246 = vxpose.xlu0.b32.cont [6/16] %v1214, 128
      %1247 = vxpose.xlu0.b32.cont [7/16] %v1217, 128
      %1248 = vxpose.xlu0.b32.cont [8/16] %v1219, 128
      %1249 = vxpose.xlu0.b32.cont [9/16] %v1222, 128
      %1250 = vxpose.xlu0.b32.cont [10/16] %v1224, 128
      %1251 = vxpose.xlu0.b32.cont [11/16] %v1227, 128
      %1252 = vxpose.xlu0.b32.cont [12/16] %v1229, 128
      %1253 = vxpose.xlu0.b32.cont [13/16] %v1232, 128
      %1254 = vxpose.xlu0.b32.cont [14/16] %v1234, 128
      %1255 = vxpose.xlu0.b32.cont [15/16] %v1237, 128
      %1256 = vxpose.xlu0.b32.end [16/16] %v1239, 128
      %v1257 = vpop.trf.xlu0
      %v1258 = vpop.trf.xlu0
      %v1259 = vpop.trf.xlu0
      %v1260 = vpop.trf.xlu0
      %v1261 = vpop.trf.xlu0
      %v1262 = vpop.trf.xlu0
      %v1263 = vpop.trf.xlu0
      %v1264 = vpop.trf.xlu0
      %v1265 = vpop.trf.xlu0
      %v1266 = vpop.trf.xlu0
      %v1267 = vpop.trf.xlu0
      %v1268 = vpop.trf.xlu0
      %v1269 = vpop.trf.xlu0
      %v1270 = vpop.trf.xlu0
      %v1271 = vpop.trf.xlu0
      %v1272 = vpop.trf.xlu0
      %v1273 = vpack.c.bf16 %v1257, %v1257
      %1274 = vst [vmem:[%s399] sm:$0xf] %v1273
      %v1275 = vpack.c.bf16 %v1202, %v1202
      %v1276 = vpack.c.bf16 %v1204, %v1204
      %v1277 = vpack.c.bf16 %v1207, %v1207
      %v1278 = vpack.c.bf16 %v1209, %v1209
      %v1279 = vpack.c.bf16 %v1212, %v1212
      %v1280 = vpack.c.bf16 %v1214, %v1214
      %v1281 = vpack.c.bf16 %v1217, %v1217
      %v1282 = vpack.c.bf16 %v1219, %v1219
      %v1283 = vpack.c.bf16 %v1222, %v1222
      %v1284 = vpack.c.bf16 %v1224, %v1224
      %v1285 = vpack.c.bf16 %v1227, %v1227
      %v1286 = vpack.c.bf16 %v1229, %v1229
      %v1287 = vpack.c.bf16 %v1232, %v1232
      %v1288 = vpack.c.bf16 %v1234, %v1234
      %v1289 = vpack.c.bf16 %v1237, %v1237
      %v1290 = vpack.c.bf16 %v1239, %v1239
      %v1291 = vunpack.c.l.bf16 %v1275
      %v1292 = vunpack.c.l.bf16 %v1276
      %v1293 = vunpack.c.l.bf16 %v1277
      %v1294 = vunpack.c.l.bf16 %v1278
      %v1295 = vunpack.c.l.bf16 %v1279
      %v1296 = vunpack.c.l.bf16 %v1280
      %v1297 = vunpack.c.l.bf16 %v1281
      %v1298 = vunpack.c.l.bf16 %v1282
      %v1299 = vunpack.c.l.bf16 %v1283
      %v1300 = vunpack.c.l.bf16 %v1284
      %v1301 = vunpack.c.l.bf16 %v1285
      %v1302 = vunpack.c.l.bf16 %v1286
      %v1303 = vunpack.c.l.bf16 %v1287
      %v1304 = vunpack.c.l.bf16 %v1288
      %v1305 = vunpack.c.l.bf16 %v1289
      %v1306 = vunpack.c.l.bf16 %v1290
      %v1307 = vsel %vm1028, %v1291, 0.0
      %v1308 = vsel %vm1028, %v1292, 0.0
      %v1309 = vadd.f32 %v1307, %v1308
      %v1310 = vsel %vm1028, %v1293, 0.0
      %v1311 = vadd.f32 %v1309, %v1310
      %v1312 = vsel %vm1028, %v1294, 0.0
      %v1313 = vadd.f32 %v1311, %v1312
      %v1314 = vsel %vm1028, %v1295, 0.0
      %v1315 = vadd.f32 %v1313, %v1314
      %v1316 = vsel %vm1028, %v1296, 0.0
      %v1317 = vadd.f32 %v1315, %v1316
      %v1318 = vsel %vm1028, %v1297, 0.0
      %v1319 = vadd.f32 %v1317, %v1318
      %v1320 = vsel %vm1028, %v1298, 0.0
      %v1321 = vadd.f32 %v1319, %v1320
      %v1322 = vsel %vm1028, %v1299, 0.0
      %v1323 = vadd.f32 %v1321, %v1322
      %v1324 = vsel %vm1028, %v1300, 0.0
      %v1325 = vadd.f32 %v1323, %v1324
      %v1326 = vsel %vm1028, %v1301, 0.0
      %v1327 = vadd.f32 %v1325, %v1326
      %v1328 = vsel %vm1028, %v1302, 0.0
      %v1329 = vadd.f32 %v1327, %v1328
      %v1330 = vsel %vm1028, %v1303, 0.0
      %v1331 = vadd.f32 %v1329, %v1330
      %v1332 = vsel %vm1028, %v1304, 0.0
      %v1333 = vadd.f32 %v1331, %v1332
      %v1334 = vsel %vm1028, %v1305, 0.0
      %v1335 = vadd.f32 %v1333, %v1334
      %v1336 = vsel %vm1028, %v1306, 0.0
      %v1337 = vadd.f32 %v1335, %v1336
      %v1338 = vrot.slane %v1337, 4
      %v1339 = vadd.f32 %v1337, %v1338
      %v1340 = vrot.slane %v1339, 2
      %v1341 = vadd.f32 %v1339, %v1340
      %v1342 = vrot.slane %v1341, 1
      %v1343 = vadd.f32 %v1341, %v1342
      %v1344 = vmul.f32 %v1291, %v1291
      %v1345 = vmul.f32 %v1292, %v1292
      %v1346 = vmul.f32 %v1293, %v1293
      %v1347 = vmul.f32 %v1294, %v1294
      %v1348 = vmul.f32 %v1295, %v1295
      %v1349 = vmul.f32 %v1296, %v1296
      %v1350 = vmul.f32 %v1297, %v1297
      %v1351 = vmul.f32 %v1298, %v1298
      %v1352 = vmul.f32 %v1299, %v1299
      %v1353 = vmul.f32 %v1300, %v1300
      %v1354 = vmul.f32 %v1301, %v1301
      %v1355 = vmul.f32 %v1302, %v1302
      %v1356 = vmul.f32 %v1303, %v1303
      %v1357 = vmul.f32 %v1304, %v1304
      %v1358 = vmul.f32 %v1305, %v1305
      %v1359 = vmul.f32 %v1306, %v1306
      %v1360 = vsel %vm1028, %v1344, 0.0
      %v1361 = vsel %vm1028, %v1345, 0.0
      %v1362 = vadd.f32 %v1360, %v1361
      %v1363 = vsel %vm1028, %v1346, 0.0
      %v1364 = vadd.f32 %v1362, %v1363
      %v1365 = vsel %vm1028, %v1347, 0.0
      %v1366 = vadd.f32 %v1364, %v1365
      %v1367 = vsel %vm1028, %v1348, 0.0
      %v1368 = vadd.f32 %v1366, %v1367
      %v1369 = vsel %vm1028, %v1349, 0.0
      %v1370 = vadd.f32 %v1368, %v1369
      %v1371 = vsel %vm1028, %v1350, 0.0
      %v1372 = vadd.f32 %v1370, %v1371
      %v1373 = vsel %vm1028, %v1351, 0.0
      %v1374 = vadd.f32 %v1372, %v1373
      %v1375 = vsel %vm1028, %v1352, 0.0
      %v1376 = vadd.f32 %v1374, %v1375
      %v1377 = vsel %vm1028, %v1353, 0.0
      %v1378 = vadd.f32 %v1376, %v1377
      %v1379 = vsel %vm1028, %v1354, 0.0
      %v1380 = vadd.f32 %v1378, %v1379
      %v1381 = vsel %vm1028, %v1355, 0.0
      %v1382 = vadd.f32 %v1380, %v1381
      %v1383 = vsel %vm1028, %v1356, 0.0
      %v1384 = vadd.f32 %v1382, %v1383
      %v1385 = vsel %vm1028, %v1357, 0.0
      %v1386 = vadd.f32 %v1384, %v1385
      %v1387 = vsel %vm1028, %v1358, 0.0
      %v1388 = vadd.f32 %v1386, %v1387
      %v1389 = vsel %vm1028, %v1359, 0.0
      %v1390 = vadd.f32 %v1388, %v1389
      %v1391 = vrot.slane %v1390, 4
      %v1392 = vadd.f32 %v1390, %v1391
      %v1393 = vrot.slane %v1392, 2
      %v1394 = vadd.f32 %v1392, %v1393
      %v1395 = vrot.slane %v1394, 1
      %v1396 = vadd.f32 %v1394, %v1395
      %vm1397 = vcmask 1040384
      %v1398 = vsel %vm1397, %v1343, %v1396
      %vm1399 = vcmask 58368
      %1400 = vst.msk [vmem:[%s407] sm:$0x3] %vm1399, %v1398
      %p1401 = scmp.lt.s32.totalorder %s22, 1
      %s1402 = scalar_select %p1401, %s22, 1
      %p1403 = scmp.lt.s32.totalorder %s23, 1
      %s1404 = scalar_select %p1403, %s23, 1
      %s1405 = smul.addr %s1402, 2
      %s1406 = sadd.s32 %s1404, %s1405
      %s1407 = smul.addr %s1406, 4
      %s1408 = scalar_lea.vmem %s5, %s1407
      %p1409 = scmp.lt.s32.totalorder %s22, 1
      %s1410 = scalar_select %p1409, %s22, 1
      %p1411 = scmp.lt.s32.totalorder %s23, 1
      %s1412 = scalar_select %p1411, %s23, 1
      %s1413 = smul.addr %s1410, 2
      %s1414 = sadd.s32 %s1412, %s1413
      %s1415 = smul.addr %s1414, 2
      %s1416 = scalar_lea.vmem %s6, %s1415
      // Predicated region
      $region41: #{unet_down_conv.3} parent=39 // pred_check
        %p1417 = pneg %p188
      $region42: #{unet_down_conv.3} parent=39 // pred_check_branch
        %1419 = sbr.rel (%p1417) target = $region44
      $region43: #{unet_down_conv.3} parent=39 // pred_region
        _
      $region44: #{unet_down_conv.3} parent=39 // pred_fallthru
        _
      // Predicated region
      $region45: #{unet_down_conv.3} parent=39 // pred_check
        %p1420 = pneg %p216
      $region46: #{unet_down_conv.3} parent=39 // pred_check_branch
        %1422 = sbr.rel (%p1420) target = $region48
      $region47: #{unet_down_conv.3} parent=39 // pred_region
        _
      $region48: #{unet_down_conv.3} parent=39 // pred_fallthru
        _
    $region40: #{unet_down_conv.3} parent=5 // pred_fallthru
      _
    %p1423 = scmp.le.s32.totalorder 2, %s13
    // Predicated region
    $region49: #{unet_down_conv.3} parent=5 // pred_check
      %p1424 = pneg %p1423
    $region50: #{unet_down_conv.3} parent=5 // pred_check_branch
      %1426 = sbr.rel (%p1424) target = $region52
    $region51: #{unet_down_conv.3} parent=5 // pred_region
      %s1427 = ssub.s32 %s13, 2
      // Predicated region
      $region53: #{unet_down_conv.3} parent=51 // pred_check
        %p1428 = pneg %p194
      $region54: #{unet_down_conv.3} parent=51 // pred_check_branch
        %1430 = sbr.rel (%p1428) target = $region56
      $region55: #{unet_down_conv.3} parent=51 // pred_region
        %p1431 = scmp.lt.s32.totalorder %s24, 1
        %s1432 = scalar_select %p1431, %s24, 1
        %p1433 = scmp.lt.s32.totalorder %s25, 1
        %s1434 = scalar_select %p1433, %s25, 1
        %s1435 = smul.addr %s1432, 2
        %s1436 = sadd.s32 %s1434, %s1435
        %s1437 = smul.addr %s1436, 4
        %s1438 = scalar_lea.vmem %s5, %s1437
      $region56: #{unet_down_conv.3} parent=51 // pred_fallthru
        _
      // Predicated region
      $region57: #{unet_down_conv.3} parent=51 // pred_check
        %p1439 = pneg %p222
      $region58: #{unet_down_conv.3} parent=51 // pred_check_branch
        %1441 = sbr.rel (%p1439) target = $region60
      $region59: #{unet_down_conv.3} parent=51 // pred_region
        %p1442 = scmp.lt.s32.totalorder %s24, 1
        %s1443 = scalar_select %p1442, %s24, 1
        %p1444 = scmp.lt.s32.totalorder %s25, 1
        %s1445 = scalar_select %p1444, %s25, 1
        %s1446 = smul.addr %s1443, 2
        %s1447 = sadd.s32 %s1445, %s1446
        %s1448 = smul.addr %s1447, 2
        %s1449 = scalar_lea.vmem %s6, %s1448
      $region60: #{unet_down_conv.3} parent=51 // pred_fallthru
        _
    $region52: #{unet_down_conv.3} parent=5 // pred_fallthru
      _
  $region6: #{unet_down_conv.3} parent=0 // loop_footer
    %s17 = sadd.s32 1, %s13
  $region7: #{unet_down_conv.3} parent=0 // loop_footer_branch
    %12 = sbr.rel target = $region3
  $region8: #{unet_down_conv.3} parent=0 // loop_exit
    _

</llo_original>
